<compile_context>
chip_gen: v7x
topology: tpu7x:2x2x1
jax: 0.10.0
libtpu: 0.0.40
codegen_flags: <defaults>
</compile_context>

<pallas_src>
import jax
import jax.numpy as jnp
from jax.experimental import pallas as pl
from jax.experimental.pallas import tpu as pltpu

H = 128    # LSTM hidden size (fixed by the module)
OUT = 16   # fc output size


def _lstm_bidir_fc_kernel(x_ref, len_ref, wih_ref, whh_ref, b_ref,
                          wfc_ref, bfc_ref, out_ref, gxf_ref, gxb_ref):
    T, Bp, D = x_ref.shape

    # ---- 1) all-timestep input projection in a single matmul ---------------
    x_all = x_ref[...].reshape(T * Bp, D)                       # (T*Bp, D)
    gx = jnp.dot(x_all, wih_ref[...],
                 preferred_element_type=jnp.float32) + b_ref[...]   # (T*Bp, 8H)
    gx = gx.reshape(T, Bp, 8 * H)
    gxf_ref[...] = gx[:, :, :4 * H]                             # fwd gates_x
    gxb_ref[...] = gx[:, :, 4 * H:]                             # bwd gates_x

    # ---- 2) hoisted loop-invariant tensors ----------------------------------
    len_col = len_ref[...]                                      # (Bp, 1) int32
    len2 = jnp.concatenate([len_col, len_col], axis=0)          # (2Bp, 1)
    # per-row time index = step_base + step_sign * t  (t fwd rows, T-1-t bwd rows)
    step_base = jnp.concatenate(
        [jnp.zeros((Bp, 1), jnp.int32), jnp.full((Bp, 1), T - 1, jnp.int32)], axis=0)
    step_sign = jnp.concatenate(
        [jnp.ones((Bp, 1), jnp.int32), jnp.full((Bp, 1), -1, jnp.int32)], axis=0)
    zeros_bh = jnp.zeros((Bp, H), jnp.float32)

    # ---- 3) recurrence: fwd+bwd states stacked along sublanes (2Bp, H) ------
    def step(t, carry):
        h_st, c_st = carry                                      # (2Bp, H) each
        # block-diagonal LHS so fwd rows only hit Whh_f, bwd rows only Whh_b
        lhs = jnp.concatenate(
            [jnp.concatenate([h_st[:Bp], zeros_bh], axis=1),
             jnp.concatenate([zeros_bh, h_st[Bp:]], axis=1)], axis=0)   # (2Bp, 2H)
        rec = jnp.dot(lhs, whh_ref[...],
                      preferred_element_type=jnp.float32)       # (2Bp, 4H), K=256
        gx_t = jnp.concatenate([gxf_ref[t], gxb_ref[T - 1 - t]], axis=0)  # (2Bp, 4H)
        gates = rec + gx_t                                       # PyTorch order i,f,g,o
        i_g = jax.nn.sigmoid(gates[:, 0 * H:1 * H])
        f_g = jax.nn.sigmoid(gates[:, 1 * H:2 * H])
        g_g = jnp.tanh(gates[:, 2 * H:3 * H])
        o_g = jax.nn.sigmoid(gates[:, 3 * H:4 * H])
        c_new = f_g * c_st + i_g * g_g
        h_new = o_g * jnp.tanh(c_new)
        # validity mask: padded positions freeze the state (pack_padded semantics)
        mask = (step_base + step_sign * t) < len2                # (2Bp, 1) bool
        c_nxt = jnp.where(mask, c_new, c_st)
        h_nxt = jnp.where(mask, h_new, h_st)
        return h_nxt, c_nxt

    h0 = jnp.zeros((2 * Bp, H), jnp.float32)
    c0 = jnp.zeros((2 * Bp, H), jnp.float32)
    h_fin, _ = jax.lax.fori_loop(0, T, step, (h0, c0), unroll=True)

    # ---- 4) concat last hidden states + FC + ReLU (dropout = identity) ------
    hcat = jnp.concatenate([h_fin[:Bp], h_fin[Bp:]], axis=1)     # (Bp, 2H)
    y = jnp.dot(hcat, wfc_ref[...],
                preferred_element_type=jnp.float32) + bfc_ref[...]
    out_ref[...] = jnp.maximum(y, 0.0).astype(out_ref.dtype)


def _full(shape):
    n = len(shape)
    return pl.BlockSpec(shape, lambda k, _n=n: (0,) * _n)


def ball_to_ball_forward(x, lengths, params):
    """x: (B, T, D) float32 (batch_first, as in PyTorch); lengths: (B,) int32."""
    B, T, D = x.shape
    Bp = ((B + 7) // 8) * 8                      # pad batch to f32 sublane count
    Bp = max(Bp, 8)

    x_tm = jnp.transpose(x, (1, 0, 2)).astype(jnp.float32)        # (T, B, D)
    x_tm = jnp.pad(x_tm, ((0, 0), (0, Bp - B), (0, 0)))           # (T, Bp, D)
    len_col = jnp.pad(lengths.astype(jnp.int32), (0, Bp - B)).reshape(Bp, 1)

    # fuse per-direction weights so the kernel does one input projection and
    # one merged recurrence matmul per step.
    wih_cat = jnp.concatenate([params["wih_f"], params["wih_b"]], axis=1)  # (D, 8H)
    whh_cat = jnp.concatenate([params["whh_f"], params["whh_b"]], axis=0)  # (2H, 4H)
    b_cat = jnp.concatenate([params["b_f"], params["b_b"]], axis=1)        # (1, 8H)

    grid_spec = pltpu.PrefetchScalarGridSpec(
        num_scalar_prefetch=0,
        grid=(1,),                                # single step: loop lives in-kernel
        in_specs=[
            _full((T, Bp, D)),                    # x (time-major, padded)
            _full((Bp, 1)),                       # lengths column (int32)
            _full((D, 8 * H)),                    # [Wih_f | Wih_b]
            _full((2 * H, 4 * H)),                # [Whh_f ; Whh_b]
            _full((1, 8 * H)),                    # [b_f | b_b]
            _full((2 * H, OUT)),                  # fc weight
            _full((1, OUT)),                      # fc bias
        ],
        out_specs=_full((Bp, OUT)),
        scratch_shapes=[pltpu.VMEM((T, Bp, 4 * H), jnp.float32),  # gates_x fwd
                        pltpu.VMEM((T, Bp, 4 * H), jnp.float32)], # gates_x bwd
    )

    out = pl.pallas_call(
        _lstm_bidir_fc_kernel,
        out_shape=jax.ShapeDtypeStruct((Bp, OUT), jnp.float32),
        grid_spec=grid_spec,
        compiler_params=pltpu.CompilerParams(
            dimension_semantics=("arbitrary",)),
    )(x_tm, len_col, wih_cat, whh_cat, b_cat, params["wfc"], params["bfc"])
    return out[:B]


def init_params(key, input_dim):
    """Deterministic synthetic init mirroring PyTorch uniform(-1/sqrt(fan), +)."""
    ks = jax.random.split(key, 8)
    u = lambda k, shape, b: jax.random.uniform(k, shape, jnp.float32, -b, b)
    bl = 1.0 / float(jnp.sqrt(jnp.float32(H)))
    bf = 1.0 / float(jnp.sqrt(jnp.float32(2 * H)))
    return dict(
        wih_f=u(ks[0], (input_dim, 4 * H), bl),
        whh_f=u(ks[1], (H, 4 * H), bl),
        b_f=u(ks[2], (1, 4 * H), bl),          # combined b_ih + b_hh (synthetic)
        wih_b=u(ks[3], (input_dim, 4 * H), bl),
        whh_b=u(ks[4], (H, 4 * H), bl),
        b_b=u(ks[5], (1, 4 * H), bl),
        wfc=u(ks[6], (2 * H, OUT), bf),
        bfc=u(ks[7], (1, OUT), bf),
    )


def reference_forward(x, lengths, params):
    """Pure-JAX reference of the PyTorch forward (eval mode)."""
    B, T, D = x.shape

    def cell(x_t, h, c, wih, whh, b):
        gates = x_t @ wih + h @ whh + b
        i = jax.nn.sigmoid(gates[:, 0 * H:1 * H])
        f = jax.nn.sigmoid(gates[:, 1 * H:2 * H])
        g = jnp.tanh(gates[:, 2 * H:3 * H])
        o = jax.nn.sigmoid(gates[:, 3 * H:4 * H])
        c_new = f * c + i * g
        return o * jnp.tanh(c_new), c_new

    hf = jnp.zeros((B, H), jnp.float32)
    cf = jnp.zeros((B, H), jnp.float32)
    for t in range(T):
        m = (t < lengths)[:, None]
        hn, cn = cell(x[:, t], hf, cf, params["wih_f"], params["whh_f"], params["b_f"])
        hf = jnp.where(m, hn, hf)
        cf = jnp.where(m, cn, cf)

    hb = jnp.zeros((B, H), jnp.float32)
    cb = jnp.zeros((B, H), jnp.float32)
    for t in reversed(range(T)):
        m = (t < lengths)[:, None]
        hn, cn = cell(x[:, t], hb, cb, params["wih_b"], params["whh_b"], params["b_b"])
        hb = jnp.where(m, hn, hb)
        cb = jnp.where(m, cn, cb)

    hcat = jnp.concatenate([hf, hb], axis=1)        # (B, 256), dropout = identity
    return jnp.maximum(hcat @ params["wfc"] + params["bfc"], 0.0)


if __name__ == "__main__":
    key = jax.random.PRNGKey(0)
    kx, kp = jax.random.split(key)
    B, T, D = 2, 8, 16
    x = jax.random.normal(kx, (B, T, D), jnp.float32)
    lengths = jnp.array([8, 5], jnp.int32)          # variable lengths (padded seqs)
    params = init_params(kp, D)

    out = ball_to_ball_forward(x, lengths, params)
    out = jax.block_until_ready(out)

    ref = reference_forward(x, lengths, params)
    assert out.shape == (B, OUT)
    if not jnp.allclose(out, ref, atol=1e-2, rtol=1e-2):
        raise AssertionError("Pallas kernel output mismatch vs pure-JAX reference")
    print("KERNEL_OK")
</pallas_src>

<mosaic_0001>
module attributes {stable_mosaic.version = 11 : i64} {
  func.func @_lstm_bidir_fc_kernel(%arg0: i32, %arg1: memref<8x8x16xf32, #tpu.memory_space<vmem>>, %arg2: memref<8x1xi32, #tpu.memory_space<vmem>>, %arg3: memref<16x1024xf32, #tpu.memory_space<vmem>>, %arg4: memref<256x512xf32, #tpu.memory_space<vmem>>, %arg5: memref<1x1024xf32, #tpu.memory_space<vmem>>, %arg6: memref<256x16xf32, #tpu.memory_space<vmem>>, %arg7: memref<1x16xf32, #tpu.memory_space<vmem>>, %arg8: memref<8x16xf32, #tpu.memory_space<vmem>>, %arg9: memref<8x8x512xf32, #tpu.memory_space<vmem>>, %arg10: memref<8x8x512xf32, #tpu.memory_space<vmem>>) attributes {dimension_semantics = [#tpu.dimension_semantics<arbitrary>], iteration_bounds = array<i64: 1>, scalar_prefetch = 0 : i64, scratch_operands = 2 : i64, tpu.core_type = #tpu.core_type<tc>, window_params = [{pipeline_mode = #tpu.pipeline_mode<synchronous>, transform_indices = @transform_0, window_bounds = array<i64: 8, 8, 16>}, {pipeline_mode = #tpu.pipeline_mode<synchronous>, transform_indices = @transform_1, window_bounds = array<i64: 8, 1>}, {pipeline_mode = #tpu.pipeline_mode<synchronous>, transform_indices = @transform_2, window_bounds = array<i64: 16, 1024>}, {pipeline_mode = #tpu.pipeline_mode<synchronous>, transform_indices = @transform_3, window_bounds = array<i64: 256, 512>}, {pipeline_mode = #tpu.pipeline_mode<synchronous>, transform_indices = @transform_4, window_bounds = array<i64: 1, 1024>}, {pipeline_mode = #tpu.pipeline_mode<synchronous>, transform_indices = @transform_5, window_bounds = array<i64: 256, 16>}, {pipeline_mode = #tpu.pipeline_mode<synchronous>, transform_indices = @transform_6, window_bounds = array<i64: 1, 16>}, {pipeline_mode = #tpu.pipeline_mode<synchronous>, transform_indices = @transform_7, window_bounds = array<i64: 8, 16>}]} {
    %c0 = arith.constant 0 : index
    %c0_0 = arith.constant 0 : index
    %c0_1 = arith.constant 0 : index
    %0 = vector.load %arg1[%c0, %c0_0, %c0_1] : memref<8x8x16xf32, #tpu.memory_space<vmem>>, vector<8x8x16xf32>
    %1 = vector.shape_cast %0 : vector<8x8x16xf32> to vector<64x16xf32>
    %c0_2 = arith.constant 0 : index
    %c0_3 = arith.constant 0 : index
    %2 = vector.load %arg3[%c0_2, %c0_3] : memref<16x1024xf32, #tpu.memory_space<vmem>>, vector<16x1024xf32>
    %cst = arith.constant dense<0.000000e+00> : vector<64x1024xf32>
    %3 = tpu.matmul %1, %2, %cst {dimension_numbers = #tpu.dot_dimension_numbers<[1], [0], [0], [1], [0, 0, 1, 1], [], []>} : vector<64x16xf32>, vector<16x1024xf32>, vector<64x1024xf32> -> vector<64x1024xf32>
    %c0_4 = arith.constant 0 : index
    %c0_5 = arith.constant 0 : index
    %4 = vector.load %arg5[%c0_4, %c0_5] : memref<1x1024xf32, #tpu.memory_space<vmem>>, vector<1x1024xf32>
    %5 = vector.broadcast %4 : vector<1x1024xf32> to vector<64x1024xf32>
    %6 = arith.addf %3, %5 : vector<64x1024xf32>
    %7 = vector.shape_cast %6 : vector<64x1024xf32> to vector<8x8x1024xf32>
    %8 = vector.extract_strided_slice %7 {offsets = [0, 0, 0], sizes = [8, 8, 512], strides = [1, 1, 1]} : vector<8x8x1024xf32> to vector<8x8x512xf32>
    %c0_6 = arith.constant 0 : index
    %c0_7 = arith.constant 0 : index
    %c0_8 = arith.constant 0 : index
    %9 = vector.load %arg9[%c0_6, %c0_7, %c0_8] : memref<8x8x512xf32, #tpu.memory_space<vmem>>, vector<8x8x512xf32>
    tpu.vector_store %arg9[%c0_6, %c0_7, %c0_8], %8 {strides = array<i32>} : memref<8x8x512xf32, #tpu.memory_space<vmem>>, vector<8x8x512xf32>,
    %10 = vector.extract_strided_slice %7 {offsets = [0, 0, 512], sizes = [8, 8, 512], strides = [1, 1, 1]} : vector<8x8x1024xf32> to vector<8x8x512xf32>
    %c0_9 = arith.constant 0 : index
    %c0_10 = arith.constant 0 : index
    %c0_11 = arith.constant 0 : index
    %11 = vector.load %arg10[%c0_9, %c0_10, %c0_11] : memref<8x8x512xf32, #tpu.memory_space<vmem>>, vector<8x8x512xf32>
    tpu.vector_store %arg10[%c0_9, %c0_10, %c0_11], %10 {strides = array<i32>} : memref<8x8x512xf32, #tpu.memory_space<vmem>>, vector<8x8x512xf32>,
    %c0_12 = arith.constant 0 : index
    %c0_13 = arith.constant 0 : index
    %12 = vector.load %arg2[%c0_12, %c0_13] : memref<8x1xi32, #tpu.memory_space<vmem>>, vector<8x1xi32>
    %13 = tpu.concatenate %12, %12 in 0 : vector<8x1xi32>, vector<8x1xi32> -> vector<16x1xi32>
    %c0_i32 = arith.constant 0 : i32
    %14 = vector.broadcast %c0_i32 : i32 to vector<8x1xi32>
    %c7_i32 = arith.constant 7 : i32
    %15 = vector.broadcast %c7_i32 : i32 to vector<8x1xi32>
    %16 = tpu.concatenate %14, %15 in 0 : vector<8x1xi32>, vector<8x1xi32> -> vector<16x1xi32>
    %c1_i32 = arith.constant 1 : i32
    %17 = vector.broadcast %c1_i32 : i32 to vector<8x1xi32>
    %c-1_i32 = arith.constant -1 : i32
    %18 = vector.broadcast %c-1_i32 : i32 to vector<8x1xi32>
    %19 = tpu.concatenate %17, %18 in 0 : vector<8x1xi32>, vector<8x1xi32> -> vector<16x1xi32>
    %cst_14 = arith.constant 0.000000e+00 : f32
    %20 = vector.broadcast %cst_14 : f32 to vector<8x128xf32>
    %cst_15 = arith.constant 0.000000e+00 : f32
    %21 = vector.broadcast %cst_15 : f32 to vector<16x128xf32>
    %cst_16 = arith.constant 0.000000e+00 : f32
    %22 = vector.broadcast %cst_16 : f32 to vector<16x128xf32>
    %c0_i32_17 = arith.constant 0 : i32
    %23 = vector.extract_strided_slice %21 {offsets = [0, 0], sizes = [8, 128], strides = [1, 1]} : vector<16x128xf32> to vector<8x128xf32>
    %24 = tpu.concatenate %23, %20 in 1 : vector<8x128xf32>, vector<8x128xf32> -> vector<8x256xf32>
    %25 = vector.extract_strided_slice %21 {offsets = [8, 0], sizes = [8, 128], strides = [1, 1]} : vector<16x128xf32> to vector<8x128xf32>
    %26 = tpu.concatenate %20, %25 in 1 : vector<8x128xf32>, vector<8x128xf32> -> vector<8x256xf32>
    %27 = tpu.concatenate %24, %26 in 0 : vector<8x256xf32>, vector<8x256xf32> -> vector<16x256xf32>
    %c0_18 = arith.constant 0 : index
    %c0_19 = arith.constant 0 : index
    %28 = vector.load %arg4[%c0_18, %c0_19] : memref<256x512xf32, #tpu.memory_space<vmem>>, vector<256x512xf32>
    %cst_20 = arith.constant dense<0.000000e+00> : vector<16x512xf32>
    %29 = tpu.matmul %27, %28, %cst_20 {dimension_numbers = #tpu.dot_dimension_numbers<[1], [0], [0], [1], [0, 0, 1, 1], [], []>} : vector<16x256xf32>, vector<256x512xf32>, vector<16x512xf32> -> vector<16x512xf32>
    %30 = arith.index_cast %c0_i32_17 : i32 to index
    %c0_21 = arith.constant 0 : index
    %c0_22 = arith.constant 0 : index
    %31 = vector.load %arg9[%30, %c0_21, %c0_22] : memref<8x8x512xf32, #tpu.memory_space<vmem>>, vector<1x8x512xf32>
    %32 = vector.shape_cast %31 : vector<1x8x512xf32> to vector<8x512xf32>
    %c7_i32_23 = arith.constant 7 : i32
    %33 = arith.subi %c7_i32_23, %c0_i32_17 : i32
    %34 = arith.index_cast %33 : i32 to index
    %c0_24 = arith.constant 0 : index
    %c0_25 = arith.constant 0 : index
    %35 = vector.load %arg10[%34, %c0_24, %c0_25] : memref<8x8x512xf32, #tpu.memory_space<vmem>>, vector<1x8x512xf32>
    %36 = vector.shape_cast %35 : vector<1x8x512xf32> to vector<8x512xf32>
    %37 = tpu.concatenate %32, %36 in 0 : vector<8x512xf32>, vector<8x512xf32> -> vector<16x512xf32>
    %38 = arith.addf %29, %37 : vector<16x512xf32>
    %39 = vector.extract_strided_slice %38 {offsets = [0, 0], sizes = [16, 128], strides = [1, 1]} : vector<16x512xf32> to vector<16x128xf32>
    %40 = arith.negf %39 : vector<16x128xf32>
    %41 = math.exp %40 : vector<16x128xf32>
    %cst_26 = arith.constant 1.000000e+00 : f32
    %42 = vector.broadcast %cst_26 : f32 to vector<16x128xf32>
    %43 = arith.addf %42, %41 : vector<16x128xf32>
    %44 = arith.divf %42, %43 : vector<16x128xf32>
    %45 = vector.extract_strided_slice %38 {offsets = [0, 128], sizes = [16, 128], strides = [1, 1]} : vector<16x512xf32> to vector<16x128xf32>
    %46 = arith.negf %45 : vector<16x128xf32>
    %47 = math.exp %46 : vector<16x128xf32>
    %cst_27 = arith.constant 1.000000e+00 : f32
    %48 = vector.broadcast %cst_27 : f32 to vector<16x128xf32>
    %49 = arith.addf %48, %47 : vector<16x128xf32>
    %50 = arith.divf %48, %49 : vector<16x128xf32>
    %51 = vector.extract_strided_slice %38 {offsets = [0, 256], sizes = [16, 128], strides = [1, 1]} : vector<16x512xf32> to vector<16x128xf32>
    %52 = math.tanh %51 : vector<16x128xf32>
    %53 = vector.extract_strided_slice %38 {offsets = [0, 384], sizes = [16, 128], strides = [1, 1]} : vector<16x512xf32> to vector<16x128xf32>
    %54 = arith.negf %53 : vector<16x128xf32>
    %55 = math.exp %54 : vector<16x128xf32>
    %cst_28 = arith.constant 1.000000e+00 : f32
    %56 = vector.broadcast %cst_28 : f32 to vector<16x128xf32>
    %57 = arith.addf %56, %55 : vector<16x128xf32>
    %58 = arith.divf %56, %57 : vector<16x128xf32>
    %59 = arith.mulf %50, %22 : vector<16x128xf32>
    %60 = arith.mulf %44, %52 : vector<16x128xf32>
    %61 = arith.addf %59, %60 : vector<16x128xf32>
    %62 = math.tanh %61 : vector<16x128xf32>
    %63 = arith.mulf %58, %62 : vector<16x128xf32>
    %64 = vector.broadcast %c0_i32_17 : i32 to vector<16x1xi32>
    %65 = arith.muli %19, %64 : vector<16x1xi32>
    %66 = arith.addi %16, %65 : vector<16x1xi32>
    %67 = arith.cmpi slt, %66, %13 : vector<16x1xi32>
    %68 = vector.shape_cast %67 : vector<16x1xi1> to vector<16x1xi1>
    %69 = vector.broadcast %68 : vector<16x1xi1> to vector<16x128xi1>
    %70 = arith.select %69, %61, %22 : vector<16x128xi1>, vector<16x128xf32>
    %71 = vector.shape_cast %67 : vector<16x1xi1> to vector<16x1xi1>
    %72 = vector.broadcast %71 : vector<16x1xi1> to vector<16x128xi1>
    %73 = arith.select %72, %63, %21 : vector<16x128xi1>, vector<16x128xf32>
    %c1_i32_29 = arith.constant 1 : i32
    %74 = vector.extract_strided_slice %73 {offsets = [0, 0], sizes = [8, 128], strides = [1, 1]} : vector<16x128xf32> to vector<8x128xf32>
    %75 = tpu.concatenate %74, %20 in 1 : vector<8x128xf32>, vector<8x128xf32> -> vector<8x256xf32>
    %76 = vector.extract_strided_slice %73 {offsets = [8, 0], sizes = [8, 128], strides = [1, 1]} : vector<16x128xf32> to vector<8x128xf32>
    %77 = tpu.concatenate %20, %76 in 1 : vector<8x128xf32>, vector<8x128xf32> -> vector<8x256xf32>
    %78 = tpu.concatenate %75, %77 in 0 : vector<8x256xf32>, vector<8x256xf32> -> vector<16x256xf32>
    %c0_30 = arith.constant 0 : index
    %c0_31 = arith.constant 0 : index
    %79 = vector.load %arg4[%c0_30, %c0_31] : memref<256x512xf32, #tpu.memory_space<vmem>>, vector<256x512xf32>
    %cst_32 = arith.constant dense<0.000000e+00> : vector<16x512xf32>
    %80 = tpu.matmul %78, %79, %cst_32 {dimension_numbers = #tpu.dot_dimension_numbers<[1], [0], [0], [1], [0, 0, 1, 1], [], []>} : vector<16x256xf32>, vector<256x512xf32>, vector<16x512xf32> -> vector<16x512xf32>
    %81 = arith.index_cast %c1_i32_29 : i32 to index
    %c0_33 = arith.constant 0 : index
    %c0_34 = arith.constant 0 : index
    %82 = vector.load %arg9[%81, %c0_33, %c0_34] : memref<8x8x512xf32, #tpu.memory_space<vmem>>, vector<1x8x512xf32>
    %83 = vector.shape_cast %82 : vector<1x8x512xf32> to vector<8x512xf32>
    %c7_i32_35 = arith.constant 7 : i32
    %84 = arith.subi %c7_i32_35, %c1_i32_29 : i32
    %85 = arith.index_cast %84 : i32 to index
    %c0_36 = arith.constant 0 : index
    %c0_37 = arith.constant 0 : index
    %86 = vector.load %arg10[%85, %c0_36, %c0_37] : memref<8x8x512xf32, #tpu.memory_space<vmem>>, vector<1x8x512xf32>
    %87 = vector.shape_cast %86 : vector<1x8x512xf32> to vector<8x512xf32>
    %88 = tpu.concatenate %83, %87 in 0 : vector<8x512xf32>, vector<8x512xf32> -> vector<16x512xf32>
    %89 = arith.addf %80, %88 : vector<16x512xf32>
    %90 = vector.extract_strided_slice %89 {offsets = [0, 0], sizes = [16, 128], strides = [1, 1]} : vector<16x512xf32> to vector<16x128xf32>
    %91 = arith.negf %90 : vector<16x128xf32>
    %92 = math.exp %91 : vector<16x128xf32>
    %cst_38 = arith.constant 1.000000e+00 : f32
    %93 = vector.broadcast %cst_38 : f32 to vector<16x128xf32>
    %94 = arith.addf %93, %92 : vector<16x128xf32>
    %95 = arith.divf %93, %94 : vector<16x128xf32>
    %96 = vector.extract_strided_slice %89 {offsets = [0, 128], sizes = [16, 128], strides = [1, 1]} : vector<16x512xf32> to vector<16x128xf32>
    %97 = arith.negf %96 : vector<16x128xf32>
    %98 = math.exp %97 : vector<16x128xf32>
    %cst_39 = arith.constant 1.000000e+00 : f32
    %99 = vector.broadcast %cst_39 : f32 to vector<16x128xf32>
    %100 = arith.addf %99, %98 : vector<16x128xf32>
    %101 = arith.divf %99, %100 : vector<16x128xf32>
    %102 = vector.extract_strided_slice %89 {offsets = [0, 256], sizes = [16, 128], strides = [1, 1]} : vector<16x512xf32> to vector<16x128xf32>
    %103 = math.tanh %102 : vector<16x128xf32>
    %104 = vector.extract_strided_slice %89 {offsets = [0, 384], sizes = [16, 128], strides = [1, 1]} : vector<16x512xf32> to vector<16x128xf32>
    %105 = arith.negf %104 : vector<16x128xf32>
    %106 = math.exp %105 : vector<16x128xf32>
    %cst_40 = arith.constant 1.000000e+00 : f32
    %107 = vector.broadcast %cst_40 : f32 to vector<16x128xf32>
    %108 = arith.addf %107, %106 : vector<16x128xf32>
    %109 = arith.divf %107, %108 : vector<16x128xf32>
    %110 = arith.mulf %101, %70 : vector<16x128xf32>
    %111 = arith.mulf %95, %103 : vector<16x128xf32>
    %112 = arith.addf %110, %111 : vector<16x128xf32>
    %113 = math.tanh %112 : vector<16x128xf32>
    %114 = arith.mulf %109, %113 : vector<16x128xf32>
    %115 = vector.broadcast %c1_i32_29 : i32 to vector<16x1xi32>
    %116 = arith.muli %19, %115 : vector<16x1xi32>
    %117 = arith.addi %16, %116 : vector<16x1xi32>
    %118 = arith.cmpi slt, %117, %13 : vector<16x1xi32>
    %119 = vector.shape_cast %118 : vector<16x1xi1> to vector<16x1xi1>
    %120 = vector.broadcast %119 : vector<16x1xi1> to vector<16x128xi1>
    %121 = arith.select %120, %112, %70 : vector<16x128xi1>, vector<16x128xf32>
    %122 = vector.shape_cast %118 : vector<16x1xi1> to vector<16x1xi1>
    %123 = vector.broadcast %122 : vector<16x1xi1> to vector<16x128xi1>
    %124 = arith.select %123, %114, %73 : vector<16x128xi1>, vector<16x128xf32>
    %c2_i32 = arith.constant 2 : i32
    %125 = vector.extract_strided_slice %124 {offsets = [0, 0], sizes = [8, 128], strides = [1, 1]} : vector<16x128xf32> to vector<8x128xf32>
    %126 = tpu.concatenate %125, %20 in 1 : vector<8x128xf32>, vector<8x128xf32> -> vector<8x256xf32>
    %127 = vector.extract_strided_slice %124 {offsets = [8, 0], sizes = [8, 128], strides = [1, 1]} : vector<16x128xf32> to vector<8x128xf32>
    %128 = tpu.concatenate %20, %127 in 1 : vector<8x128xf32>, vector<8x128xf32> -> vector<8x256xf32>
    %129 = tpu.concatenate %126, %128 in 0 : vector<8x256xf32>, vector<8x256xf32> -> vector<16x256xf32>
    %c0_41 = arith.constant 0 : index
    %c0_42 = arith.constant 0 : index
    %130 = vector.load %arg4[%c0_41, %c0_42] : memref<256x512xf32, #tpu.memory_space<vmem>>, vector<256x512xf32>
    %cst_43 = arith.constant dense<0.000000e+00> : vector<16x512xf32>
    %131 = tpu.matmul %129, %130, %cst_43 {dimension_numbers = #tpu.dot_dimension_numbers<[1], [0], [0], [1], [0, 0, 1, 1], [], []>} : vector<16x256xf32>, vector<256x512xf32>, vector<16x512xf32> -> vector<16x512xf32>
    %132 = arith.index_cast %c2_i32 : i32 to index
    %c0_44 = arith.constant 0 : index
    %c0_45 = arith.constant 0 : index
    %133 = vector.load %arg9[%132, %c0_44, %c0_45] : memref<8x8x512xf32, #tpu.memory_space<vmem>>, vector<1x8x512xf32>
    %134 = vector.shape_cast %133 : vector<1x8x512xf32> to vector<8x512xf32>
    %c7_i32_46 = arith.constant 7 : i32
    %135 = arith.subi %c7_i32_46, %c2_i32 : i32
    %136 = arith.index_cast %135 : i32 to index
    %c0_47 = arith.constant 0 : index
    %c0_48 = arith.constant 0 : index
    %137 = vector.load %arg10[%136, %c0_47, %c0_48] : memref<8x8x512xf32, #tpu.memory_space<vmem>>, vector<1x8x512xf32>
    %138 = vector.shape_cast %137 : vector<1x8x512xf32> to vector<8x512xf32>
    %139 = tpu.concatenate %134, %138 in 0 : vector<8x512xf32>, vector<8x512xf32> -> vector<16x512xf32>
    %140 = arith.addf %131, %139 : vector<16x512xf32>
    %141 = vector.extract_strided_slice %140 {offsets = [0, 0], sizes = [16, 128], strides = [1, 1]} : vector<16x512xf32> to vector<16x128xf32>
    %142 = arith.negf %141 : vector<16x128xf32>
    %143 = math.exp %142 : vector<16x128xf32>
    %cst_49 = arith.constant 1.000000e+00 : f32
    %144 = vector.broadcast %cst_49 : f32 to vector<16x128xf32>
    %145 = arith.addf %144, %143 : vector<16x128xf32>
    %146 = arith.divf %144, %145 : vector<16x128xf32>
    %147 = vector.extract_strided_slice %140 {offsets = [0, 128], sizes = [16, 128], strides = [1, 1]} : vector<16x512xf32> to vector<16x128xf32>
    %148 = arith.negf %147 : vector<16x128xf32>
    %149 = math.exp %148 : vector<16x128xf32>
    %cst_50 = arith.constant 1.000000e+00 : f32
    %150 = vector.broadcast %cst_50 : f32 to vector<16x128xf32>
    %151 = arith.addf %150, %149 : vector<16x128xf32>
    %152 = arith.divf %150, %151 : vector<16x128xf32>
    %153 = vector.extract_strided_slice %140 {offsets = [0, 256], sizes = [16, 128], strides = [1, 1]} : vector<16x512xf32> to vector<16x128xf32>
    %154 = math.tanh %153 : vector<16x128xf32>
    %155 = vector.extract_strided_slice %140 {offsets = [0, 384], sizes = [16, 128], strides = [1, 1]} : vector<16x512xf32> to vector<16x128xf32>
    %156 = arith.negf %155 : vector<16x128xf32>
    %157 = math.exp %156 : vector<16x128xf32>
    %cst_51 = arith.constant 1.000000e+00 : f32
    %158 = vector.broadcast %cst_51 : f32 to vector<16x128xf32>
    %159 = arith.addf %158, %157 : vector<16x128xf32>
    %160 = arith.divf %158, %159 : vector<16x128xf32>
    %161 = arith.mulf %152, %121 : vector<16x128xf32>
    %162 = arith.mulf %146, %154 : vector<16x128xf32>
    %163 = arith.addf %161, %162 : vector<16x128xf32>
    %164 = math.tanh %163 : vector<16x128xf32>
    %165 = arith.mulf %160, %164 : vector<16x128xf32>
    %166 = vector.broadcast %c2_i32 : i32 to vector<16x1xi32>
    %167 = arith.muli %19, %166 : vector<16x1xi32>
    %168 = arith.addi %16, %167 : vector<16x1xi32>
    %169 = arith.cmpi slt, %168, %13 : vector<16x1xi32>
    %170 = vector.shape_cast %169 : vector<16x1xi1> to vector<16x1xi1>
    %171 = vector.broadcast %170 : vector<16x1xi1> to vector<16x128xi1>
    %172 = arith.select %171, %163, %121 : vector<16x128xi1>, vector<16x128xf32>
    %173 = vector.shape_cast %169 : vector<16x1xi1> to vector<16x1xi1>
    %174 = vector.broadcast %173 : vector<16x1xi1> to vector<16x128xi1>
    %175 = arith.select %174, %165, %124 : vector<16x128xi1>, vector<16x128xf32>
    %c3_i32 = arith.constant 3 : i32
    %176 = vector.extract_strided_slice %175 {offsets = [0, 0], sizes = [8, 128], strides = [1, 1]} : vector<16x128xf32> to vector<8x128xf32>
    %177 = tpu.concatenate %176, %20 in 1 : vector<8x128xf32>, vector<8x128xf32> -> vector<8x256xf32>
    %178 = vector.extract_strided_slice %175 {offsets = [8, 0], sizes = [8, 128], strides = [1, 1]} : vector<16x128xf32> to vector<8x128xf32>
    %179 = tpu.concatenate %20, %178 in 1 : vector<8x128xf32>, vector<8x128xf32> -> vector<8x256xf32>
    %180 = tpu.concatenate %177, %179 in 0 : vector<8x256xf32>, vector<8x256xf32> -> vector<16x256xf32>
    %c0_52 = arith.constant 0 : index
    %c0_53 = arith.constant 0 : index
    %181 = vector.load %arg4[%c0_52, %c0_53] : memref<256x512xf32, #tpu.memory_space<vmem>>, vector<256x512xf32>
    %cst_54 = arith.constant dense<0.000000e+00> : vector<16x512xf32>
    %182 = tpu.matmul %180, %181, %cst_54 {dimension_numbers = #tpu.dot_dimension_numbers<[1], [0], [0], [1], [0, 0, 1, 1], [], []>} : vector<16x256xf32>, vector<256x512xf32>, vector<16x512xf32> -> vector<16x512xf32>
    %183 = arith.index_cast %c3_i32 : i32 to index
    %c0_55 = arith.constant 0 : index
    %c0_56 = arith.constant 0 : index
    %184 = vector.load %arg9[%183, %c0_55, %c0_56] : memref<8x8x512xf32, #tpu.memory_space<vmem>>, vector<1x8x512xf32>
    %185 = vector.shape_cast %184 : vector<1x8x512xf32> to vector<8x512xf32>
    %c7_i32_57 = arith.constant 7 : i32
    %186 = arith.subi %c7_i32_57, %c3_i32 : i32
    %187 = arith.index_cast %186 : i32 to index
    %c0_58 = arith.constant 0 : index
    %c0_59 = arith.constant 0 : index
    %188 = vector.load %arg10[%187, %c0_58, %c0_59] : memref<8x8x512xf32, #tpu.memory_space<vmem>>, vector<1x8x512xf32>
    %189 = vector.shape_cast %188 : vector<1x8x512xf32> to vector<8x512xf32>
    %190 = tpu.concatenate %185, %189 in 0 : vector<8x512xf32>, vector<8x512xf32> -> vector<16x512xf32>
    %191 = arith.addf %182, %190 : vector<16x512xf32>
    %192 = vector.extract_strided_slice %191 {offsets = [0, 0], sizes = [16, 128], strides = [1, 1]} : vector<16x512xf32> to vector<16x128xf32>
    %193 = arith.negf %192 : vector<16x128xf32>
    %194 = math.exp %193 : vector<16x128xf32>
    %cst_60 = arith.constant 1.000000e+00 : f32
    %195 = vector.broadcast %cst_60 : f32 to vector<16x128xf32>
    %196 = arith.addf %195, %194 : vector<16x128xf32>
    %197 = arith.divf %195, %196 : vector<16x128xf32>
    %198 = vector.extract_strided_slice %191 {offsets = [0, 128], sizes = [16, 128], strides = [1, 1]} : vector<16x512xf32> to vector<16x128xf32>
    %199 = arith.negf %198 : vector<16x128xf32>
    %200 = math.exp %199 : vector<16x128xf32>
    %cst_61 = arith.constant 1.000000e+00 : f32
    %201 = vector.broadcast %cst_61 : f32 to vector<16x128xf32>
    %202 = arith.addf %201, %200 : vector<16x128xf32>
    %203 = arith.divf %201, %202 : vector<16x128xf32>
    %204 = vector.extract_strided_slice %191 {offsets = [0, 256], sizes = [16, 128], strides = [1, 1]} : vector<16x512xf32> to vector<16x128xf32>
    %205 = math.tanh %204 : vector<16x128xf32>
    %206 = vector.extract_strided_slice %191 {offsets = [0, 384], sizes = [16, 128], strides = [1, 1]} : vector<16x512xf32> to vector<16x128xf32>
    %207 = arith.negf %206 : vector<16x128xf32>
    %208 = math.exp %207 : vector<16x128xf32>
    %cst_62 = arith.constant 1.000000e+00 : f32
    %209 = vector.broadcast %cst_62 : f32 to vector<16x128xf32>
    %210 = arith.addf %209, %208 : vector<16x128xf32>
    %211 = arith.divf %209, %210 : vector<16x128xf32>
    %212 = arith.mulf %203, %172 : vector<16x128xf32>
    %213 = arith.mulf %197, %205 : vector<16x128xf32>
    %214 = arith.addf %212, %213 : vector<16x128xf32>
    %215 = math.tanh %214 : vector<16x128xf32>
    %216 = arith.mulf %211, %215 : vector<16x128xf32>
    %217 = vector.broadcast %c3_i32 : i32 to vector<16x1xi32>
    %218 = arith.muli %19, %217 : vector<16x1xi32>
    %219 = arith.addi %16, %218 : vector<16x1xi32>
    %220 = arith.cmpi slt, %219, %13 : vector<16x1xi32>
    %221 = vector.shape_cast %220 : vector<16x1xi1> to vector<16x1xi1>
    %222 = vector.broadcast %221 : vector<16x1xi1> to vector<16x128xi1>
    %223 = arith.select %222, %214, %172 : vector<16x128xi1>, vector<16x128xf32>
    %224 = vector.shape_cast %220 : vector<16x1xi1> to vector<16x1xi1>
    %225 = vector.broadcast %224 : vector<16x1xi1> to vector<16x128xi1>
    %226 = arith.select %225, %216, %175 : vector<16x128xi1>, vector<16x128xf32>
    %c4_i32 = arith.constant 4 : i32
    %227 = vector.extract_strided_slice %226 {offsets = [0, 0], sizes = [8, 128], strides = [1, 1]} : vector<16x128xf32> to vector<8x128xf32>
    %228 = tpu.concatenate %227, %20 in 1 : vector<8x128xf32>, vector<8x128xf32> -> vector<8x256xf32>
    %229 = vector.extract_strided_slice %226 {offsets = [8, 0], sizes = [8, 128], strides = [1, 1]} : vector<16x128xf32> to vector<8x128xf32>
    %230 = tpu.concatenate %20, %229 in 1 : vector<8x128xf32>, vector<8x128xf32> -> vector<8x256xf32>
    %231 = tpu.concatenate %228, %230 in 0 : vector<8x256xf32>, vector<8x256xf32> -> vector<16x256xf32>
    %c0_63 = arith.constant 0 : index
    %c0_64 = arith.constant 0 : index
    %232 = vector.load %arg4[%c0_63, %c0_64] : memref<256x512xf32, #tpu.memory_space<vmem>>, vector<256x512xf32>
    %cst_65 = arith.constant dense<0.000000e+00> : vector<16x512xf32>
    %233 = tpu.matmul %231, %232, %cst_65 {dimension_numbers = #tpu.dot_dimension_numbers<[1], [0], [0], [1], [0, 0, 1, 1], [], []>} : vector<16x256xf32>, vector<256x512xf32>, vector<16x512xf32> -> vector<16x512xf32>
    %234 = arith.index_cast %c4_i32 : i32 to index
    %c0_66 = arith.constant 0 : index
    %c0_67 = arith.constant 0 : index
    %235 = vector.load %arg9[%234, %c0_66, %c0_67] : memref<8x8x512xf32, #tpu.memory_space<vmem>>, vector<1x8x512xf32>
    %236 = vector.shape_cast %235 : vector<1x8x512xf32> to vector<8x512xf32>
    %c7_i32_68 = arith.constant 7 : i32
    %237 = arith.subi %c7_i32_68, %c4_i32 : i32
    %238 = arith.index_cast %237 : i32 to index
    %c0_69 = arith.constant 0 : index
    %c0_70 = arith.constant 0 : index
    %239 = vector.load %arg10[%238, %c0_69, %c0_70] : memref<8x8x512xf32, #tpu.memory_space<vmem>>, vector<1x8x512xf32>
    %240 = vector.shape_cast %239 : vector<1x8x512xf32> to vector<8x512xf32>
    %241 = tpu.concatenate %236, %240 in 0 : vector<8x512xf32>, vector<8x512xf32> -> vector<16x512xf32>
    %242 = arith.addf %233, %241 : vector<16x512xf32>
    %243 = vector.extract_strided_slice %242 {offsets = [0, 0], sizes = [16, 128], strides = [1, 1]} : vector<16x512xf32> to vector<16x128xf32>
    %244 = arith.negf %243 : vector<16x128xf32>
    %245 = math.exp %244 : vector<16x128xf32>
    %cst_71 = arith.constant 1.000000e+00 : f32
    %246 = vector.broadcast %cst_71 : f32 to vector<16x128xf32>
    %247 = arith.addf %246, %245 : vector<16x128xf32>
    %248 = arith.divf %246, %247 : vector<16x128xf32>
    %249 = vector.extract_strided_slice %242 {offsets = [0, 128], sizes = [16, 128], strides = [1, 1]} : vector<16x512xf32> to vector<16x128xf32>
    %250 = arith.negf %249 : vector<16x128xf32>
    %251 = math.exp %250 : vector<16x128xf32>
    %cst_72 = arith.constant 1.000000e+00 : f32
    %252 = vector.broadcast %cst_72 : f32 to vector<16x128xf32>
    %253 = arith.addf %252, %251 : vector<16x128xf32>
    %254 = arith.divf %252, %253 : vector<16x128xf32>
    %255 = vector.extract_strided_slice %242 {offsets = [0, 256], sizes = [16, 128], strides = [1, 1]} : vector<16x512xf32> to vector<16x128xf32>
    %256 = math.tanh %255 : vector<16x128xf32>
    %257 = vector.extract_strided_slice %242 {offsets = [0, 384], sizes = [16, 128], strides = [1, 1]} : vector<16x512xf32> to vector<16x128xf32>
    %258 = arith.negf %257 : vector<16x128xf32>
    %259 = math.exp %258 : vector<16x128xf32>
    %cst_73 = arith.constant 1.000000e+00 : f32
    %260 = vector.broadcast %cst_73 : f32 to vector<16x128xf32>
    %261 = arith.addf %260, %259 : vector<16x128xf32>
    %262 = arith.divf %260, %261 : vector<16x128xf32>
    %263 = arith.mulf %254, %223 : vector<16x128xf32>
    %264 = arith.mulf %248, %256 : vector<16x128xf32>
    %265 = arith.addf %263, %264 : vector<16x128xf32>
    %266 = math.tanh %265 : vector<16x128xf32>
    %267 = arith.mulf %262, %266 : vector<16x128xf32>
    %268 = vector.broadcast %c4_i32 : i32 to vector<16x1xi32>
    %269 = arith.muli %19, %268 : vector<16x1xi32>
    %270 = arith.addi %16, %269 : vector<16x1xi32>
    %271 = arith.cmpi slt, %270, %13 : vector<16x1xi32>
    %272 = vector.shape_cast %271 : vector<16x1xi1> to vector<16x1xi1>
    %273 = vector.broadcast %272 : vector<16x1xi1> to vector<16x128xi1>
    %274 = arith.select %273, %265, %223 : vector<16x128xi1>, vector<16x128xf32>
    %275 = vector.shape_cast %271 : vector<16x1xi1> to vector<16x1xi1>
    %276 = vector.broadcast %275 : vector<16x1xi1> to vector<16x128xi1>
    %277 = arith.select %276, %267, %226 : vector<16x128xi1>, vector<16x128xf32>
    %c5_i32 = arith.constant 5 : i32
    %278 = vector.extract_strided_slice %277 {offsets = [0, 0], sizes = [8, 128], strides = [1, 1]} : vector<16x128xf32> to vector<8x128xf32>
    %279 = tpu.concatenate %278, %20 in 1 : vector<8x128xf32>, vector<8x128xf32> -> vector<8x256xf32>
    %280 = vector.extract_strided_slice %277 {offsets = [8, 0], sizes = [8, 128], strides = [1, 1]} : vector<16x128xf32> to vector<8x128xf32>
    %281 = tpu.concatenate %20, %280 in 1 : vector<8x128xf32>, vector<8x128xf32> -> vector<8x256xf32>
    %282 = tpu.concatenate %279, %281 in 0 : vector<8x256xf32>, vector<8x256xf32> -> vector<16x256xf32>
    %c0_74 = arith.constant 0 : index
    %c0_75 = arith.constant 0 : index
    %283 = vector.load %arg4[%c0_74, %c0_75] : memref<256x512xf32, #tpu.memory_space<vmem>>, vector<256x512xf32>
    %cst_76 = arith.constant dense<0.000000e+00> : vector<16x512xf32>
    %284 = tpu.matmul %282, %283, %cst_76 {dimension_numbers = #tpu.dot_dimension_numbers<[1], [0], [0], [1], [0, 0, 1, 1], [], []>} : vector<16x256xf32>, vector<256x512xf32>, vector<16x512xf32> -> vector<16x512xf32>
    %285 = arith.index_cast %c5_i32 : i32 to index
    %c0_77 = arith.constant 0 : index
    %c0_78 = arith.constant 0 : index
    %286 = vector.load %arg9[%285, %c0_77, %c0_78] : memref<8x8x512xf32, #tpu.memory_space<vmem>>, vector<1x8x512xf32>
    %287 = vector.shape_cast %286 : vector<1x8x512xf32> to vector<8x512xf32>
    %c7_i32_79 = arith.constant 7 : i32
    %288 = arith.subi %c7_i32_79, %c5_i32 : i32
    %289 = arith.index_cast %288 : i32 to index
    %c0_80 = arith.constant 0 : index
    %c0_81 = arith.constant 0 : index
    %290 = vector.load %arg10[%289, %c0_80, %c0_81] : memref<8x8x512xf32, #tpu.memory_space<vmem>>, vector<1x8x512xf32>
    %291 = vector.shape_cast %290 : vector<1x8x512xf32> to vector<8x512xf32>
    %292 = tpu.concatenate %287, %291 in 0 : vector<8x512xf32>, vector<8x512xf32> -> vector<16x512xf32>
    %293 = arith.addf %284, %292 : vector<16x512xf32>
    %294 = vector.extract_strided_slice %293 {offsets = [0, 0], sizes = [16, 128], strides = [1, 1]} : vector<16x512xf32> to vector<16x128xf32>
    %295 = arith.negf %294 : vector<16x128xf32>
    %296 = math.exp %295 : vector<16x128xf32>
    %cst_82 = arith.constant 1.000000e+00 : f32
    %297 = vector.broadcast %cst_82 : f32 to vector<16x128xf32>
    %298 = arith.addf %297, %296 : vector<16x128xf32>
    %299 = arith.divf %297, %298 : vector<16x128xf32>
    %300 = vector.extract_strided_slice %293 {offsets = [0, 128], sizes = [16, 128], strides = [1, 1]} : vector<16x512xf32> to vector<16x128xf32>
    %301 = arith.negf %300 : vector<16x128xf32>
    %302 = math.exp %301 : vector<16x128xf32>
    %cst_83 = arith.constant 1.000000e+00 : f32
    %303 = vector.broadcast %cst_83 : f32 to vector<16x128xf32>
    %304 = arith.addf %303, %302 : vector<16x128xf32>
    %305 = arith.divf %303, %304 : vector<16x128xf32>
    %306 = vector.extract_strided_slice %293 {offsets = [0, 256], sizes = [16, 128], strides = [1, 1]} : vector<16x512xf32> to vector<16x128xf32>
    %307 = math.tanh %306 : vector<16x128xf32>
    %308 = vector.extract_strided_slice %293 {offsets = [0, 384], sizes = [16, 128], strides = [1, 1]} : vector<16x512xf32> to vector<16x128xf32>
    %309 = arith.negf %308 : vector<16x128xf32>
    %310 = math.exp %309 : vector<16x128xf32>
    %cst_84 = arith.constant 1.000000e+00 : f32
    %311 = vector.broadcast %cst_84 : f32 to vector<16x128xf32>
    %312 = arith.addf %311, %310 : vector<16x128xf32>
    %313 = arith.divf %311, %312 : vector<16x128xf32>
    %314 = arith.mulf %305, %274 : vector<16x128xf32>
    %315 = arith.mulf %299, %307 : vector<16x128xf32>
    %316 = arith.addf %314, %315 : vector<16x128xf32>
    %317 = math.tanh %316 : vector<16x128xf32>
    %318 = arith.mulf %313, %317 : vector<16x128xf32>
    %319 = vector.broadcast %c5_i32 : i32 to vector<16x1xi32>
    %320 = arith.muli %19, %319 : vector<16x1xi32>
    %321 = arith.addi %16, %320 : vector<16x1xi32>
    %322 = arith.cmpi slt, %321, %13 : vector<16x1xi32>
    %323 = vector.shape_cast %322 : vector<16x1xi1> to vector<16x1xi1>
    %324 = vector.broadcast %323 : vector<16x1xi1> to vector<16x128xi1>
    %325 = arith.select %324, %316, %274 : vector<16x128xi1>, vector<16x128xf32>
    %326 = vector.shape_cast %322 : vector<16x1xi1> to vector<16x1xi1>
    %327 = vector.broadcast %326 : vector<16x1xi1> to vector<16x128xi1>
    %328 = arith.select %327, %318, %277 : vector<16x128xi1>, vector<16x128xf32>
    %c6_i32 = arith.constant 6 : i32
    %329 = vector.extract_strided_slice %328 {offsets = [0, 0], sizes = [8, 128], strides = [1, 1]} : vector<16x128xf32> to vector<8x128xf32>
    %330 = tpu.concatenate %329, %20 in 1 : vector<8x128xf32>, vector<8x128xf32> -> vector<8x256xf32>
    %331 = vector.extract_strided_slice %328 {offsets = [8, 0], sizes = [8, 128], strides = [1, 1]} : vector<16x128xf32> to vector<8x128xf32>
    %332 = tpu.concatenate %20, %331 in 1 : vector<8x128xf32>, vector<8x128xf32> -> vector<8x256xf32>
    %333 = tpu.concatenate %330, %332 in 0 : vector<8x256xf32>, vector<8x256xf32> -> vector<16x256xf32>
    %c0_85 = arith.constant 0 : index
    %c0_86 = arith.constant 0 : index
    %334 = vector.load %arg4[%c0_85, %c0_86] : memref<256x512xf32, #tpu.memory_space<vmem>>, vector<256x512xf32>
    %cst_87 = arith.constant dense<0.000000e+00> : vector<16x512xf32>
    %335 = tpu.matmul %333, %334, %cst_87 {dimension_numbers = #tpu.dot_dimension_numbers<[1], [0], [0], [1], [0, 0, 1, 1], [], []>} : vector<16x256xf32>, vector<256x512xf32>, vector<16x512xf32> -> vector<16x512xf32>
    %336 = arith.index_cast %c6_i32 : i32 to index
    %c0_88 = arith.constant 0 : index
    %c0_89 = arith.constant 0 : index
    %337 = vector.load %arg9[%336, %c0_88, %c0_89] : memref<8x8x512xf32, #tpu.memory_space<vmem>>, vector<1x8x512xf32>
    %338 = vector.shape_cast %337 : vector<1x8x512xf32> to vector<8x512xf32>
    %c7_i32_90 = arith.constant 7 : i32
    %339 = arith.subi %c7_i32_90, %c6_i32 : i32
    %340 = arith.index_cast %339 : i32 to index
    %c0_91 = arith.constant 0 : index
    %c0_92 = arith.constant 0 : index
    %341 = vector.load %arg10[%340, %c0_91, %c0_92] : memref<8x8x512xf32, #tpu.memory_space<vmem>>, vector<1x8x512xf32>
    %342 = vector.shape_cast %341 : vector<1x8x512xf32> to vector<8x512xf32>
    %343 = tpu.concatenate %338, %342 in 0 : vector<8x512xf32>, vector<8x512xf32> -> vector<16x512xf32>
    %344 = arith.addf %335, %343 : vector<16x512xf32>
    %345 = vector.extract_strided_slice %344 {offsets = [0, 0], sizes = [16, 128], strides = [1, 1]} : vector<16x512xf32> to vector<16x128xf32>
    %346 = arith.negf %345 : vector<16x128xf32>
    %347 = math.exp %346 : vector<16x128xf32>
    %cst_93 = arith.constant 1.000000e+00 : f32
    %348 = vector.broadcast %cst_93 : f32 to vector<16x128xf32>
    %349 = arith.addf %348, %347 : vector<16x128xf32>
    %350 = arith.divf %348, %349 : vector<16x128xf32>
    %351 = vector.extract_strided_slice %344 {offsets = [0, 128], sizes = [16, 128], strides = [1, 1]} : vector<16x512xf32> to vector<16x128xf32>
    %352 = arith.negf %351 : vector<16x128xf32>
    %353 = math.exp %352 : vector<16x128xf32>
    %cst_94 = arith.constant 1.000000e+00 : f32
    %354 = vector.broadcast %cst_94 : f32 to vector<16x128xf32>
    %355 = arith.addf %354, %353 : vector<16x128xf32>
    %356 = arith.divf %354, %355 : vector<16x128xf32>
    %357 = vector.extract_strided_slice %344 {offsets = [0, 256], sizes = [16, 128], strides = [1, 1]} : vector<16x512xf32> to vector<16x128xf32>
    %358 = math.tanh %357 : vector<16x128xf32>
    %359 = vector.extract_strided_slice %344 {offsets = [0, 384], sizes = [16, 128], strides = [1, 1]} : vector<16x512xf32> to vector<16x128xf32>
    %360 = arith.negf %359 : vector<16x128xf32>
    %361 = math.exp %360 : vector<16x128xf32>
    %cst_95 = arith.constant 1.000000e+00 : f32
    %362 = vector.broadcast %cst_95 : f32 to vector<16x128xf32>
    %363 = arith.addf %362, %361 : vector<16x128xf32>
    %364 = arith.divf %362, %363 : vector<16x128xf32>
    %365 = arith.mulf %356, %325 : vector<16x128xf32>
    %366 = arith.mulf %350, %358 : vector<16x128xf32>
    %367 = arith.addf %365, %366 : vector<16x128xf32>
    %368 = math.tanh %367 : vector<16x128xf32>
    %369 = arith.mulf %364, %368 : vector<16x128xf32>
    %370 = vector.broadcast %c6_i32 : i32 to vector<16x1xi32>
    %371 = arith.muli %19, %370 : vector<16x1xi32>
    %372 = arith.addi %16, %371 : vector<16x1xi32>
    %373 = arith.cmpi slt, %372, %13 : vector<16x1xi32>
    %374 = vector.shape_cast %373 : vector<16x1xi1> to vector<16x1xi1>
    %375 = vector.broadcast %374 : vector<16x1xi1> to vector<16x128xi1>
    %376 = arith.select %375, %367, %325 : vector<16x128xi1>, vector<16x128xf32>
    %377 = vector.shape_cast %373 : vector<16x1xi1> to vector<16x1xi1>
    %378 = vector.broadcast %377 : vector<16x1xi1> to vector<16x128xi1>
    %379 = arith.select %378, %369, %328 : vector<16x128xi1>, vector<16x128xf32>
    %c7_i32_96 = arith.constant 7 : i32
    %380 = vector.extract_strided_slice %379 {offsets = [0, 0], sizes = [8, 128], strides = [1, 1]} : vector<16x128xf32> to vector<8x128xf32>
    %381 = tpu.concatenate %380, %20 in 1 : vector<8x128xf32>, vector<8x128xf32> -> vector<8x256xf32>
    %382 = vector.extract_strided_slice %379 {offsets = [8, 0], sizes = [8, 128], strides = [1, 1]} : vector<16x128xf32> to vector<8x128xf32>
    %383 = tpu.concatenate %20, %382 in 1 : vector<8x128xf32>, vector<8x128xf32> -> vector<8x256xf32>
    %384 = tpu.concatenate %381, %383 in 0 : vector<8x256xf32>, vector<8x256xf32> -> vector<16x256xf32>
    %c0_97 = arith.constant 0 : index
    %c0_98 = arith.constant 0 : index
    %385 = vector.load %arg4[%c0_97, %c0_98] : memref<256x512xf32, #tpu.memory_space<vmem>>, vector<256x512xf32>
    %cst_99 = arith.constant dense<0.000000e+00> : vector<16x512xf32>
    %386 = tpu.matmul %384, %385, %cst_99 {dimension_numbers = #tpu.dot_dimension_numbers<[1], [0], [0], [1], [0, 0, 1, 1], [], []>} : vector<16x256xf32>, vector<256x512xf32>, vector<16x512xf32> -> vector<16x512xf32>
    %387 = arith.index_cast %c7_i32_96 : i32 to index
    %c0_100 = arith.constant 0 : index
    %c0_101 = arith.constant 0 : index
    %388 = vector.load %arg9[%387, %c0_100, %c0_101] : memref<8x8x512xf32, #tpu.memory_space<vmem>>, vector<1x8x512xf32>
    %389 = vector.shape_cast %388 : vector<1x8x512xf32> to vector<8x512xf32>
    %c7_i32_102 = arith.constant 7 : i32
    %390 = arith.subi %c7_i32_102, %c7_i32_96 : i32
    %391 = arith.index_cast %390 : i32 to index
    %c0_103 = arith.constant 0 : index
    %c0_104 = arith.constant 0 : index
    %392 = vector.load %arg10[%391, %c0_103, %c0_104] : memref<8x8x512xf32, #tpu.memory_space<vmem>>, vector<1x8x512xf32>
    %393 = vector.shape_cast %392 : vector<1x8x512xf32> to vector<8x512xf32>
    %394 = tpu.concatenate %389, %393 in 0 : vector<8x512xf32>, vector<8x512xf32> -> vector<16x512xf32>
    %395 = arith.addf %386, %394 : vector<16x512xf32>
    %396 = vector.extract_strided_slice %395 {offsets = [0, 0], sizes = [16, 128], strides = [1, 1]} : vector<16x512xf32> to vector<16x128xf32>
    %397 = arith.negf %396 : vector<16x128xf32>
    %398 = math.exp %397 : vector<16x128xf32>
    %cst_105 = arith.constant 1.000000e+00 : f32
    %399 = vector.broadcast %cst_105 : f32 to vector<16x128xf32>
    %400 = arith.addf %399, %398 : vector<16x128xf32>
    %401 = arith.divf %399, %400 : vector<16x128xf32>
    %402 = vector.extract_strided_slice %395 {offsets = [0, 128], sizes = [16, 128], strides = [1, 1]} : vector<16x512xf32> to vector<16x128xf32>
    %403 = arith.negf %402 : vector<16x128xf32>
    %404 = math.exp %403 : vector<16x128xf32>
    %cst_106 = arith.constant 1.000000e+00 : f32
    %405 = vector.broadcast %cst_106 : f32 to vector<16x128xf32>
    %406 = arith.addf %405, %404 : vector<16x128xf32>
    %407 = arith.divf %405, %406 : vector<16x128xf32>
    %408 = vector.extract_strided_slice %395 {offsets = [0, 256], sizes = [16, 128], strides = [1, 1]} : vector<16x512xf32> to vector<16x128xf32>
    %409 = math.tanh %408 : vector<16x128xf32>
    %410 = vector.extract_strided_slice %395 {offsets = [0, 384], sizes = [16, 128], strides = [1, 1]} : vector<16x512xf32> to vector<16x128xf32>
    %411 = arith.negf %410 : vector<16x128xf32>
    %412 = math.exp %411 : vector<16x128xf32>
    %cst_107 = arith.constant 1.000000e+00 : f32
    %413 = vector.broadcast %cst_107 : f32 to vector<16x128xf32>
    %414 = arith.addf %413, %412 : vector<16x128xf32>
    %415 = arith.divf %413, %414 : vector<16x128xf32>
    %416 = arith.mulf %407, %376 : vector<16x128xf32>
    %417 = arith.mulf %401, %409 : vector<16x128xf32>
    %418 = arith.addf %416, %417 : vector<16x128xf32>
    %419 = math.tanh %418 : vector<16x128xf32>
    %420 = arith.mulf %415, %419 : vector<16x128xf32>
    %421 = vector.broadcast %c7_i32_96 : i32 to vector<16x1xi32>
    %422 = arith.muli %19, %421 : vector<16x1xi32>
    %423 = arith.addi %16, %422 : vector<16x1xi32>
    %424 = arith.cmpi slt, %423, %13 : vector<16x1xi32>
    %425 = vector.shape_cast %424 : vector<16x1xi1> to vector<16x1xi1>
    %426 = vector.broadcast %425 : vector<16x1xi1> to vector<16x128xi1>
    %427 = arith.select %426, %418, %376 : vector<16x128xi1>, vector<16x128xf32>
    %428 = vector.shape_cast %424 : vector<16x1xi1> to vector<16x1xi1>
    %429 = vector.broadcast %428 : vector<16x1xi1> to vector<16x128xi1>
    %430 = arith.select %429, %420, %379 : vector<16x128xi1>, vector<16x128xf32>
    %c8_i32 = arith.constant 8 : i32
    %431 = vector.extract_strided_slice %430 {offsets = [0, 0], sizes = [8, 128], strides = [1, 1]} : vector<16x128xf32> to vector<8x128xf32>
    %432 = vector.extract_strided_slice %430 {offsets = [8, 0], sizes = [8, 128], strides = [1, 1]} : vector<16x128xf32> to vector<8x128xf32>
    %433 = tpu.concatenate %431, %432 in 1 : vector<8x128xf32>, vector<8x128xf32> -> vector<8x256xf32>
    %c0_108 = arith.constant 0 : index
    %c0_109 = arith.constant 0 : index
    %434 = vector.load %arg6[%c0_108, %c0_109] : memref<256x16xf32, #tpu.memory_space<vmem>>, vector<256x16xf32>
    %cst_110 = arith.constant dense<0.000000e+00> : vector<8x16xf32>
    %435 = tpu.matmul %433, %434, %cst_110 {dimension_numbers = #tpu.dot_dimension_numbers<[1], [0], [0], [1], [0, 0, 1, 1], [], []>} : vector<8x256xf32>, vector<256x16xf32>, vector<8x16xf32> -> vector<8x16xf32>
    %c0_111 = arith.constant 0 : index
    %c0_112 = arith.constant 0 : index
    %436 = vector.load %arg7[%c0_111, %c0_112] : memref<1x16xf32, #tpu.memory_space<vmem>>, vector<1x16xf32>
    %437 = vector.broadcast %436 : vector<1x16xf32> to vector<8x16xf32>
    %438 = arith.addf %435, %437 : vector<8x16xf32>
    %cst_113 = arith.constant 0.000000e+00 : f32
    %439 = vector.broadcast %cst_113 : f32 to vector<8x16xf32>
    %440 = arith.maximumf %438, %439 : vector<8x16xf32>
    %c0_114 = arith.constant 0 : index
    %c0_115 = arith.constant 0 : index
    %441 = vector.load %arg8[%c0_114, %c0_115] : memref<8x16xf32, #tpu.memory_space<vmem>>, vector<8x16xf32>
    tpu.vector_store %arg8[%c0_114, %c0_115], %440 {strides = array<i32>} : memref<8x16xf32, #tpu.memory_space<vmem>>, vector<8x16xf32>,
    return
  }
  func.func @transform_0(%arg0: i32) -> (i32, i32, i32) {
    %c0_i32 = arith.constant 0 : i32
    %c0_i32_0 = arith.constant 0 : i32
    %c0_i32_1 = arith.constant 0 : i32
    %c0_i32_2 = arith.constant 0 : i32
    return %c0_i32, %c0_i32_0, %c0_i32_1 : i32, i32, i32
  }
  func.func @transform_1(%arg0: i32) -> (i32, i32) {
    %c0_i32 = arith.constant 0 : i32
    %c0_i32_0 = arith.constant 0 : i32
    %c0_i32_1 = arith.constant 0 : i32
    return %c0_i32, %c0_i32_0 : i32, i32
  }
  func.func @transform_2(%arg0: i32) -> (i32, i32) {
    %c0_i32 = arith.constant 0 : i32
    %c0_i32_0 = arith.constant 0 : i32
    %c0_i32_1 = arith.constant 0 : i32
    return %c0_i32, %c0_i32_0 : i32, i32
  }
  func.func @transform_3(%arg0: i32) -> (i32, i32) {
    %c0_i32 = arith.constant 0 : i32
    %c0_i32_0 = arith.constant 0 : i32
    %c0_i32_1 = arith.constant 0 : i32
    return %c0_i32, %c0_i32_0 : i32, i32
  }
  func.func @transform_4(%arg0: i32) -> (i32, i32) {
    %c0_i32 = arith.constant 0 : i32
    %c0_i32_0 = arith.constant 0 : i32
    %c0_i32_1 = arith.constant 0 : i32
    return %c0_i32, %c0_i32_0 : i32, i32
  }
  func.func @transform_5(%arg0: i32) -> (i32, i32) {
    %c0_i32 = arith.constant 0 : i32
    %c0_i32_0 = arith.constant 0 : i32
    %c0_i32_1 = arith.constant 0 : i32
    return %c0_i32, %c0_i32_0 : i32, i32
  }
  func.func @transform_6(%arg0: i32) -> (i32, i32) {
    %c0_i32 = arith.constant 0 : i32
    %c0_i32_0 = arith.constant 0 : i32
    %c0_i32_1 = arith.constant 0 : i32
    return %c0_i32, %c0_i32_0 : i32, i32
  }
  func.func @transform_7(%arg0: i32) -> (i32, i32) {
    %c0_i32 = arith.constant 0 : i32
    %c0_i32_0 = arith.constant 0 : i32
    %c0_i32_1 = arith.constant 0 : i32
    return %c0_i32, %c0_i32_0 : i32, i32
  }
}

</mosaic_0001>

<llo_original>
// kernel: tpu_custom_call.1
$region0: #{tpu_custom_call.1}
  #allocation0 [shape = 'u32[]', space=smem, size = 0x4, offset = 0x4, fixed_abs, tag = 'smem constant byte address 0x4 - core index']
  #allocation1 [shape = 'u32[144,128]{1,0:T(1,128)}', space=vmem, size = 0x12000, scoped, tag = 'internal scratch']
  #allocation2 [shape = 'f32[8,8,512]{2,1,0:T(8,128)}', space=vmem, size = 0x20000, scoped, tag = 'scratch operand']
  #allocation3 [shape = 'f32[8,8,512]{2,1,0:T(8,128)}', space=vmem, size = 0x20000, scoped, tag = 'scratch operand']
  %s0 = inlined_call_operand.vmem [shape: f32[8,8,16], index: 0, kind: input, shape index: {}]
  %s1 = inlined_call_operand.vmem [shape: s32[8,1], index: 1, kind: input, shape index: {}]
  %s2 = inlined_call_operand.vmem [shape: f32[16,1024], index: 2, kind: input, shape index: {}]
  %s3 = inlined_call_operand.hbm [shape: f32[256,512], index: 3, kind: input, shape index: {}]
  %s4 = inlined_call_operand.vmem [shape: f32[1,1024], index: 4, kind: input, shape index: {}]
  %s5 = inlined_call_operand.vmem [shape: f32[256,16], index: 5, kind: input, shape index: {}]
  %s6 = inlined_call_operand.vmem [shape: f32[1,16], index: 6, kind: input, shape index: {}]
  %s7 = inlined_call_operand.hbm [shape: f32[8,16], index: 7, kind: output, shape index: {}]
  %s8 = sld [smem:[#allocation0]]
  $region42: #{tpu_custom_call.1} parent=0
    _
  %s10 = ssub.s32 1, %s8
  %s11 = scalar_select 0, %s10, %s8
  $region1: #{tpu_custom_call.1} parent=0
    #allocation4 [shape = 'u8[524288]{0}', space=vmem, size = 0x80000, scoped, tag = 'input window, operand 3, single buffered']
    #allocation5 [shape = 's32[1]{0}', space=sflag, size = 0x4, scoped, tag = 'scoped memory for tpu_custom_call.1']
    #allocation6 [shape = 's32[1]{0}', space=sflag, size = 0x4, scoped, tag = 'scoped memory for tpu_custom_call.1']
    #allocation7 [shape = 'u8[4096]{0}', space=vmem, size = 0x1000, scoped, tag = 'output window, operand 0, single buffered']
    %12 = vsyncpa [#allocation5], 0
    %13 = vsyncpa [#allocation6], 0
    // Predicated region
    $region2: #{tpu_custom_call.1} parent=1 // pred_check
      _
    $region3: #{tpu_custom_call.1} parent=1 // pred_check_branch
      %15 = sbr.rel (0) target = $region5
    $region4: #{tpu_custom_call.1} parent=1 // pred_region
      _
    $region5: #{tpu_custom_call.1} parent=1 // pred_fallthru
      _
    // Predicated region
    $region6: #{tpu_custom_call.1} parent=1 // pred_check
      _
    $region7: #{tpu_custom_call.1} parent=1 // pred_check_branch
      %17 = sbr.rel (0) target = $region9
    $region8: #{tpu_custom_call.1} parent=1 // pred_region
      _
    $region9: #{tpu_custom_call.1} parent=1 // pred_fallthru
      _
    // Predicated region
    $region10: #{tpu_custom_call.1} parent=1 // pred_check
      _
    $region11: #{tpu_custom_call.1} parent=1 // pred_check_branch
      %19 = sbr.rel (0) target = $region13
    $region12: #{tpu_custom_call.1} parent=1 // pred_region
      _
    $region13: #{tpu_custom_call.1} parent=1 // pred_fallthru
      _
    // Predicated region
    $region14: #{tpu_custom_call.1} parent=1 // pred_check
      _
    $region15: #{tpu_custom_call.1} parent=1 // pred_check_branch
      %21 = sbr.rel (0) target = $region17
    $region16: #{tpu_custom_call.1} parent=1 // pred_region
      %s23 = ssub.s32 16384, 16384
      %24 = vsyncadd [#allocation5], %s23
      %s25 = sshll.u32 [#allocation4], 4
      %s26 = int_to_ptr.vmem [resolvable:$true] %s25
      %31 = dma.hbm_to_vmem [thread:$0]  %s3, 16384, %s26, [#allocation5], 512, 512, 32
    $region17: #{tpu_custom_call.1} parent=1 // pred_fallthru
      _
    // Predicated region
    $region18: #{tpu_custom_call.1} parent=1 // pred_check
      _
    $region19: #{tpu_custom_call.1} parent=1 // pred_check_branch
      %33 = sbr.rel (0) target = $region21
    $region20: #{tpu_custom_call.1} parent=1 // pred_region
      _
    $region21: #{tpu_custom_call.1} parent=1 // pred_fallthru
      _
    // Predicated region
    $region22: #{tpu_custom_call.1} parent=1 // pred_check
      _
    $region23: #{tpu_custom_call.1} parent=1 // pred_check_branch
      %35 = sbr.rel (0) target = $region25
    $region24: #{tpu_custom_call.1} parent=1 // pred_region
      _
    $region25: #{tpu_custom_call.1} parent=1 // pred_fallthru
      _
    // Predicated region
    $region26: #{tpu_custom_call.1} parent=1 // pred_check
      _
    $region27: #{tpu_custom_call.1} parent=1 // pred_check_branch
      %37 = sbr.rel (0) target = $region29
    $region28: #{tpu_custom_call.1} parent=1 // pred_region
      _
    $region29: #{tpu_custom_call.1} parent=1 // pred_fallthru
      _
    // Predicated region
    $region30: #{tpu_custom_call.1} parent=1 // pred_check
      _
    $region31: #{tpu_custom_call.1} parent=1 // pred_check_branch
      %39 = sbr.rel (0) target = $region33
    $region32: #{tpu_custom_call.1} parent=1 // pred_region
      %40 = dma.done [#allocation5], 16384
    $region33: #{tpu_custom_call.1} parent=1 // pred_fallthru
      _
    %v41 = vld [vmem:[%s0] sm:$0xff]
    %v42 = vld [vmem:[%s0 + $0x8] sm:$0xff]
    %v43 = vld [vmem:[%s0 + $0x10] sm:$0xff]
    %v44 = vld [vmem:[%s0 + $0x18] sm:$0xff]
    %v45 = vld [vmem:[%s0 + $0x20] sm:$0xff]
    %v46 = vld [vmem:[%s0 + $0x28] sm:$0xff]
    %v47 = vld [vmem:[%s0 + $0x30] sm:$0xff]
    %v48 = vld [vmem:[%s0 + $0x38] sm:$0xff]
    %v49 = vld [vmem:[%s2] sm:$0xff]
    %v50 = vld [vmem:[%s2 + $0x8] sm:$0xff]
    %v51 = vld [vmem:[%s2 + $0x10] sm:$0xff]
    %v52 = vld [vmem:[%s2 + $0x18] sm:$0xff]
    %v53 = vld [vmem:[%s2 + $0x20] sm:$0xff]
    %v54 = vld [vmem:[%s2 + $0x28] sm:$0xff]
    %v55 = vld [vmem:[%s2 + $0x30] sm:$0xff]
    %v56 = vld [vmem:[%s2 + $0x38] sm:$0xff]
    %v57 = vld [vmem:[%s2 + $0x40] sm:$0xff]
    %v58 = vld [vmem:[%s2 + $0x48] sm:$0xff]
    %v59 = vld [vmem:[%s2 + $0x50] sm:$0xff]
    %v60 = vld [vmem:[%s2 + $0x58] sm:$0xff]
    %v61 = vld [vmem:[%s2 + $0x60] sm:$0xff]
    %v62 = vld [vmem:[%s2 + $0x68] sm:$0xff]
    %v63 = vld [vmem:[%s2 + $0x70] sm:$0xff]
    %v64 = vld [vmem:[%s2 + $0x78] sm:$0xff]
    %v65 = vld [vmem:[%s4] sm:$0xff]
    %v67 = vlaneseq
    %v68 = vshrl.u32 %v67, 7
    %v69 = vsub.s32 0, %v68
    %v70 = vrot.slane %v65, %v69
    %v71 = vlaneseq
    %v72 = vshrl.u32 %v71, 7
    %v73 = vsub.s32 1, %v72
    %v74 = vrot.slane %v65, %v73
    %v75 = vlaneseq
    %v76 = vshrl.u32 %v75, 7
    %v77 = vsub.s32 2, %v76
    %v78 = vrot.slane %v65, %v77
    %v79 = vlaneseq
    %v80 = vshrl.u32 %v79, 7
    %v81 = vsub.s32 3, %v80
    %v82 = vrot.slane %v65, %v81
    %v83 = vlaneseq
    %v84 = vshrl.u32 %v83, 7
    %v85 = vsub.s32 4, %v84
    %v86 = vrot.slane %v65, %v85
    %v87 = vlaneseq
    %v88 = vshrl.u32 %v87, 7
    %v89 = vsub.s32 5, %v88
    %v90 = vrot.slane %v65, %v89
    %v91 = vlaneseq
    %v92 = vshrl.u32 %v91, 7
    %v93 = vsub.s32 6, %v92
    %v94 = vrot.slane %v65, %v93
    %v95 = vlaneseq
    %v96 = vshrl.u32 %v95, 7
    %v97 = vsub.s32 7, %v96
    %v98 = vrot.slane %v65, %v97
    %vm107 = vcmask 130048
    %v109 = vsel %vm107, %v41, 0
    %v112 = vsel %vm107, %v42, 0
    %v115 = vsel %vm107, %v43, 0
    %v118 = vsel %vm107, %v44, 0
    %v121 = vsel %vm107, %v45, 0
    %v124 = vsel %vm107, %v46, 0
    %v127 = vsel %vm107, %v47, 0
    %v130 = vsel %vm107, %v48, 0
    %132 = vmatprep.subr.mxu0 %v50
    %133 = vmatpush1.msra.mxu0 %v49
    %134 = vmatprep.subr.mxu0 %v58
    %135 = vmatpush1.msra.mxu0 %v57
    %136 = vmatprep.subr.mxu0 0.0
    %137 = vmatpush1.msra.mxu0 0.0
    %138 = vmatprep.subr.mxu0 0.0
    %139 = vmatpush1.msra.mxu0 0.0
    %140 = vmatprep.subr.mxu0 0.0
    %141 = vmatpush1.msra.mxu0 0.0
    %142 = vmatprep.subr.mxu0 0.0
    %143 = vmatpush1.msra.mxu0 0.0
    %144 = vmatprep.subr.mxu0 0.0
    %145 = vmatpush1.msra.mxu0 0.0
    %146 = vmatprep.subr.mxu0 0.0
    %147 = vmatpush1.msra.mxu0 0.0
    %148 = vmatprep.subr.mxu0 0.0
    %149 = vmatpush1.msra.mxu0 0.0
    %150 = vmatprep.subr.mxu0 0.0
    %151 = vmatpush1.msra.mxu0 0.0
    %152 = vmatprep.subr.mxu0 0.0
    %153 = vmatpush1.msra.mxu0 0.0
    %154 = vmatprep.subr.mxu0 0.0
    %155 = vmatpush1.msra.mxu0 0.0
    %156 = vmatprep.subr.mxu0 0.0
    %157 = vmatpush1.msra.mxu0 0.0
    %158 = vmatprep.subr.mxu0 0.0
    %159 = vmatpush1.msra.mxu0 0.0
    %160 = vmatprep.subr.mxu0 0.0
    %161 = vmatpush1.msra.mxu0 0.0
    %162 = vmatprep.subr.mxu0 0.0
    %163 = vmatpush1.msra.mxu0 0.0
    %164 = vmatprep.subr.mxu0 0.0
    %165 = vmatpush1.msra.mxu0 0.0
    %166 = vmatprep.subr.mxu0 0.0
    %167 = vmatpush1.msra.mxu0 0.0
    %168 = vmatprep.subr.mxu0 0.0
    %169 = vmatpush1.msra.mxu0 0.0
    %170 = vmatprep.subr.mxu0 0.0
    %171 = vmatpush1.msra.mxu0 0.0
    %172 = vmatprep.subr.mxu0 0.0
    %173 = vmatpush1.msra.mxu0 0.0
    %174 = vmatprep.subr.mxu0 0.0
    %175 = vmatpush1.msra.mxu0 0.0
    %176 = vmatprep.subr.mxu0 0.0
    %177 = vmatpush1.msra.mxu0 0.0
    %178 = vmatprep.subr.mxu0 0.0
    %179 = vmatpush1.msra.mxu0 0.0
    %180 = vmatprep.subr.mxu0 0.0
    %181 = vmatpush1.msra.mxu0 0.0
    %182 = vmatprep.subr.mxu0 0.0
    %183 = vmatpush1.msra.mxu0 0.0
    %184 = vmatprep.subr.mxu0 0.0
    %185 = vmatpush1.msra.mxu0 0.0
    %186 = vmatprep.subr.mxu0 0.0
    %187 = vmatpush1.msra.mxu0 0.0
    %188 = vmatprep.subr.mxu0 0.0
    %189 = vmatpush1.msra.mxu0 0.0
    %190 = vmatprep.subr.mxu0 0.0
    %191 = vmatpush1.msra.mxu0 0.0
    %192 = vmatprep.subr.mxu0 0.0
    %193 = vmatpush1.msra.mxu0 0.0
    %194 = vmatprep.subr.mxu0 0.0
    %195 = vmatpush1.msra.mxu0 0.0
    %196 = vmatprep.mubr.f32.mxu0 0.0
    %197 = vmatmul.mubr.f32.gmra.mrb[0].mxu0 %v109
    %v198 = vpop.f32.mrb[0].mxu0
    %v199 = vadd.f32 %v70, %v198
    %v200 = vpop.f32.mrb[0].mxu0
    %v201 = vadd.f32 %v74, %v200
    %202 = vmatprep.mubr.f32.mxu0 0.0
    %203 = vmatmul.mubr.f32.gmra.mrb[0].mxu0 %v112
    %v204 = vpop.f32.mrb[0].mxu0
    %v205 = vadd.f32 %v70, %v204
    %v206 = vpop.f32.mrb[0].mxu0
    %v207 = vadd.f32 %v74, %v206
    %208 = vmatprep.mubr.f32.mxu0 0.0
    %209 = vmatmul.mubr.f32.gmra.mrb[0].mxu0 %v115
    %v210 = vpop.f32.mrb[0].mxu0
    %v211 = vadd.f32 %v70, %v210
    %v212 = vpop.f32.mrb[0].mxu0
    %v213 = vadd.f32 %v74, %v212
    %214 = vmatprep.mubr.f32.mxu0 0.0
    %215 = vmatmul.mubr.f32.gmra.mrb[0].mxu0 %v118
    %v216 = vpop.f32.mrb[0].mxu0
    %v217 = vadd.f32 %v70, %v216
    %v218 = vpop.f32.mrb[0].mxu0
    %v219 = vadd.f32 %v74, %v218
    %220 = vmatprep.mubr.f32.mxu0 0.0
    %221 = vmatmul.mubr.f32.gmra.mrb[0].mxu0 %v121
    %v222 = vpop.f32.mrb[0].mxu0
    %v223 = vadd.f32 %v70, %v222
    %v224 = vpop.f32.mrb[0].mxu0
    %v225 = vadd.f32 %v74, %v224
    %226 = vmatprep.mubr.f32.mxu0 0.0
    %227 = vmatmul.mubr.f32.gmra.mrb[0].mxu0 %v124
    %v228 = vpop.f32.mrb[0].mxu0
    %v229 = vadd.f32 %v70, %v228
    %v230 = vpop.f32.mrb[0].mxu0
    %v231 = vadd.f32 %v74, %v230
    %232 = vmatprep.mubr.f32.mxu0 0.0
    %233 = vmatmul.mubr.f32.gmra.mrb[0].mxu0 %v127
    %v234 = vpop.f32.mrb[0].mxu0
    %v235 = vadd.f32 %v70, %v234
    %v236 = vpop.f32.mrb[0].mxu0
    %v237 = vadd.f32 %v74, %v236
    %238 = vmatprep.mubr.f32.mxu0 0.0
    %239 = vmatmul.mubr.f32.gmra.mrb[0].mxu0 %v130
    %v240 = vpop.f32.mrb[0].mxu0
    %v241 = vadd.f32 %v70, %v240
    %v242 = vpop.f32.mrb[0].mxu0
    %v243 = vadd.f32 %v74, %v242
    %244 = vdwg.mxu0
    %245 = vmatprep.subr.mxu0 %v52
    %246 = vmatpush1.msra.mxu0 %v51
    %247 = vmatprep.subr.mxu0 %v60
    %248 = vmatpush1.msra.mxu0 %v59
    %249 = vmatprep.subr.mxu0 0.0
    %250 = vmatpush1.msra.mxu0 0.0
    %251 = vmatprep.subr.mxu0 0.0
    %252 = vmatpush1.msra.mxu0 0.0
    %253 = vmatprep.subr.mxu0 0.0
    %254 = vmatpush1.msra.mxu0 0.0
    %255 = vmatprep.subr.mxu0 0.0
    %256 = vmatpush1.msra.mxu0 0.0
    %257 = vmatprep.subr.mxu0 0.0
    %258 = vmatpush1.msra.mxu0 0.0
    %259 = vmatprep.subr.mxu0 0.0
    %260 = vmatpush1.msra.mxu0 0.0
    %261 = vmatprep.subr.mxu0 0.0
    %262 = vmatpush1.msra.mxu0 0.0
    %263 = vmatprep.subr.mxu0 0.0
    %264 = vmatpush1.msra.mxu0 0.0
    %265 = vmatprep.subr.mxu0 0.0
    %266 = vmatpush1.msra.mxu0 0.0
    %267 = vmatprep.subr.mxu0 0.0
    %268 = vmatpush1.msra.mxu0 0.0
    %269 = vmatprep.subr.mxu0 0.0
    %270 = vmatpush1.msra.mxu0 0.0
    %271 = vmatprep.subr.mxu0 0.0
    %272 = vmatpush1.msra.mxu0 0.0
    %273 = vmatprep.subr.mxu0 0.0
    %274 = vmatpush1.msra.mxu0 0.0
    %275 = vmatprep.subr.mxu0 0.0
    %276 = vmatpush1.msra.mxu0 0.0
    %277 = vmatprep.subr.mxu0 0.0
    %278 = vmatpush1.msra.mxu0 0.0
    %279 = vmatprep.subr.mxu0 0.0
    %280 = vmatpush1.msra.mxu0 0.0
    %281 = vmatprep.subr.mxu0 0.0
    %282 = vmatpush1.msra.mxu0 0.0
    %283 = vmatprep.subr.mxu0 0.0
    %284 = vmatpush1.msra.mxu0 0.0
    %285 = vmatprep.subr.mxu0 0.0
    %286 = vmatpush1.msra.mxu0 0.0
    %287 = vmatprep.subr.mxu0 0.0
    %288 = vmatpush1.msra.mxu0 0.0
    %289 = vmatprep.subr.mxu0 0.0
    %290 = vmatpush1.msra.mxu0 0.0
    %291 = vmatprep.subr.mxu0 0.0
    %292 = vmatpush1.msra.mxu0 0.0
    %293 = vmatprep.subr.mxu0 0.0
    %294 = vmatpush1.msra.mxu0 0.0
    %295 = vmatprep.subr.mxu0 0.0
    %296 = vmatpush1.msra.mxu0 0.0
    %297 = vmatprep.subr.mxu0 0.0
    %298 = vmatpush1.msra.mxu0 0.0
    %299 = vmatprep.subr.mxu0 0.0
    %300 = vmatpush1.msra.mxu0 0.0
    %301 = vmatprep.subr.mxu0 0.0
    %302 = vmatpush1.msra.mxu0 0.0
    %303 = vmatprep.subr.mxu0 0.0
    %304 = vmatpush1.msra.mxu0 0.0
    %305 = vmatprep.subr.mxu0 0.0
    %306 = vmatpush1.msra.mxu0 0.0
    %307 = vmatprep.subr.mxu0 0.0
    %308 = vmatpush1.msra.mxu0 0.0
    %309 = vmatprep.mubr.f32.mxu0 0.0
    %310 = vmatmul.mubr.f32.gmra.mrb[0].mxu0 %v109
    %v311 = vpop.f32.mrb[0].mxu0
    %v312 = vadd.f32 %v78, %v311
    %v313 = vpop.f32.mrb[0].mxu0
    %v314 = vadd.f32 %v82, %v313
    %315 = vmatprep.mubr.f32.mxu0 0.0
    %316 = vmatmul.mubr.f32.gmra.mrb[0].mxu0 %v112
    %v317 = vpop.f32.mrb[0].mxu0
    %v318 = vadd.f32 %v78, %v317
    %v319 = vpop.f32.mrb[0].mxu0
    %v320 = vadd.f32 %v82, %v319
    %321 = vmatprep.mubr.f32.mxu0 0.0
    %322 = vmatmul.mubr.f32.gmra.mrb[0].mxu0 %v115
    %v323 = vpop.f32.mrb[0].mxu0
    %v324 = vadd.f32 %v78, %v323
    %v325 = vpop.f32.mrb[0].mxu0
    %v326 = vadd.f32 %v82, %v325
    %327 = vmatprep.mubr.f32.mxu0 0.0
    %328 = vmatmul.mubr.f32.gmra.mrb[0].mxu0 %v118
    %v329 = vpop.f32.mrb[0].mxu0
    %v330 = vadd.f32 %v78, %v329
    %v331 = vpop.f32.mrb[0].mxu0
    %v332 = vadd.f32 %v82, %v331
    %333 = vmatprep.mubr.f32.mxu0 0.0
    %334 = vmatmul.mubr.f32.gmra.mrb[0].mxu0 %v121
    %v335 = vpop.f32.mrb[0].mxu0
    %v336 = vadd.f32 %v78, %v335
    %v337 = vpop.f32.mrb[0].mxu0
    %v338 = vadd.f32 %v82, %v337
    %339 = vmatprep.mubr.f32.mxu0 0.0
    %340 = vmatmul.mubr.f32.gmra.mrb[0].mxu0 %v124
    %v341 = vpop.f32.mrb[0].mxu0
    %v342 = vadd.f32 %v78, %v341
    %v343 = vpop.f32.mrb[0].mxu0
    %v344 = vadd.f32 %v82, %v343
    %345 = vmatprep.mubr.f32.mxu0 0.0
    %346 = vmatmul.mubr.f32.gmra.mrb[0].mxu0 %v127
    %v347 = vpop.f32.mrb[0].mxu0
    %v348 = vadd.f32 %v78, %v347
    %v349 = vpop.f32.mrb[0].mxu0
    %v350 = vadd.f32 %v82, %v349
    %351 = vmatprep.mubr.f32.mxu0 0.0
    %352 = vmatmul.mubr.f32.gmra.mrb[0].mxu0 %v130
    %v353 = vpop.f32.mrb[0].mxu0
    %v354 = vadd.f32 %v78, %v353
    %v355 = vpop.f32.mrb[0].mxu0
    %v356 = vadd.f32 %v82, %v355
    %357 = vdwg.mxu0
    %358 = vmatprep.subr.mxu0 %v54
    %359 = vmatpush1.msra.mxu0 %v53
    %360 = vmatprep.subr.mxu0 %v62
    %361 = vmatpush1.msra.mxu0 %v61
    %362 = vmatprep.subr.mxu0 0.0
    %363 = vmatpush1.msra.mxu0 0.0
    %364 = vmatprep.subr.mxu0 0.0
    %365 = vmatpush1.msra.mxu0 0.0
    %366 = vmatprep.subr.mxu0 0.0
    %367 = vmatpush1.msra.mxu0 0.0
    %368 = vmatprep.subr.mxu0 0.0
    %369 = vmatpush1.msra.mxu0 0.0
    %370 = vmatprep.subr.mxu0 0.0
    %371 = vmatpush1.msra.mxu0 0.0
    %372 = vmatprep.subr.mxu0 0.0
    %373 = vmatpush1.msra.mxu0 0.0
    %374 = vmatprep.subr.mxu0 0.0
    %375 = vmatpush1.msra.mxu0 0.0
    %376 = vmatprep.subr.mxu0 0.0
    %377 = vmatpush1.msra.mxu0 0.0
    %378 = vmatprep.subr.mxu0 0.0
    %379 = vmatpush1.msra.mxu0 0.0
    %380 = vmatprep.subr.mxu0 0.0
    %381 = vmatpush1.msra.mxu0 0.0
    %382 = vmatprep.subr.mxu0 0.0
    %383 = vmatpush1.msra.mxu0 0.0
    %384 = vmatprep.subr.mxu0 0.0
    %385 = vmatpush1.msra.mxu0 0.0
    %386 = vmatprep.subr.mxu0 0.0
    %387 = vmatpush1.msra.mxu0 0.0
    %388 = vmatprep.subr.mxu0 0.0
    %389 = vmatpush1.msra.mxu0 0.0
    %390 = vmatprep.subr.mxu0 0.0
    %391 = vmatpush1.msra.mxu0 0.0
    %392 = vmatprep.subr.mxu0 0.0
    %393 = vmatpush1.msra.mxu0 0.0
    %394 = vmatprep.subr.mxu0 0.0
    %395 = vmatpush1.msra.mxu0 0.0
    %396 = vmatprep.subr.mxu0 0.0
    %397 = vmatpush1.msra.mxu0 0.0
    %398 = vmatprep.subr.mxu0 0.0
    %399 = vmatpush1.msra.mxu0 0.0
    %400 = vmatprep.subr.mxu0 0.0
    %401 = vmatpush1.msra.mxu0 0.0
    %402 = vmatprep.subr.mxu0 0.0
    %403 = vmatpush1.msra.mxu0 0.0
    %404 = vmatprep.subr.mxu0 0.0
    %405 = vmatpush1.msra.mxu0 0.0
    %406 = vmatprep.subr.mxu0 0.0
    %407 = vmatpush1.msra.mxu0 0.0
    %408 = vmatprep.subr.mxu0 0.0
    %409 = vmatpush1.msra.mxu0 0.0
    %410 = vmatprep.subr.mxu0 0.0
    %411 = vmatpush1.msra.mxu0 0.0
    %412 = vmatprep.subr.mxu0 0.0
    %413 = vmatpush1.msra.mxu0 0.0
    %414 = vmatprep.subr.mxu0 0.0
    %415 = vmatpush1.msra.mxu0 0.0
    %416 = vmatprep.subr.mxu0 0.0
    %417 = vmatpush1.msra.mxu0 0.0
    %418 = vmatprep.subr.mxu0 0.0
    %419 = vmatpush1.msra.mxu0 0.0
    %420 = vmatprep.subr.mxu0 0.0
    %421 = vmatpush1.msra.mxu0 0.0
    %422 = vmatprep.mubr.f32.mxu0 0.0
    %423 = vmatmul.mubr.f32.gmra.mrb[0].mxu0 %v109
    %v424 = vpop.f32.mrb[0].mxu0
    %v425 = vadd.f32 %v86, %v424
    %v426 = vpop.f32.mrb[0].mxu0
    %v427 = vadd.f32 %v90, %v426
    %428 = vmatprep.mubr.f32.mxu0 0.0
    %429 = vmatmul.mubr.f32.gmra.mrb[0].mxu0 %v112
    %v430 = vpop.f32.mrb[0].mxu0
    %v431 = vadd.f32 %v86, %v430
    %v432 = vpop.f32.mrb[0].mxu0
    %v433 = vadd.f32 %v90, %v432
    %434 = vmatprep.mubr.f32.mxu0 0.0
    %435 = vmatmul.mubr.f32.gmra.mrb[0].mxu0 %v115
    %v436 = vpop.f32.mrb[0].mxu0
    %v437 = vadd.f32 %v86, %v436
    %v438 = vpop.f32.mrb[0].mxu0
    %v439 = vadd.f32 %v90, %v438
    %440 = vmatprep.mubr.f32.mxu0 0.0
    %441 = vmatmul.mubr.f32.gmra.mrb[0].mxu0 %v118
    %v442 = vpop.f32.mrb[0].mxu0
    %v443 = vadd.f32 %v86, %v442
    %v444 = vpop.f32.mrb[0].mxu0
    %v445 = vadd.f32 %v90, %v444
    %446 = vmatprep.mubr.f32.mxu0 0.0
    %447 = vmatmul.mubr.f32.gmra.mrb[0].mxu0 %v121
    %v448 = vpop.f32.mrb[0].mxu0
    %v449 = vadd.f32 %v86, %v448
    %v450 = vpop.f32.mrb[0].mxu0
    %v451 = vadd.f32 %v90, %v450
    %452 = vmatprep.mubr.f32.mxu0 0.0
    %453 = vmatmul.mubr.f32.gmra.mrb[0].mxu0 %v124
    %v454 = vpop.f32.mrb[0].mxu0
    %v455 = vadd.f32 %v86, %v454
    %v456 = vpop.f32.mrb[0].mxu0
    %v457 = vadd.f32 %v90, %v456
    %458 = vmatprep.mubr.f32.mxu0 0.0
    %459 = vmatmul.mubr.f32.gmra.mrb[0].mxu0 %v127
    %v460 = vpop.f32.mrb[0].mxu0
    %v461 = vadd.f32 %v86, %v460
    %v462 = vpop.f32.mrb[0].mxu0
    %v463 = vadd.f32 %v90, %v462
    %464 = vmatprep.mubr.f32.mxu0 0.0
    %465 = vmatmul.mubr.f32.gmra.mrb[0].mxu0 %v130
    %v466 = vpop.f32.mrb[0].mxu0
    %v467 = vadd.f32 %v86, %v466
    %v468 = vpop.f32.mrb[0].mxu0
    %v469 = vadd.f32 %v90, %v468
    %470 = vdwg.mxu0
    %471 = vmatprep.subr.mxu0 %v56
    %472 = vmatpush1.msra.mxu0 %v55
    %473 = vmatprep.subr.mxu0 %v64
    %474 = vmatpush1.msra.mxu0 %v63
    %475 = vmatprep.subr.mxu0 0.0
    %476 = vmatpush1.msra.mxu0 0.0
    %477 = vmatprep.subr.mxu0 0.0
    %478 = vmatpush1.msra.mxu0 0.0
    %479 = vmatprep.subr.mxu0 0.0
    %480 = vmatpush1.msra.mxu0 0.0
    %481 = vmatprep.subr.mxu0 0.0
    %482 = vmatpush1.msra.mxu0 0.0
    %483 = vmatprep.subr.mxu0 0.0
    %484 = vmatpush1.msra.mxu0 0.0
    %485 = vmatprep.subr.mxu0 0.0
    %486 = vmatpush1.msra.mxu0 0.0
    %487 = vmatprep.subr.mxu0 0.0
    %488 = vmatpush1.msra.mxu0 0.0
    %489 = vmatprep.subr.mxu0 0.0
    %490 = vmatpush1.msra.mxu0 0.0
    %491 = vmatprep.subr.mxu0 0.0
    %492 = vmatpush1.msra.mxu0 0.0
    %493 = vmatprep.subr.mxu0 0.0
    %494 = vmatpush1.msra.mxu0 0.0
    %495 = vmatprep.subr.mxu0 0.0
    %496 = vmatpush1.msra.mxu0 0.0
    %497 = vmatprep.subr.mxu0 0.0
    %498 = vmatpush1.msra.mxu0 0.0
    %499 = vmatprep.subr.mxu0 0.0
    %500 = vmatpush1.msra.mxu0 0.0
    %501 = vmatprep.subr.mxu0 0.0
    %502 = vmatpush1.msra.mxu0 0.0
    %503 = vmatprep.subr.mxu0 0.0
    %504 = vmatpush1.msra.mxu0 0.0
    %505 = vmatprep.subr.mxu0 0.0
    %506 = vmatpush1.msra.mxu0 0.0
    %507 = vmatprep.subr.mxu0 0.0
    %508 = vmatpush1.msra.mxu0 0.0
    %509 = vmatprep.subr.mxu0 0.0
    %510 = vmatpush1.msra.mxu0 0.0
    %511 = vmatprep.subr.mxu0 0.0
    %512 = vmatpush1.msra.mxu0 0.0
    %513 = vmatprep.subr.mxu0 0.0
    %514 = vmatpush1.msra.mxu0 0.0
    %515 = vmatprep.subr.mxu0 0.0
    %516 = vmatpush1.msra.mxu0 0.0
    %517 = vmatprep.subr.mxu0 0.0
    %518 = vmatpush1.msra.mxu0 0.0
    %519 = vmatprep.subr.mxu0 0.0
    %520 = vmatpush1.msra.mxu0 0.0
    %521 = vmatprep.subr.mxu0 0.0
    %522 = vmatpush1.msra.mxu0 0.0
    %523 = vmatprep.subr.mxu0 0.0
    %524 = vmatpush1.msra.mxu0 0.0
    %525 = vmatprep.subr.mxu0 0.0
    %526 = vmatpush1.msra.mxu0 0.0
    %527 = vmatprep.subr.mxu0 0.0
    %528 = vmatpush1.msra.mxu0 0.0
    %529 = vmatprep.subr.mxu0 0.0
    %530 = vmatpush1.msra.mxu0 0.0
    %531 = vmatprep.subr.mxu0 0.0
    %532 = vmatpush1.msra.mxu0 0.0
    %533 = vmatprep.subr.mxu0 0.0
    %534 = vmatpush1.msra.mxu0 0.0
    %535 = vmatprep.mubr.f32.mxu0 0.0
    %536 = vmatmul.mubr.f32.gmra.mrb[0].mxu0 %v109
    %v537 = vpop.f32.mrb[0].mxu0
    %v538 = vadd.f32 %v94, %v537
    %v539 = vpop.f32.mrb[0].mxu0
    %v540 = vadd.f32 %v98, %v539
    %541 = vmatprep.mubr.f32.mxu0 0.0
    %542 = vmatmul.mubr.f32.gmra.mrb[0].mxu0 %v112
    %v543 = vpop.f32.mrb[0].mxu0
    %v544 = vadd.f32 %v94, %v543
    %v545 = vpop.f32.mrb[0].mxu0
    %v546 = vadd.f32 %v98, %v545
    %547 = vmatprep.mubr.f32.mxu0 0.0
    %548 = vmatmul.mubr.f32.gmra.mrb[0].mxu0 %v115
    %v549 = vpop.f32.mrb[0].mxu0
    %v550 = vadd.f32 %v94, %v549
    %v551 = vpop.f32.mrb[0].mxu0
    %v552 = vadd.f32 %v98, %v551
    %553 = vmatprep.mubr.f32.mxu0 0.0
    %554 = vmatmul.mubr.f32.gmra.mrb[0].mxu0 %v118
    %v555 = vpop.f32.mrb[0].mxu0
    %v556 = vadd.f32 %v94, %v555
    %v557 = vpop.f32.mrb[0].mxu0
    %v558 = vadd.f32 %v98, %v557
    %559 = vmatprep.mubr.f32.mxu0 0.0
    %560 = vmatmul.mubr.f32.gmra.mrb[0].mxu0 %v121
    %v561 = vpop.f32.mrb[0].mxu0
    %v562 = vadd.f32 %v94, %v561
    %v563 = vpop.f32.mrb[0].mxu0
    %v564 = vadd.f32 %v98, %v563
    %565 = vmatprep.mubr.f32.mxu0 0.0
    %566 = vmatmul.mubr.f32.gmra.mrb[0].mxu0 %v124
    %v567 = vpop.f32.mrb[0].mxu0
    %v568 = vadd.f32 %v94, %v567
    %v569 = vpop.f32.mrb[0].mxu0
    %v570 = vadd.f32 %v98, %v569
    %571 = vmatprep.mubr.f32.mxu0 0.0
    %572 = vmatmul.mubr.f32.gmra.mrb[0].mxu0 %v127
    %v573 = vpop.f32.mrb[0].mxu0
    %v574 = vadd.f32 %v94, %v573
    %v575 = vpop.f32.mrb[0].mxu0
    %v576 = vadd.f32 %v98, %v575
    %577 = vmatprep.mubr.f32.mxu0 0.0
    %578 = vmatmul.mubr.f32.gmra.mrb[0].mxu0 %v130
    %v579 = vpop.f32.mrb[0].mxu0
    %v580 = vadd.f32 %v94, %v579
    %v581 = vpop.f32.mrb[0].mxu0
    %v582 = vadd.f32 %v98, %v581
    %583 = vdwg.mxu0
    %584 = vst [vmem:[#allocation2] sm:$0xff] %v199
    %585 = vst [vmem:[#allocation2 + $0x8] sm:$0xff] %v201
    %586 = vst [vmem:[#allocation2 + $0x10] sm:$0xff] %v312
    %587 = vst [vmem:[#allocation2 + $0x18] sm:$0xff] %v314
    %588 = vst [vmem:[#allocation2 + $0x20] sm:$0xff] %v205
    %589 = vst [vmem:[#allocation2 + $0x28] sm:$0xff] %v207
    %590 = vst [vmem:[#allocation2 + $0x30] sm:$0xff] %v318
    %591 = vst [vmem:[#allocation2 + $0x38] sm:$0xff] %v320
    %592 = vst [vmem:[#allocation2 + $0x40] sm:$0xff] %v211
    %593 = vst [vmem:[#allocation2 + $0x48] sm:$0xff] %v213
    %594 = vst [vmem:[#allocation2 + $0x50] sm:$0xff] %v324
    %595 = vst [vmem:[#allocation2 + $0x58] sm:$0xff] %v326
    %596 = vst [vmem:[#allocation2 + $0x60] sm:$0xff] %v217
    %597 = vst [vmem:[#allocation2 + $0x68] sm:$0xff] %v219
    %598 = vst [vmem:[#allocation2 + $0x70] sm:$0xff] %v330
    %599 = vst [vmem:[#allocation2 + $0x78] sm:$0xff] %v332
    %600 = vst [vmem:[#allocation2 + $0x80] sm:$0xff] %v223
    %601 = vst [vmem:[#allocation2 + $0x88] sm:$0xff] %v225
    %602 = vst [vmem:[#allocation2 + $0x90] sm:$0xff] %v336
    %603 = vst [vmem:[#allocation2 + $0x98] sm:$0xff] %v338
    %604 = vst [vmem:[#allocation2 + $0xa0] sm:$0xff] %v229
    %605 = vst [vmem:[#allocation2 + $0xa8] sm:$0xff] %v231
    %606 = vst [vmem:[#allocation2 + $0xb0] sm:$0xff] %v342
    %607 = vst [vmem:[#allocation2 + $0xb8] sm:$0xff] %v344
    %608 = vst [vmem:[#allocation2 + $0xc0] sm:$0xff] %v235
    %609 = vst [vmem:[#allocation2 + $0xc8] sm:$0xff] %v237
    %610 = vst [vmem:[#allocation2 + $0xd0] sm:$0xff] %v348
    %611 = vst [vmem:[#allocation2 + $0xd8] sm:$0xff] %v350
    %612 = vst [vmem:[#allocation2 + $0xe0] sm:$0xff] %v241
    %613 = vst [vmem:[#allocation2 + $0xe8] sm:$0xff] %v243
    %614 = vst [vmem:[#allocation2 + $0xf0] sm:$0xff] %v354
    %615 = vst [vmem:[#allocation2 + $0xf8] sm:$0xff] %v356
    %616 = vst [vmem:[#allocation3] sm:$0xff] %v425
    %617 = vst [vmem:[#allocation3 + $0x8] sm:$0xff] %v427
    %618 = vst [vmem:[#allocation3 + $0x10] sm:$0xff] %v538
    %619 = vst [vmem:[#allocation3 + $0x18] sm:$0xff] %v540
    %620 = vst [vmem:[#allocation3 + $0x20] sm:$0xff] %v431
    %621 = vst [vmem:[#allocation3 + $0x28] sm:$0xff] %v433
    %622 = vst [vmem:[#allocation3 + $0x30] sm:$0xff] %v544
    %623 = vst [vmem:[#allocation3 + $0x38] sm:$0xff] %v546
    %624 = vst [vmem:[#allocation3 + $0x40] sm:$0xff] %v437
    %625 = vst [vmem:[#allocation3 + $0x48] sm:$0xff] %v439
    %626 = vst [vmem:[#allocation3 + $0x50] sm:$0xff] %v550
    %627 = vst [vmem:[#allocation3 + $0x58] sm:$0xff] %v552
    %628 = vst [vmem:[#allocation3 + $0x60] sm:$0xff] %v443
    %629 = vst [vmem:[#allocation3 + $0x68] sm:$0xff] %v445
    %630 = vst [vmem:[#allocation3 + $0x70] sm:$0xff] %v556
    %631 = vst [vmem:[#allocation3 + $0x78] sm:$0xff] %v558
    %632 = vst [vmem:[#allocation3 + $0x80] sm:$0xff] %v449
    %633 = vst [vmem:[#allocation3 + $0x88] sm:$0xff] %v451
    %634 = vst [vmem:[#allocation3 + $0x90] sm:$0xff] %v562
    %635 = vst [vmem:[#allocation3 + $0x98] sm:$0xff] %v564
    %636 = vst [vmem:[#allocation3 + $0xa0] sm:$0xff] %v455
    %637 = vst [vmem:[#allocation3 + $0xa8] sm:$0xff] %v457
    %638 = vst [vmem:[#allocation3 + $0xb0] sm:$0xff] %v568
    %639 = vst [vmem:[#allocation3 + $0xb8] sm:$0xff] %v570
    %640 = vst [vmem:[#allocation3 + $0xc0] sm:$0xff] %v461
    %641 = vst [vmem:[#allocation3 + $0xc8] sm:$0xff] %v463
    %642 = vst [vmem:[#allocation3 + $0xd0] sm:$0xff] %v574
    %643 = vst [vmem:[#allocation3 + $0xd8] sm:$0xff] %v576
    %644 = vst [vmem:[#allocation3 + $0xe0] sm:$0xff] %v467
    %645 = vst [vmem:[#allocation3 + $0xe8] sm:$0xff] %v469
    %646 = vst [vmem:[#allocation3 + $0xf0] sm:$0xff] %v580
    %647 = vst [vmem:[#allocation3 + $0xf8] sm:$0xff] %v582
    %v648 = vld [vmem:[%s1] sm:$0xff]
    %v649 = vld [vmem:[#allocation4] sm:$0xff]
    %v650 = vld [vmem:[#allocation4 + $0x8] sm:$0xff]
    %v651 = vld [vmem:[#allocation4 + $0x10] sm:$0xff]
    %v652 = vld [vmem:[#allocation4 + $0x18] sm:$0xff]
    %v653 = vld [vmem:[#allocation4 + $0x20] sm:$0xff]
    %v654 = vld [vmem:[#allocation4 + $0x28] sm:$0xff]
    %v655 = vld [vmem:[#allocation4 + $0x30] sm:$0xff]
    %v656 = vld [vmem:[#allocation4 + $0x38] sm:$0xff]
    %v657 = vld [vmem:[#allocation4 + $0x40] sm:$0xff]
    %v658 = vld [vmem:[#allocation4 + $0x48] sm:$0xff]
    %v659 = vld [vmem:[#allocation4 + $0x50] sm:$0xff]
    %v660 = vld [vmem:[#allocation4 + $0x58] sm:$0xff]
    %v661 = vld [vmem:[#allocation4 + $0x60] sm:$0xff]
    %v662 = vld [vmem:[#allocation4 + $0x68] sm:$0xff]
    %v663 = vld [vmem:[#allocation4 + $0x70] sm:$0xff]
    %v664 = vld [vmem:[#allocation4 + $0x78] sm:$0xff]
    %v665 = vld [vmem:[#allocation4 + $0x80] sm:$0xff]
    %v666 = vld [vmem:[#allocation4 + $0x88] sm:$0xff]
    %v667 = vld [vmem:[#allocation4 + $0x90] sm:$0xff]
    %v668 = vld [vmem:[#allocation4 + $0x98] sm:$0xff]
    %v669 = vld [vmem:[#allocation4 + $0xa0] sm:$0xff]
    %v670 = vld [vmem:[#allocation4 + $0xa8] sm:$0xff]
    %v671 = vld [vmem:[#allocation4 + $0xb0] sm:$0xff]
    %v672 = vld [vmem:[#allocation4 + $0xb8] sm:$0xff]
    %v673 = vld [vmem:[#allocation4 + $0xc0] sm:$0xff]
    %v674 = vld [vmem:[#allocation4 + $0xc8] sm:$0xff]
    %v675 = vld [vmem:[#allocation4 + $0xd0] sm:$0xff]
    %v676 = vld [vmem:[#allocation4 + $0xd8] sm:$0xff]
    %v677 = vld [vmem:[#allocation4 + $0xe0] sm:$0xff]
    %v678 = vld [vmem:[#allocation4 + $0xe8] sm:$0xff]
    %v679 = vld [vmem:[#allocation4 + $0xf0] sm:$0xff]
    %v680 = vld [vmem:[#allocation4 + $0xf8] sm:$0xff]
    %v681 = vld [vmem:[#allocation4 + $0x100] sm:$0xff]
    %v682 = vld [vmem:[#allocation4 + $0x108] sm:$0xff]
    %v683 = vld [vmem:[#allocation4 + $0x110] sm:$0xff]
    %v684 = vld [vmem:[#allocation4 + $0x118] sm:$0xff]
    %v685 = vld [vmem:[#allocation4 + $0x120] sm:$0xff]
    %v686 = vld [vmem:[#allocation4 + $0x128] sm:$0xff]
    %v687 = vld [vmem:[#allocation4 + $0x130] sm:$0xff]
    %v688 = vld [vmem:[#allocation4 + $0x138] sm:$0xff]
    %v689 = vld [vmem:[#allocation4 + $0x140] sm:$0xff]
    %v690 = vld [vmem:[#allocation4 + $0x148] sm:$0xff]
    %v691 = vld [vmem:[#allocation4 + $0x150] sm:$0xff]
    %v692 = vld [vmem:[#allocation4 + $0x158] sm:$0xff]
    %v693 = vld [vmem:[#allocation4 + $0x160] sm:$0xff]
    %v694 = vld [vmem:[#allocation4 + $0x168] sm:$0xff]
    %v695 = vld [vmem:[#allocation4 + $0x170] sm:$0xff]
    %v696 = vld [vmem:[#allocation4 + $0x178] sm:$0xff]
    %v697 = vld [vmem:[#allocation4 + $0x180] sm:$0xff]
    %v698 = vld [vmem:[#allocation4 + $0x188] sm:$0xff]
    %v699 = vld [vmem:[#allocation4 + $0x190] sm:$0xff]
    %v700 = vld [vmem:[#allocation4 + $0x198] sm:$0xff]
    %v701 = vld [vmem:[#allocation4 + $0x1a0] sm:$0xff]
    %v702 = vld [vmem:[#allocation4 + $0x1a8] sm:$0xff]
    %v703 = vld [vmem:[#allocation4 + $0x1b0] sm:$0xff]
    %v704 = vld [vmem:[#allocation4 + $0x1b8] sm:$0xff]
    %v705 = vld [vmem:[#allocation4 + $0x1c0] sm:$0xff]
    %v706 = vld [vmem:[#allocation4 + $0x1c8] sm:$0xff]
    %v707 = vld [vmem:[#allocation4 + $0x1d0] sm:$0xff]
    %v708 = vld [vmem:[#allocation4 + $0x1d8] sm:$0xff]
    %v709 = vld [vmem:[#allocation4 + $0x1e0] sm:$0xff]
    %v710 = vld [vmem:[#allocation4 + $0x1e8] sm:$0xff]
    %v711 = vld [vmem:[#allocation4 + $0x1f0] sm:$0xff]
    %v712 = vld [vmem:[#allocation4 + $0x1f8] sm:$0xff]
    %v713 = vld [vmem:[#allocation4 + $0x200] sm:$0xff]
    %v714 = vld [vmem:[#allocation4 + $0x208] sm:$0xff]
    %v715 = vld [vmem:[#allocation4 + $0x210] sm:$0xff]
    %v716 = vld [vmem:[#allocation4 + $0x218] sm:$0xff]
    %v717 = vld [vmem:[#allocation4 + $0x220] sm:$0xff]
    %v718 = vld [vmem:[#allocation4 + $0x228] sm:$0xff]
    %v719 = vld [vmem:[#allocation4 + $0x230] sm:$0xff]
    %v720 = vld [vmem:[#allocation4 + $0x238] sm:$0xff]
    %v721 = vld [vmem:[#allocation4 + $0x240] sm:$0xff]
    %v722 = vld [vmem:[#allocation4 + $0x248] sm:$0xff]
    %v723 = vld [vmem:[#allocation4 + $0x250] sm:$0xff]
    %v724 = vld [vmem:[#allocation4 + $0x258] sm:$0xff]
    %v725 = vld [vmem:[#allocation4 + $0x260] sm:$0xff]
    %v726 = vld [vmem:[#allocation4 + $0x268] sm:$0xff]
    %v727 = vld [vmem:[#allocation4 + $0x270] sm:$0xff]
    %v728 = vld [vmem:[#allocation4 + $0x278] sm:$0xff]
    %v729 = vld [vmem:[#allocation4 + $0x280] sm:$0xff]
    %v730 = vld [vmem:[#allocation4 + $0x288] sm:$0xff]
    %v731 = vld [vmem:[#allocation4 + $0x290] sm:$0xff]
    %v732 = vld [vmem:[#allocation4 + $0x298] sm:$0xff]
    %v733 = vld [vmem:[#allocation4 + $0x2a0] sm:$0xff]
    %v734 = vld [vmem:[#allocation4 + $0x2a8] sm:$0xff]
    %v735 = vld [vmem:[#allocation4 + $0x2b0] sm:$0xff]
    %v736 = vld [vmem:[#allocation4 + $0x2b8] sm:$0xff]
    %v737 = vld [vmem:[#allocation4 + $0x2c0] sm:$0xff]
    %v738 = vld [vmem:[#allocation4 + $0x2c8] sm:$0xff]
    %v739 = vld [vmem:[#allocation4 + $0x2d0] sm:$0xff]
    %v740 = vld [vmem:[#allocation4 + $0x2d8] sm:$0xff]
    %v741 = vld [vmem:[#allocation4 + $0x2e0] sm:$0xff]
    %v742 = vld [vmem:[#allocation4 + $0x2e8] sm:$0xff]
    %v743 = vld [vmem:[#allocation4 + $0x2f0] sm:$0xff]
    %v744 = vld [vmem:[#allocation4 + $0x2f8] sm:$0xff]
    %v745 = vld [vmem:[#allocation4 + $0x300] sm:$0xff]
    %v746 = vld [vmem:[#allocation4 + $0x308] sm:$0xff]
    %v747 = vld [vmem:[#allocation4 + $0x310] sm:$0xff]
    %v748 = vld [vmem:[#allocation4 + $0x318] sm:$0xff]
    %v749 = vld [vmem:[#allocation4 + $0x320] sm:$0xff]
    %v750 = vld [vmem:[#allocation4 + $0x328] sm:$0xff]
    %v751 = vld [vmem:[#allocation4 + $0x330] sm:$0xff]
    %v752 = vld [vmem:[#allocation4 + $0x338] sm:$0xff]
    %v753 = vld [vmem:[#allocation4 + $0x340] sm:$0xff]
    %v754 = vld [vmem:[#allocation4 + $0x348] sm:$0xff]
    %v755 = vld [vmem:[#allocation4 + $0x350] sm:$0xff]
    %v756 = vld [vmem:[#allocation4 + $0x358] sm:$0xff]
    %v757 = vld [vmem:[#allocation4 + $0x360] sm:$0xff]
    %v758 = vld [vmem:[#allocation4 + $0x368] sm:$0xff]
    %v759 = vld [vmem:[#allocation4 + $0x370] sm:$0xff]
    %v760 = vld [vmem:[#allocation4 + $0x378] sm:$0xff]
    %v761 = vld [vmem:[#allocation4 + $0x380] sm:$0xff]
    %v762 = vld [vmem:[#allocation4 + $0x388] sm:$0xff]
    %v763 = vld [vmem:[#allocation4 + $0x390] sm:$0xff]
    %v764 = vld [vmem:[#allocation4 + $0x398] sm:$0xff]
    %v765 = vld [vmem:[#allocation4 + $0x3a0] sm:$0xff]
    %v766 = vld [vmem:[#allocation4 + $0x3a8] sm:$0xff]
    %v767 = vld [vmem:[#allocation4 + $0x3b0] sm:$0xff]
    %v768 = vld [vmem:[#allocation4 + $0x3b8] sm:$0xff]
    %v769 = vld [vmem:[#allocation4 + $0x3c0] sm:$0xff]
    %v770 = vld [vmem:[#allocation4 + $0x3c8] sm:$0xff]
    %v771 = vld [vmem:[#allocation4 + $0x3d0] sm:$0xff]
    %v772 = vld [vmem:[#allocation4 + $0x3d8] sm:$0xff]
    %v773 = vld [vmem:[#allocation4 + $0x3e0] sm:$0xff]
    %v774 = vld [vmem:[#allocation4 + $0x3e8] sm:$0xff]
    %v775 = vld [vmem:[#allocation4 + $0x3f0] sm:$0xff]
    %v776 = vld [vmem:[#allocation4 + $0x3f8] sm:$0xff]
    %v777 = vld [vmem:[#allocation2] sm:$0xff]
    %v778 = vld [vmem:[#allocation2 + $0x8] sm:$0xff]
    %v779 = vld [vmem:[#allocation2 + $0x10] sm:$0xff]
    %v780 = vld [vmem:[#allocation2 + $0x18] sm:$0xff]
    %s781 = scalar_lea.vmem [#allocation3], 224
    %v782 = vld [vmem:[%s781] sm:$0xff]
    %v783 = vld [vmem:[%s781 + $0x8] sm:$0xff]
    %v784 = vld [vmem:[%s781 + $0x10] sm:$0xff]
    %v785 = vld [vmem:[%s781 + $0x18] sm:$0xff]
    %786 = vmatprep.subr.mxu0 %v650
    %787 = vmatpush1.msra.mxu0 %v649
    %788 = vmatprep.subr.mxu0 %v654
    %789 = vmatpush1.msra.mxu0 %v653
    %790 = vmatprep.subr.mxu0 %v658
    %791 = vmatpush1.msra.mxu0 %v657
    %792 = vmatprep.subr.mxu0 %v662
    %793 = vmatpush1.msra.mxu0 %v661
    %794 = vmatprep.subr.mxu0 %v666
    %795 = vmatpush1.msra.mxu0 %v665
    %796 = vmatprep.subr.mxu0 %v670
    %797 = vmatpush1.msra.mxu0 %v669
    %798 = vmatprep.subr.mxu0 %v674
    %799 = vmatpush1.msra.mxu0 %v673
    %800 = vmatprep.subr.mxu0 %v678
    %801 = vmatpush1.msra.mxu0 %v677
    %802 = vmatprep.subr.mxu0 %v682
    %803 = vmatpush1.msra.mxu0 %v681
    %804 = vmatprep.subr.mxu0 %v686
    %805 = vmatpush1.msra.mxu0 %v685
    %806 = vmatprep.subr.mxu0 %v690
    %807 = vmatpush1.msra.mxu0 %v689
    %808 = vmatprep.subr.mxu0 %v694
    %809 = vmatpush1.msra.mxu0 %v693
    %810 = vmatprep.subr.mxu0 %v698
    %811 = vmatpush1.msra.mxu0 %v697
    %812 = vmatprep.subr.mxu0 %v702
    %813 = vmatpush1.msra.mxu0 %v701
    %814 = vmatprep.subr.mxu0 %v706
    %815 = vmatpush1.msra.mxu0 %v705
    %816 = vmatprep.subr.mxu0 %v710
    %817 = vmatpush1.msra.mxu0 %v709
    %818 = vmatprep.subr.mxu0 %v714
    %819 = vmatpush1.msra.mxu0 %v713
    %820 = vmatprep.subr.mxu0 %v718
    %821 = vmatpush1.msra.mxu0 %v717
    %822 = vmatprep.subr.mxu0 %v722
    %823 = vmatpush1.msra.mxu0 %v721
    %824 = vmatprep.subr.mxu0 %v726
    %825 = vmatpush1.msra.mxu0 %v725
    %826 = vmatprep.subr.mxu0 %v730
    %827 = vmatpush1.msra.mxu0 %v729
    %828 = vmatprep.subr.mxu0 %v734
    %829 = vmatpush1.msra.mxu0 %v733
    %830 = vmatprep.subr.mxu0 %v738
    %831 = vmatpush1.msra.mxu0 %v737
    %832 = vmatprep.subr.mxu0 %v742
    %833 = vmatpush1.msra.mxu0 %v741
    %834 = vmatprep.subr.mxu0 %v746
    %835 = vmatpush1.msra.mxu0 %v745
    %836 = vmatprep.subr.mxu0 %v750
    %837 = vmatpush1.msra.mxu0 %v749
    %838 = vmatprep.subr.mxu0 %v754
    %839 = vmatpush1.msra.mxu0 %v753
    %840 = vmatprep.subr.mxu0 %v758
    %841 = vmatpush1.msra.mxu0 %v757
    %842 = vmatprep.subr.mxu0 %v762
    %843 = vmatpush1.msra.mxu0 %v761
    %844 = vmatprep.subr.mxu0 %v766
    %845 = vmatpush1.msra.mxu0 %v765
    %846 = vmatprep.subr.mxu0 %v770
    %847 = vmatpush1.msra.mxu0 %v769
    %848 = vmatprep.subr.mxu0 %v774
    %849 = vmatpush1.msra.mxu0 %v773
    %850 = vmatprep.mubr.f32.mxu0 0.0
    %851 = vmatmul.mubr.f32.gmra.mrb[0].mxu0 0.0
    %v852 = vpop.f32.mrb[0].mxu0
    %v853 = vadd.f32 %v777, %v852
    %v854 = vpop.f32.mrb[0].mxu0
    %v855 = vadd.f32 %v778, %v854
    %856 = vmatprep.mubr.f32.mxu0 0.0
    %857 = vmatmul.mubr.f32.gmra.mrb[0].mxu0 0.0
    %v858 = vpop.f32.mrb[0].mxu0
    %v859 = vadd.f32 %v782, %v858
    %v860 = vpop.f32.mrb[0].mxu0
    %v861 = vadd.f32 %v783, %v860
    %862 = vdwg.mxu0
    %863 = vmatprep.subr.mxu0 %v652
    %864 = vmatpush1.msra.mxu0 %v651
    %865 = vmatprep.subr.mxu0 %v656
    %866 = vmatpush1.msra.mxu0 %v655
    %867 = vmatprep.subr.mxu0 %v660
    %868 = vmatpush1.msra.mxu0 %v659
    %869 = vmatprep.subr.mxu0 %v664
    %870 = vmatpush1.msra.mxu0 %v663
    %871 = vmatprep.subr.mxu0 %v668
    %872 = vmatpush1.msra.mxu0 %v667
    %873 = vmatprep.subr.mxu0 %v672
    %874 = vmatpush1.msra.mxu0 %v671
    %875 = vmatprep.subr.mxu0 %v676
    %876 = vmatpush1.msra.mxu0 %v675
    %877 = vmatprep.subr.mxu0 %v680
    %878 = vmatpush1.msra.mxu0 %v679
    %879 = vmatprep.subr.mxu0 %v684
    %880 = vmatpush1.msra.mxu0 %v683
    %881 = vmatprep.subr.mxu0 %v688
    %882 = vmatpush1.msra.mxu0 %v687
    %883 = vmatprep.subr.mxu0 %v692
    %884 = vmatpush1.msra.mxu0 %v691
    %885 = vmatprep.subr.mxu0 %v696
    %886 = vmatpush1.msra.mxu0 %v695
    %887 = vmatprep.subr.mxu0 %v700
    %888 = vmatpush1.msra.mxu0 %v699
    %889 = vmatprep.subr.mxu0 %v704
    %890 = vmatpush1.msra.mxu0 %v703
    %891 = vmatprep.subr.mxu0 %v708
    %892 = vmatpush1.msra.mxu0 %v707
    %893 = vmatprep.subr.mxu0 %v712
    %894 = vmatpush1.msra.mxu0 %v711
    %895 = vmatprep.subr.mxu0 %v716
    %896 = vmatpush1.msra.mxu0 %v715
    %897 = vmatprep.subr.mxu0 %v720
    %898 = vmatpush1.msra.mxu0 %v719
    %899 = vmatprep.subr.mxu0 %v724
    %900 = vmatpush1.msra.mxu0 %v723
    %901 = vmatprep.subr.mxu0 %v728
    %902 = vmatpush1.msra.mxu0 %v727
    %903 = vmatprep.subr.mxu0 %v732
    %904 = vmatpush1.msra.mxu0 %v731
    %905 = vmatprep.subr.mxu0 %v736
    %906 = vmatpush1.msra.mxu0 %v735
    %907 = vmatprep.subr.mxu0 %v740
    %908 = vmatpush1.msra.mxu0 %v739
    %909 = vmatprep.subr.mxu0 %v744
    %910 = vmatpush1.msra.mxu0 %v743
    %911 = vmatprep.subr.mxu0 %v748
    %912 = vmatpush1.msra.mxu0 %v747
    %913 = vmatprep.subr.mxu0 %v752
    %914 = vmatpush1.msra.mxu0 %v751
    %915 = vmatprep.subr.mxu0 %v756
    %916 = vmatpush1.msra.mxu0 %v755
    %917 = vmatprep.subr.mxu0 %v760
    %918 = vmatpush1.msra.mxu0 %v759
    %919 = vmatprep.subr.mxu0 %v764
    %920 = vmatpush1.msra.mxu0 %v763
    %921 = vmatprep.subr.mxu0 %v768
    %922 = vmatpush1.msra.mxu0 %v767
    %923 = vmatprep.subr.mxu0 %v772
    %924 = vmatpush1.msra.mxu0 %v771
    %925 = vmatprep.subr.mxu0 %v776
    %926 = vmatpush1.msra.mxu0 %v775
    %927 = vmatprep.mubr.f32.mxu0 0.0
    %928 = vmatmul.mubr.f32.gmra.mrb[0].mxu0 0.0
    %v929 = vpop.f32.mrb[0].mxu0
    %v930 = vadd.f32 %v779, %v929
    %v931 = vpop.f32.mrb[0].mxu0
    %v932 = vadd.f32 %v780, %v931
    %933 = vmatprep.mubr.f32.mxu0 0.0
    %934 = vmatmul.mubr.f32.gmra.mrb[0].mxu0 0.0
    %v935 = vpop.f32.mrb[0].mxu0
    %v936 = vadd.f32 %v784, %v935
    %v937 = vpop.f32.mrb[0].mxu0
    %v938 = vadd.f32 %v785, %v937
    %939 = vdwg.mxu0
    %v940 = vxor.u32 %v853, 2147483648
    %v941 = vxor.u32 %v859, 2147483648
    %v942 = vmul.f32 %v940, 1.442695
    %v943 = vpow.pop %v942
    %v944 = vmul.f32 %v941, 1.442695
    %v945 = vpow.pop %v944
    %v946 = vadd.f32 %v943, 1.0
    %v947 = vadd.f32 %v945, 1.0
    %v948 = vrcp.pop %v946
    %v949 = vmul.f32 1.0, %v948
    %v950 = vrcp.pop %v947
    %v951 = vmul.f32 1.0, %v950
    %v952 = vxor.u32 %v855, 2147483648
    %v953 = vxor.u32 %v861, 2147483648
    %v954 = vmul.f32 %v952, 1.442695
    %v955 = vpow.pop %v954
    %v956 = vmul.f32 %v953, 1.442695
    %v957 = vpow.pop %v956
    %v958 = vadd.f32 %v955, 1.0
    %v959 = vadd.f32 %v957, 1.0
    %v960 = vrcp.pop %v958
    %v961 = vmul.f32 1.0, %v960
    %v962 = vrcp.pop %v959
    %v963 = vmul.f32 1.0, %v962
    %v964 = vtanh.pop %v930
    %v965 = vtanh.pop %v936
    %v966 = vxor.u32 %v932, 2147483648
    %v967 = vxor.u32 %v938, 2147483648
    %v968 = vmul.f32 %v966, 1.442695
    %v969 = vpow.pop %v968
    %v970 = vmul.f32 %v967, 1.442695
    %v971 = vpow.pop %v970
    %v972 = vadd.f32 %v969, 1.0
    %v973 = vadd.f32 %v971, 1.0
    %v974 = vrcp.pop %v972
    %v975 = vmul.f32 1.0, %v974
    %v976 = vrcp.pop %v973
    %v977 = vmul.f32 1.0, %v976
    %v978 = vmul.f32 %v961, 0.0
    %v979 = vmul.f32 %v963, 0.0
    %v980 = vmul.f32 %v949, %v964
    %v981 = vmul.f32 %v951, %v965
    %v982 = vadd.f32 %v978, %v980
    %v983 = vadd.f32 %v979, %v981
    %v984 = vtanh.pop %v982
    %v985 = vtanh.pop %v983
    %v986 = vmul.f32 %v975, %v984
    %v987 = vmul.f32 %v977, %v985
    %vm988 = vcmp.gt.s32.totalorder %v648, 0
    %vm989 = vcmp.gt.s32.totalorder %v648, 7
    %v990 = vsel %vm988, 1, 0
    %v991 = vsel %vm989, 1, 0
    %992 = vset.pattern.permute.xlu0 0
    %993 = vperm.xlu0 %992, %v990
    %v994 = vpop.permute.xlu0 %993
    %995 = vset.pattern.permute.xlu0 0
    %996 = vperm.xlu0 %995, %v991
    %v997 = vpop.permute.xlu0 %996
    %vm998 = vcmp.eq.s32.totalorder %v994, 1
    %vm999 = vcmp.eq.s32.totalorder %v997, 1
    %v1000 = vsel %vm998, %v982, 0.0
    %v1001 = vsel %vm999, %v983, 0.0
    %v1002 = vsel %vm998, %v986, 0.0
    %v1003 = vsel %vm999, %v987, 0.0
    %s1004 = scalar_lea.vmem [#allocation2], 32
    %v1005 = vld [vmem:[%s1004] sm:$0xff]
    %v1006 = vld [vmem:[%s1004 + $0x8] sm:$0xff]
    %v1007 = vld [vmem:[%s1004 + $0x10] sm:$0xff]
    %v1008 = vld [vmem:[%s1004 + $0x18] sm:$0xff]
    %s1009 = scalar_lea.vmem [#allocation3], 192
    %v1010 = vld [vmem:[%s1009] sm:$0xff]
    %v1011 = vld [vmem:[%s1009 + $0x8] sm:$0xff]
    %v1012 = vld [vmem:[%s1009 + $0x10] sm:$0xff]
    %v1013 = vld [vmem:[%s1009 + $0x18] sm:$0xff]
    %1014 = vmatprep.subr.mxu0 %v650
    %1015 = vmatpush1.msra.mxu0 %v649
    %1016 = vmatprep.subr.mxu0 %v654
    %1017 = vmatpush1.msra.mxu0 %v653
    %1018 = vmatprep.subr.mxu0 %v658
    %1019 = vmatpush1.msra.mxu0 %v657
    %1020 = vmatprep.subr.mxu0 %v662
    %1021 = vmatpush1.msra.mxu0 %v661
    %1022 = vmatprep.subr.mxu0 %v666
    %1023 = vmatpush1.msra.mxu0 %v665
    %1024 = vmatprep.subr.mxu0 %v670
    %1025 = vmatpush1.msra.mxu0 %v669
    %1026 = vmatprep.subr.mxu0 %v674
    %1027 = vmatpush1.msra.mxu0 %v673
    %1028 = vmatprep.subr.mxu0 %v678
    %1029 = vmatpush1.msra.mxu0 %v677
    %1030 = vmatprep.subr.mxu0 %v682
    %1031 = vmatpush1.msra.mxu0 %v681
    %1032 = vmatprep.subr.mxu0 %v686
    %1033 = vmatpush1.msra.mxu0 %v685
    %1034 = vmatprep.subr.mxu0 %v690
    %1035 = vmatpush1.msra.mxu0 %v689
    %1036 = vmatprep.subr.mxu0 %v694
    %1037 = vmatpush1.msra.mxu0 %v693
    %1038 = vmatprep.subr.mxu0 %v698
    %1039 = vmatpush1.msra.mxu0 %v697
    %1040 = vmatprep.subr.mxu0 %v702
    %1041 = vmatpush1.msra.mxu0 %v701
    %1042 = vmatprep.subr.mxu0 %v706
    %1043 = vmatpush1.msra.mxu0 %v705
    %1044 = vmatprep.subr.mxu0 %v710
    %1045 = vmatpush1.msra.mxu0 %v709
    %1046 = vmatprep.subr.mxu0 %v714
    %1047 = vmatpush1.msra.mxu0 %v713
    %1048 = vmatprep.subr.mxu0 %v718
    %1049 = vmatpush1.msra.mxu0 %v717
    %1050 = vmatprep.subr.mxu0 %v722
    %1051 = vmatpush1.msra.mxu0 %v721
    %1052 = vmatprep.subr.mxu0 %v726
    %1053 = vmatpush1.msra.mxu0 %v725
    %1054 = vmatprep.subr.mxu0 %v730
    %1055 = vmatpush1.msra.mxu0 %v729
    %1056 = vmatprep.subr.mxu0 %v734
    %1057 = vmatpush1.msra.mxu0 %v733
    %1058 = vmatprep.subr.mxu0 %v738
    %1059 = vmatpush1.msra.mxu0 %v737
    %1060 = vmatprep.subr.mxu0 %v742
    %1061 = vmatpush1.msra.mxu0 %v741
    %1062 = vmatprep.subr.mxu0 %v746
    %1063 = vmatpush1.msra.mxu0 %v745
    %1064 = vmatprep.subr.mxu0 %v750
    %1065 = vmatpush1.msra.mxu0 %v749
    %1066 = vmatprep.subr.mxu0 %v754
    %1067 = vmatpush1.msra.mxu0 %v753
    %1068 = vmatprep.subr.mxu0 %v758
    %1069 = vmatpush1.msra.mxu0 %v757
    %1070 = vmatprep.subr.mxu0 %v762
    %1071 = vmatpush1.msra.mxu0 %v761
    %1072 = vmatprep.subr.mxu0 %v766
    %1073 = vmatpush1.msra.mxu0 %v765
    %1074 = vmatprep.subr.mxu0 %v770
    %1075 = vmatpush1.msra.mxu0 %v769
    %1076 = vmatprep.subr.mxu0 %v774
    %1077 = vmatpush1.msra.mxu0 %v773
    %1078 = vmatprep.mubr.f32.mxu0 0.0
    %1079 = vmatmul.mubr.f32.gmra.mrb[0].mxu0 %v1002
    %v1080 = vpop.f32.mrb[0].mxu0
    %v1081 = vadd.f32 %v1005, %v1080
    %v1082 = vpop.f32.mrb[0].mxu0
    %v1083 = vadd.f32 %v1006, %v1082
    %1084 = vmatprep.mubr.f32.mxu0 %v1003
    %1085 = vmatmul.mubr.f32.gmra.mrb[0].mxu0 0.0
    %v1086 = vpop.f32.mrb[0].mxu0
    %v1087 = vadd.f32 %v1010, %v1086
    %v1088 = vpop.f32.mrb[0].mxu0
    %v1089 = vadd.f32 %v1011, %v1088
    %1090 = vdwg.mxu0
    %1091 = vmatprep.subr.mxu0 %v652
    %1092 = vmatpush1.msra.mxu0 %v651
    %1093 = vmatprep.subr.mxu0 %v656
    %1094 = vmatpush1.msra.mxu0 %v655
    %1095 = vmatprep.subr.mxu0 %v660
    %1096 = vmatpush1.msra.mxu0 %v659
    %1097 = vmatprep.subr.mxu0 %v664
    %1098 = vmatpush1.msra.mxu0 %v663
    %1099 = vmatprep.subr.mxu0 %v668
    %1100 = vmatpush1.msra.mxu0 %v667
    %1101 = vmatprep.subr.mxu0 %v672
    %1102 = vmatpush1.msra.mxu0 %v671
    %1103 = vmatprep.subr.mxu0 %v676
    %1104 = vmatpush1.msra.mxu0 %v675
    %1105 = vmatprep.subr.mxu0 %v680
    %1106 = vmatpush1.msra.mxu0 %v679
    %1107 = vmatprep.subr.mxu0 %v684
    %1108 = vmatpush1.msra.mxu0 %v683
    %1109 = vmatprep.subr.mxu0 %v688
    %1110 = vmatpush1.msra.mxu0 %v687
    %1111 = vmatprep.subr.mxu0 %v692
    %1112 = vmatpush1.msra.mxu0 %v691
    %1113 = vmatprep.subr.mxu0 %v696
    %1114 = vmatpush1.msra.mxu0 %v695
    %1115 = vmatprep.subr.mxu0 %v700
    %1116 = vmatpush1.msra.mxu0 %v699
    %1117 = vmatprep.subr.mxu0 %v704
    %1118 = vmatpush1.msra.mxu0 %v703
    %1119 = vmatprep.subr.mxu0 %v708
    %1120 = vmatpush1.msra.mxu0 %v707
    %1121 = vmatprep.subr.mxu0 %v712
    %1122 = vmatpush1.msra.mxu0 %v711
    %1123 = vmatprep.subr.mxu0 %v716
    %1124 = vmatpush1.msra.mxu0 %v715
    %1125 = vmatprep.subr.mxu0 %v720
    %1126 = vmatpush1.msra.mxu0 %v719
    %1127 = vmatprep.subr.mxu0 %v724
    %1128 = vmatpush1.msra.mxu0 %v723
    %1129 = vmatprep.subr.mxu0 %v728
    %1130 = vmatpush1.msra.mxu0 %v727
    %1131 = vmatprep.subr.mxu0 %v732
    %1132 = vmatpush1.msra.mxu0 %v731
    %1133 = vmatprep.subr.mxu0 %v736
    %1134 = vmatpush1.msra.mxu0 %v735
    %1135 = vmatprep.subr.mxu0 %v740
    %1136 = vmatpush1.msra.mxu0 %v739
    %1137 = vmatprep.subr.mxu0 %v744
    %1138 = vmatpush1.msra.mxu0 %v743
    %1139 = vmatprep.subr.mxu0 %v748
    %1140 = vmatpush1.msra.mxu0 %v747
    %1141 = vmatprep.subr.mxu0 %v752
    %1142 = vmatpush1.msra.mxu0 %v751
    %1143 = vmatprep.subr.mxu0 %v756
    %1144 = vmatpush1.msra.mxu0 %v755
    %1145 = vmatprep.subr.mxu0 %v760
    %1146 = vmatpush1.msra.mxu0 %v759
    %1147 = vmatprep.subr.mxu0 %v764
    %1148 = vmatpush1.msra.mxu0 %v763
    %1149 = vmatprep.subr.mxu0 %v768
    %1150 = vmatpush1.msra.mxu0 %v767
    %1151 = vmatprep.subr.mxu0 %v772
    %1152 = vmatpush1.msra.mxu0 %v771
    %1153 = vmatprep.subr.mxu0 %v776
    %1154 = vmatpush1.msra.mxu0 %v775
    %1155 = vmatprep.mubr.f32.mxu0 0.0
    %1156 = vmatmul.mubr.f32.gmra.mrb[0].mxu0 %v1002
    %v1157 = vpop.f32.mrb[0].mxu0
    %v1158 = vadd.f32 %v1007, %v1157
    %v1159 = vpop.f32.mrb[0].mxu0
    %v1160 = vadd.f32 %v1008, %v1159
    %1161 = vmatprep.mubr.f32.mxu0 %v1003
    %1162 = vmatmul.mubr.f32.gmra.mrb[0].mxu0 0.0
    %v1163 = vpop.f32.mrb[0].mxu0
    %v1164 = vadd.f32 %v1012, %v1163
    %v1165 = vpop.f32.mrb[0].mxu0
    %v1166 = vadd.f32 %v1013, %v1165
    %1167 = vdwg.mxu0
    %v1168 = vxor.u32 %v1081, 2147483648
    %v1169 = vxor.u32 %v1087, 2147483648
    %v1170 = vmul.f32 %v1168, 1.442695
    %v1171 = vpow.pop %v1170
    %v1172 = vmul.f32 %v1169, 1.442695
    %v1173 = vpow.pop %v1172
    %v1174 = vadd.f32 %v1171, 1.0
    %v1175 = vadd.f32 %v1173, 1.0
    %v1176 = vrcp.pop %v1174
    %v1177 = vmul.f32 1.0, %v1176
    %v1178 = vrcp.pop %v1175
    %v1179 = vmul.f32 1.0, %v1178
    %v1180 = vxor.u32 %v1083, 2147483648
    %v1181 = vxor.u32 %v1089, 2147483648
    %v1182 = vmul.f32 %v1180, 1.442695
    %v1183 = vpow.pop %v1182
    %v1184 = vmul.f32 %v1181, 1.442695
    %v1185 = vpow.pop %v1184
    %v1186 = vadd.f32 %v1183, 1.0
    %v1187 = vadd.f32 %v1185, 1.0
    %v1188 = vrcp.pop %v1186
    %v1189 = vmul.f32 1.0, %v1188
    %v1190 = vrcp.pop %v1187
    %v1191 = vmul.f32 1.0, %v1190
    %v1192 = vtanh.pop %v1158
    %v1193 = vtanh.pop %v1164
    %v1194 = vxor.u32 %v1160, 2147483648
    %v1195 = vxor.u32 %v1166, 2147483648
    %v1196 = vmul.f32 %v1194, 1.442695
    %v1197 = vpow.pop %v1196
    %v1198 = vmul.f32 %v1195, 1.442695
    %v1199 = vpow.pop %v1198
    %v1200 = vadd.f32 %v1197, 1.0
    %v1201 = vadd.f32 %v1199, 1.0
    %v1202 = vrcp.pop %v1200
    %v1203 = vmul.f32 1.0, %v1202
    %v1204 = vrcp.pop %v1201
    %v1205 = vmul.f32 1.0, %v1204
    %v1206 = vmul.f32 %v1189, %v1000
    %v1207 = vmul.f32 %v1191, %v1001
    %v1208 = vmul.f32 %v1177, %v1192
    %v1209 = vmul.f32 %v1179, %v1193
    %v1210 = vadd.f32 %v1206, %v1208
    %v1211 = vadd.f32 %v1207, %v1209
    %v1212 = vtanh.pop %v1210
    %v1213 = vtanh.pop %v1211
    %v1214 = vmul.f32 %v1203, %v1212
    %v1215 = vmul.f32 %v1205, %v1213
    %vm1216 = vcmp.gt.s32.totalorder %v648, 1
    %vm1217 = vcmp.gt.s32.totalorder %v648, 6
    %v1218 = vsel %vm1216, 1, 0
    %v1219 = vsel %vm1217, 1, 0
    %1220 = vset.pattern.permute.xlu0 0
    %1221 = vperm.xlu0 %1220, %v1218
    %v1222 = vpop.permute.xlu0 %1221
    %1223 = vset.pattern.permute.xlu0 0
    %1224 = vperm.xlu0 %1223, %v1219
    %v1225 = vpop.permute.xlu0 %1224
    %vm1226 = vcmp.eq.s32.totalorder %v1222, 1
    %vm1227 = vcmp.eq.s32.totalorder %v1225, 1
    %v1228 = vsel %vm1226, %v1210, %v1000
    %v1229 = vsel %vm1227, %v1211, %v1001
    %v1230 = vsel %vm1226, %v1214, %v1002
    %v1231 = vsel %vm1227, %v1215, %v1003
    %s1232 = scalar_lea.vmem [#allocation2], 64
    %v1233 = vld [vmem:[%s1232] sm:$0xff]
    %v1234 = vld [vmem:[%s1232 + $0x8] sm:$0xff]
    %v1235 = vld [vmem:[%s1232 + $0x10] sm:$0xff]
    %v1236 = vld [vmem:[%s1232 + $0x18] sm:$0xff]
    %s1237 = scalar_lea.vmem [#allocation3], 160
    %v1238 = vld [vmem:[%s1237] sm:$0xff]
    %v1239 = vld [vmem:[%s1237 + $0x8] sm:$0xff]
    %v1240 = vld [vmem:[%s1237 + $0x10] sm:$0xff]
    %v1241 = vld [vmem:[%s1237 + $0x18] sm:$0xff]
    %1242 = vmatprep.subr.mxu0 %v650
    %1243 = vmatpush1.msra.mxu0 %v649
    %1244 = vmatprep.subr.mxu0 %v654
    %1245 = vmatpush1.msra.mxu0 %v653
    %1246 = vmatprep.subr.mxu0 %v658
    %1247 = vmatpush1.msra.mxu0 %v657
    %1248 = vmatprep.subr.mxu0 %v662
    %1249 = vmatpush1.msra.mxu0 %v661
    %1250 = vmatprep.subr.mxu0 %v666
    %1251 = vmatpush1.msra.mxu0 %v665
    %1252 = vmatprep.subr.mxu0 %v670
    %1253 = vmatpush1.msra.mxu0 %v669
    %1254 = vmatprep.subr.mxu0 %v674
    %1255 = vmatpush1.msra.mxu0 %v673
    %1256 = vmatprep.subr.mxu0 %v678
    %1257 = vmatpush1.msra.mxu0 %v677
    %1258 = vmatprep.subr.mxu0 %v682
    %1259 = vmatpush1.msra.mxu0 %v681
    %1260 = vmatprep.subr.mxu0 %v686
    %1261 = vmatpush1.msra.mxu0 %v685
    %1262 = vmatprep.subr.mxu0 %v690
    %1263 = vmatpush1.msra.mxu0 %v689
    %1264 = vmatprep.subr.mxu0 %v694
    %1265 = vmatpush1.msra.mxu0 %v693
    %1266 = vmatprep.subr.mxu0 %v698
    %1267 = vmatpush1.msra.mxu0 %v697
    %1268 = vmatprep.subr.mxu0 %v702
    %1269 = vmatpush1.msra.mxu0 %v701
    %1270 = vmatprep.subr.mxu0 %v706
    %1271 = vmatpush1.msra.mxu0 %v705
    %1272 = vmatprep.subr.mxu0 %v710
    %1273 = vmatpush1.msra.mxu0 %v709
    %1274 = vmatprep.subr.mxu0 %v714
    %1275 = vmatpush1.msra.mxu0 %v713
    %1276 = vmatprep.subr.mxu0 %v718
    %1277 = vmatpush1.msra.mxu0 %v717
    %1278 = vmatprep.subr.mxu0 %v722
    %1279 = vmatpush1.msra.mxu0 %v721
    %1280 = vmatprep.subr.mxu0 %v726
    %1281 = vmatpush1.msra.mxu0 %v725
    %1282 = vmatprep.subr.mxu0 %v730
    %1283 = vmatpush1.msra.mxu0 %v729
    %1284 = vmatprep.subr.mxu0 %v734
    %1285 = vmatpush1.msra.mxu0 %v733
    %1286 = vmatprep.subr.mxu0 %v738
    %1287 = vmatpush1.msra.mxu0 %v737
    %1288 = vmatprep.subr.mxu0 %v742
    %1289 = vmatpush1.msra.mxu0 %v741
    %1290 = vmatprep.subr.mxu0 %v746
    %1291 = vmatpush1.msra.mxu0 %v745
    %1292 = vmatprep.subr.mxu0 %v750
    %1293 = vmatpush1.msra.mxu0 %v749
    %1294 = vmatprep.subr.mxu0 %v754
    %1295 = vmatpush1.msra.mxu0 %v753
    %1296 = vmatprep.subr.mxu0 %v758
    %1297 = vmatpush1.msra.mxu0 %v757
    %1298 = vmatprep.subr.mxu0 %v762
    %1299 = vmatpush1.msra.mxu0 %v761
    %1300 = vmatprep.subr.mxu0 %v766
    %1301 = vmatpush1.msra.mxu0 %v765
    %1302 = vmatprep.subr.mxu0 %v770
    %1303 = vmatpush1.msra.mxu0 %v769
    %1304 = vmatprep.subr.mxu0 %v774
    %1305 = vmatpush1.msra.mxu0 %v773
    %1306 = vmatprep.mubr.f32.mxu0 0.0
    %1307 = vmatmul.mubr.f32.gmra.mrb[0].mxu0 %v1230
    %v1308 = vpop.f32.mrb[0].mxu0
    %v1309 = vadd.f32 %v1233, %v1308
    %v1310 = vpop.f32.mrb[0].mxu0
    %v1311 = vadd.f32 %v1234, %v1310
    %1312 = vmatprep.mubr.f32.mxu0 %v1231
    %1313 = vmatmul.mubr.f32.gmra.mrb[0].mxu0 0.0
    %v1314 = vpop.f32.mrb[0].mxu0
    %v1315 = vadd.f32 %v1238, %v1314
    %v1316 = vpop.f32.mrb[0].mxu0
    %v1317 = vadd.f32 %v1239, %v1316
    %1318 = vdwg.mxu0
    %1319 = vmatprep.subr.mxu0 %v652
    %1320 = vmatpush1.msra.mxu0 %v651
    %1321 = vmatprep.subr.mxu0 %v656
    %1322 = vmatpush1.msra.mxu0 %v655
    %1323 = vmatprep.subr.mxu0 %v660
    %1324 = vmatpush1.msra.mxu0 %v659
    %1325 = vmatprep.subr.mxu0 %v664
    %1326 = vmatpush1.msra.mxu0 %v663
    %1327 = vmatprep.subr.mxu0 %v668
    %1328 = vmatpush1.msra.mxu0 %v667
    %1329 = vmatprep.subr.mxu0 %v672
    %1330 = vmatpush1.msra.mxu0 %v671
    %1331 = vmatprep.subr.mxu0 %v676
    %1332 = vmatpush1.msra.mxu0 %v675
    %1333 = vmatprep.subr.mxu0 %v680
    %1334 = vmatpush1.msra.mxu0 %v679
    %1335 = vmatprep.subr.mxu0 %v684
    %1336 = vmatpush1.msra.mxu0 %v683
    %1337 = vmatprep.subr.mxu0 %v688
    %1338 = vmatpush1.msra.mxu0 %v687
    %1339 = vmatprep.subr.mxu0 %v692
    %1340 = vmatpush1.msra.mxu0 %v691
    %1341 = vmatprep.subr.mxu0 %v696
    %1342 = vmatpush1.msra.mxu0 %v695
    %1343 = vmatprep.subr.mxu0 %v700
    %1344 = vmatpush1.msra.mxu0 %v699
    %1345 = vmatprep.subr.mxu0 %v704
    %1346 = vmatpush1.msra.mxu0 %v703
    %1347 = vmatprep.subr.mxu0 %v708
    %1348 = vmatpush1.msra.mxu0 %v707
    %1349 = vmatprep.subr.mxu0 %v712
    %1350 = vmatpush1.msra.mxu0 %v711
    %1351 = vmatprep.subr.mxu0 %v716
    %1352 = vmatpush1.msra.mxu0 %v715
    %1353 = vmatprep.subr.mxu0 %v720
    %1354 = vmatpush1.msra.mxu0 %v719
    %1355 = vmatprep.subr.mxu0 %v724
    %1356 = vmatpush1.msra.mxu0 %v723
    %1357 = vmatprep.subr.mxu0 %v728
    %1358 = vmatpush1.msra.mxu0 %v727
    %1359 = vmatprep.subr.mxu0 %v732
    %1360 = vmatpush1.msra.mxu0 %v731
    %1361 = vmatprep.subr.mxu0 %v736
    %1362 = vmatpush1.msra.mxu0 %v735
    %1363 = vmatprep.subr.mxu0 %v740
    %1364 = vmatpush1.msra.mxu0 %v739
    %1365 = vmatprep.subr.mxu0 %v744
    %1366 = vmatpush1.msra.mxu0 %v743
    %1367 = vmatprep.subr.mxu0 %v748
    %1368 = vmatpush1.msra.mxu0 %v747
    %1369 = vmatprep.subr.mxu0 %v752
    %1370 = vmatpush1.msra.mxu0 %v751
    %1371 = vmatprep.subr.mxu0 %v756
    %1372 = vmatpush1.msra.mxu0 %v755
    %1373 = vmatprep.subr.mxu0 %v760
    %1374 = vmatpush1.msra.mxu0 %v759
    %1375 = vmatprep.subr.mxu0 %v764
    %1376 = vmatpush1.msra.mxu0 %v763
    %1377 = vmatprep.subr.mxu0 %v768
    %1378 = vmatpush1.msra.mxu0 %v767
    %1379 = vmatprep.subr.mxu0 %v772
    %1380 = vmatpush1.msra.mxu0 %v771
    %1381 = vmatprep.subr.mxu0 %v776
    %1382 = vmatpush1.msra.mxu0 %v775
    %1383 = vmatprep.mubr.f32.mxu0 0.0
    %1384 = vmatmul.mubr.f32.gmra.mrb[0].mxu0 %v1230
    %v1385 = vpop.f32.mrb[0].mxu0
    %v1386 = vadd.f32 %v1235, %v1385
    %v1387 = vpop.f32.mrb[0].mxu0
    %v1388 = vadd.f32 %v1236, %v1387
    %1389 = vmatprep.mubr.f32.mxu0 %v1231
    %1390 = vmatmul.mubr.f32.gmra.mrb[0].mxu0 0.0
    %v1391 = vpop.f32.mrb[0].mxu0
    %v1392 = vadd.f32 %v1240, %v1391
    %v1393 = vpop.f32.mrb[0].mxu0
    %v1394 = vadd.f32 %v1241, %v1393
    %1395 = vdwg.mxu0
    %v1396 = vxor.u32 %v1309, 2147483648
    %v1397 = vxor.u32 %v1315, 2147483648
    %v1398 = vmul.f32 %v1396, 1.442695
    %v1399 = vpow.pop %v1398
    %v1400 = vmul.f32 %v1397, 1.442695
    %v1401 = vpow.pop %v1400
    %v1402 = vadd.f32 %v1399, 1.0
    %v1403 = vadd.f32 %v1401, 1.0
    %v1404 = vrcp.pop %v1402
    %v1405 = vmul.f32 1.0, %v1404
    %v1406 = vrcp.pop %v1403
    %v1407 = vmul.f32 1.0, %v1406
    %v1408 = vxor.u32 %v1311, 2147483648
    %v1409 = vxor.u32 %v1317, 2147483648
    %v1410 = vmul.f32 %v1408, 1.442695
    %v1411 = vpow.pop %v1410
    %v1412 = vmul.f32 %v1409, 1.442695
    %v1413 = vpow.pop %v1412
    %v1414 = vadd.f32 %v1411, 1.0
    %v1415 = vadd.f32 %v1413, 1.0
    %v1416 = vrcp.pop %v1414
    %v1417 = vmul.f32 1.0, %v1416
    %v1418 = vrcp.pop %v1415
    %v1419 = vmul.f32 1.0, %v1418
    %v1420 = vtanh.pop %v1386
    %v1421 = vtanh.pop %v1392
    %v1422 = vxor.u32 %v1388, 2147483648
    %v1423 = vxor.u32 %v1394, 2147483648
    %v1424 = vmul.f32 %v1422, 1.442695
    %v1425 = vpow.pop %v1424
    %v1426 = vmul.f32 %v1423, 1.442695
    %v1427 = vpow.pop %v1426
    %v1428 = vadd.f32 %v1425, 1.0
    %v1429 = vadd.f32 %v1427, 1.0
    %v1430 = vrcp.pop %v1428
    %v1431 = vmul.f32 1.0, %v1430
    %v1432 = vrcp.pop %v1429
    %v1433 = vmul.f32 1.0, %v1432
    %v1434 = vmul.f32 %v1417, %v1228
    %v1435 = vmul.f32 %v1419, %v1229
    %v1436 = vmul.f32 %v1405, %v1420
    %v1437 = vmul.f32 %v1407, %v1421
    %v1438 = vadd.f32 %v1434, %v1436
    %v1439 = vadd.f32 %v1435, %v1437
    %v1440 = vtanh.pop %v1438
    %v1441 = vtanh.pop %v1439
    %v1442 = vmul.f32 %v1431, %v1440
    %v1443 = vmul.f32 %v1433, %v1441
    %vm1444 = vcmp.gt.s32.totalorder %v648, 2
    %vm1445 = vcmp.gt.s32.totalorder %v648, 5
    %v1446 = vsel %vm1444, 1, 0
    %v1447 = vsel %vm1445, 1, 0
    %1448 = vset.pattern.permute.xlu0 0
    %1449 = vperm.xlu0 %1448, %v1446
    %v1450 = vpop.permute.xlu0 %1449
    %1451 = vset.pattern.permute.xlu0 0
    %1452 = vperm.xlu0 %1451, %v1447
    %v1453 = vpop.permute.xlu0 %1452
    %vm1454 = vcmp.eq.s32.totalorder %v1450, 1
    %vm1455 = vcmp.eq.s32.totalorder %v1453, 1
    %v1456 = vsel %vm1454, %v1438, %v1228
    %v1457 = vsel %vm1455, %v1439, %v1229
    %v1458 = vsel %vm1454, %v1442, %v1230
    %v1459 = vsel %vm1455, %v1443, %v1231
    %s1460 = scalar_lea.vmem [#allocation2], 96
    %v1461 = vld [vmem:[%s1460] sm:$0xff]
    %v1462 = vld [vmem:[%s1460 + $0x8] sm:$0xff]
    %v1463 = vld [vmem:[%s1460 + $0x10] sm:$0xff]
    %v1464 = vld [vmem:[%s1460 + $0x18] sm:$0xff]
    %s1465 = scalar_lea.vmem [#allocation3], 128
    %v1466 = vld [vmem:[%s1465] sm:$0xff]
    %v1467 = vld [vmem:[%s1465 + $0x8] sm:$0xff]
    %v1468 = vld [vmem:[%s1465 + $0x10] sm:$0xff]
    %v1469 = vld [vmem:[%s1465 + $0x18] sm:$0xff]
    %1470 = vmatprep.subr.mxu0 %v650
    %1471 = vmatpush1.msra.mxu0 %v649
    %1472 = vmatprep.subr.mxu0 %v654
    %1473 = vmatpush1.msra.mxu0 %v653
    %1474 = vmatprep.subr.mxu0 %v658
    %1475 = vmatpush1.msra.mxu0 %v657
    %1476 = vmatprep.subr.mxu0 %v662
    %1477 = vmatpush1.msra.mxu0 %v661
    %1478 = vmatprep.subr.mxu0 %v666
    %1479 = vmatpush1.msra.mxu0 %v665
    %1480 = vmatprep.subr.mxu0 %v670
    %1481 = vmatpush1.msra.mxu0 %v669
    %1482 = vmatprep.subr.mxu0 %v674
    %1483 = vmatpush1.msra.mxu0 %v673
    %1484 = vmatprep.subr.mxu0 %v678
    %1485 = vmatpush1.msra.mxu0 %v677
    %1486 = vmatprep.subr.mxu0 %v682
    %1487 = vmatpush1.msra.mxu0 %v681
    %1488 = vmatprep.subr.mxu0 %v686
    %1489 = vmatpush1.msra.mxu0 %v685
    %1490 = vmatprep.subr.mxu0 %v690
    %1491 = vmatpush1.msra.mxu0 %v689
    %1492 = vmatprep.subr.mxu0 %v694
    %1493 = vmatpush1.msra.mxu0 %v693
    %1494 = vmatprep.subr.mxu0 %v698
    %1495 = vmatpush1.msra.mxu0 %v697
    %1496 = vmatprep.subr.mxu0 %v702
    %1497 = vmatpush1.msra.mxu0 %v701
    %1498 = vmatprep.subr.mxu0 %v706
    %1499 = vmatpush1.msra.mxu0 %v705
    %1500 = vmatprep.subr.mxu0 %v710
    %1501 = vmatpush1.msra.mxu0 %v709
    %1502 = vmatprep.subr.mxu0 %v714
    %1503 = vmatpush1.msra.mxu0 %v713
    %1504 = vmatprep.subr.mxu0 %v718
    %1505 = vmatpush1.msra.mxu0 %v717
    %1506 = vmatprep.subr.mxu0 %v722
    %1507 = vmatpush1.msra.mxu0 %v721
    %1508 = vmatprep.subr.mxu0 %v726
    %1509 = vmatpush1.msra.mxu0 %v725
    %1510 = vmatprep.subr.mxu0 %v730
    %1511 = vmatpush1.msra.mxu0 %v729
    %1512 = vmatprep.subr.mxu0 %v734
    %1513 = vmatpush1.msra.mxu0 %v733
    %1514 = vmatprep.subr.mxu0 %v738
    %1515 = vmatpush1.msra.mxu0 %v737
    %1516 = vmatprep.subr.mxu0 %v742
    %1517 = vmatpush1.msra.mxu0 %v741
    %1518 = vmatprep.subr.mxu0 %v746
    %1519 = vmatpush1.msra.mxu0 %v745
    %1520 = vmatprep.subr.mxu0 %v750
    %1521 = vmatpush1.msra.mxu0 %v749
    %1522 = vmatprep.subr.mxu0 %v754
    %1523 = vmatpush1.msra.mxu0 %v753
    %1524 = vmatprep.subr.mxu0 %v758
    %1525 = vmatpush1.msra.mxu0 %v757
    %1526 = vmatprep.subr.mxu0 %v762
    %1527 = vmatpush1.msra.mxu0 %v761
    %1528 = vmatprep.subr.mxu0 %v766
    %1529 = vmatpush1.msra.mxu0 %v765
    %1530 = vmatprep.subr.mxu0 %v770
    %1531 = vmatpush1.msra.mxu0 %v769
    %1532 = vmatprep.subr.mxu0 %v774
    %1533 = vmatpush1.msra.mxu0 %v773
    %1534 = vmatprep.mubr.f32.mxu0 0.0
    %1535 = vmatmul.mubr.f32.gmra.mrb[0].mxu0 %v1458
    %v1536 = vpop.f32.mrb[0].mxu0
    %v1537 = vadd.f32 %v1461, %v1536
    %v1538 = vpop.f32.mrb[0].mxu0
    %v1539 = vadd.f32 %v1462, %v1538
    %1540 = vmatprep.mubr.f32.mxu0 %v1459
    %1541 = vmatmul.mubr.f32.gmra.mrb[0].mxu0 0.0
    %v1542 = vpop.f32.mrb[0].mxu0
    %v1543 = vadd.f32 %v1466, %v1542
    %v1544 = vpop.f32.mrb[0].mxu0
    %v1545 = vadd.f32 %v1467, %v1544
    %1546 = vdwg.mxu0
    %1547 = vmatprep.subr.mxu0 %v652
    %1548 = vmatpush1.msra.mxu0 %v651
    %1549 = vmatprep.subr.mxu0 %v656
    %1550 = vmatpush1.msra.mxu0 %v655
    %1551 = vmatprep.subr.mxu0 %v660
    %1552 = vmatpush1.msra.mxu0 %v659
    %1553 = vmatprep.subr.mxu0 %v664
    %1554 = vmatpush1.msra.mxu0 %v663
    %1555 = vmatprep.subr.mxu0 %v668
    %1556 = vmatpush1.msra.mxu0 %v667
    %1557 = vmatprep.subr.mxu0 %v672
    %1558 = vmatpush1.msra.mxu0 %v671
    %1559 = vmatprep.subr.mxu0 %v676
    %1560 = vmatpush1.msra.mxu0 %v675
    %1561 = vmatprep.subr.mxu0 %v680
    %1562 = vmatpush1.msra.mxu0 %v679
    %1563 = vmatprep.subr.mxu0 %v684
    %1564 = vmatpush1.msra.mxu0 %v683
    %1565 = vmatprep.subr.mxu0 %v688
    %1566 = vmatpush1.msra.mxu0 %v687
    %1567 = vmatprep.subr.mxu0 %v692
    %1568 = vmatpush1.msra.mxu0 %v691
    %1569 = vmatprep.subr.mxu0 %v696
    %1570 = vmatpush1.msra.mxu0 %v695
    %1571 = vmatprep.subr.mxu0 %v700
    %1572 = vmatpush1.msra.mxu0 %v699
    %1573 = vmatprep.subr.mxu0 %v704
    %1574 = vmatpush1.msra.mxu0 %v703
    %1575 = vmatprep.subr.mxu0 %v708
    %1576 = vmatpush1.msra.mxu0 %v707
    %1577 = vmatprep.subr.mxu0 %v712
    %1578 = vmatpush1.msra.mxu0 %v711
    %1579 = vmatprep.subr.mxu0 %v716
    %1580 = vmatpush1.msra.mxu0 %v715
    %1581 = vmatprep.subr.mxu0 %v720
    %1582 = vmatpush1.msra.mxu0 %v719
    %1583 = vmatprep.subr.mxu0 %v724
    %1584 = vmatpush1.msra.mxu0 %v723
    %1585 = vmatprep.subr.mxu0 %v728
    %1586 = vmatpush1.msra.mxu0 %v727
    %1587 = vmatprep.subr.mxu0 %v732
    %1588 = vmatpush1.msra.mxu0 %v731
    %1589 = vmatprep.subr.mxu0 %v736
    %1590 = vmatpush1.msra.mxu0 %v735
    %1591 = vmatprep.subr.mxu0 %v740
    %1592 = vmatpush1.msra.mxu0 %v739
    %1593 = vmatprep.subr.mxu0 %v744
    %1594 = vmatpush1.msra.mxu0 %v743
    %1595 = vmatprep.subr.mxu0 %v748
    %1596 = vmatpush1.msra.mxu0 %v747
    %1597 = vmatprep.subr.mxu0 %v752
    %1598 = vmatpush1.msra.mxu0 %v751
    %1599 = vmatprep.subr.mxu0 %v756
    %1600 = vmatpush1.msra.mxu0 %v755
    %1601 = vmatprep.subr.mxu0 %v760
    %1602 = vmatpush1.msra.mxu0 %v759
    %1603 = vmatprep.subr.mxu0 %v764
    %1604 = vmatpush1.msra.mxu0 %v763
    %1605 = vmatprep.subr.mxu0 %v768
    %1606 = vmatpush1.msra.mxu0 %v767
    %1607 = vmatprep.subr.mxu0 %v772
    %1608 = vmatpush1.msra.mxu0 %v771
    %1609 = vmatprep.subr.mxu0 %v776
    %1610 = vmatpush1.msra.mxu0 %v775
    %1611 = vmatprep.mubr.f32.mxu0 0.0
    %1612 = vmatmul.mubr.f32.gmra.mrb[0].mxu0 %v1458
    %v1613 = vpop.f32.mrb[0].mxu0
    %v1614 = vadd.f32 %v1463, %v1613
    %v1615 = vpop.f32.mrb[0].mxu0
    %v1616 = vadd.f32 %v1464, %v1615
    %1617 = vmatprep.mubr.f32.mxu0 %v1459
    %1618 = vmatmul.mubr.f32.gmra.mrb[0].mxu0 0.0
    %v1619 = vpop.f32.mrb[0].mxu0
    %v1620 = vadd.f32 %v1468, %v1619
    %v1621 = vpop.f32.mrb[0].mxu0
    %v1622 = vadd.f32 %v1469, %v1621
    %1623 = vdwg.mxu0
    %v1624 = vxor.u32 %v1537, 2147483648
    %v1625 = vxor.u32 %v1543, 2147483648
    %v1626 = vmul.f32 %v1624, 1.442695
    %v1627 = vpow.pop %v1626
    %v1628 = vmul.f32 %v1625, 1.442695
    %v1629 = vpow.pop %v1628
    %v1630 = vadd.f32 %v1627, 1.0
    %v1631 = vadd.f32 %v1629, 1.0
    %v1632 = vrcp.pop %v1630
    %v1633 = vmul.f32 1.0, %v1632
    %v1634 = vrcp.pop %v1631
    %v1635 = vmul.f32 1.0, %v1634
    %v1636 = vxor.u32 %v1539, 2147483648
    %v1637 = vxor.u32 %v1545, 2147483648
    %v1638 = vmul.f32 %v1636, 1.442695
    %v1639 = vpow.pop %v1638
    %v1640 = vmul.f32 %v1637, 1.442695
    %v1641 = vpow.pop %v1640
    %v1642 = vadd.f32 %v1639, 1.0
    %v1643 = vadd.f32 %v1641, 1.0
    %v1644 = vrcp.pop %v1642
    %v1645 = vmul.f32 1.0, %v1644
    %v1646 = vrcp.pop %v1643
    %v1647 = vmul.f32 1.0, %v1646
    %v1648 = vtanh.pop %v1614
    %v1649 = vtanh.pop %v1620
    %v1650 = vxor.u32 %v1616, 2147483648
    %v1651 = vxor.u32 %v1622, 2147483648
    %v1652 = vmul.f32 %v1650, 1.442695
    %v1653 = vpow.pop %v1652
    %v1654 = vmul.f32 %v1651, 1.442695
    %v1655 = vpow.pop %v1654
    %v1656 = vadd.f32 %v1653, 1.0
    %v1657 = vadd.f32 %v1655, 1.0
    %v1658 = vrcp.pop %v1656
    %v1659 = vmul.f32 1.0, %v1658
    %v1660 = vrcp.pop %v1657
    %v1661 = vmul.f32 1.0, %v1660
    %v1662 = vmul.f32 %v1645, %v1456
    %v1663 = vmul.f32 %v1647, %v1457
    %v1664 = vmul.f32 %v1633, %v1648
    %v1665 = vmul.f32 %v1635, %v1649
    %v1666 = vadd.f32 %v1662, %v1664
    %v1667 = vadd.f32 %v1663, %v1665
    %v1668 = vtanh.pop %v1666
    %v1669 = vtanh.pop %v1667
    %v1670 = vmul.f32 %v1659, %v1668
    %v1671 = vmul.f32 %v1661, %v1669
    %vm1672 = vcmp.gt.s32.totalorder %v648, 3
    %vm1673 = vcmp.gt.s32.totalorder %v648, 4
    %v1674 = vsel %vm1672, 1, 0
    %v1675 = vsel %vm1673, 1, 0
    %1676 = vset.pattern.permute.xlu0 0
    %1677 = vperm.xlu0 %1676, %v1674
    %v1678 = vpop.permute.xlu0 %1677
    %1679 = vset.pattern.permute.xlu0 0
    %1680 = vperm.xlu0 %1679, %v1675
    %v1681 = vpop.permute.xlu0 %1680
    %vm1682 = vcmp.eq.s32.totalorder %v1678, 1
    %vm1683 = vcmp.eq.s32.totalorder %v1681, 1
    %v1684 = vsel %vm1682, %v1666, %v1456
    %v1685 = vsel %vm1683, %v1667, %v1457
    %v1686 = vsel %vm1682, %v1670, %v1458
    %v1687 = vsel %vm1683, %v1671, %v1459
    %s1688 = scalar_lea.vmem [#allocation2], 128
    %v1689 = vld [vmem:[%s1688] sm:$0xff]
    %v1690 = vld [vmem:[%s1688 + $0x8] sm:$0xff]
    %v1691 = vld [vmem:[%s1688 + $0x10] sm:$0xff]
    %v1692 = vld [vmem:[%s1688 + $0x18] sm:$0xff]
    %s1693 = scalar_lea.vmem [#allocation3], 96
    %v1694 = vld [vmem:[%s1693] sm:$0xff]
    %v1695 = vld [vmem:[%s1693 + $0x8] sm:$0xff]
    %v1696 = vld [vmem:[%s1693 + $0x10] sm:$0xff]
    %v1697 = vld [vmem:[%s1693 + $0x18] sm:$0xff]
    %1698 = vmatprep.subr.mxu0 %v650
    %1699 = vmatpush1.msra.mxu0 %v649
    %1700 = vmatprep.subr.mxu0 %v654
    %1701 = vmatpush1.msra.mxu0 %v653
    %1702 = vmatprep.subr.mxu0 %v658
    %1703 = vmatpush1.msra.mxu0 %v657
    %1704 = vmatprep.subr.mxu0 %v662
    %1705 = vmatpush1.msra.mxu0 %v661
    %1706 = vmatprep.subr.mxu0 %v666
    %1707 = vmatpush1.msra.mxu0 %v665
    %1708 = vmatprep.subr.mxu0 %v670
    %1709 = vmatpush1.msra.mxu0 %v669
    %1710 = vmatprep.subr.mxu0 %v674
    %1711 = vmatpush1.msra.mxu0 %v673
    %1712 = vmatprep.subr.mxu0 %v678
    %1713 = vmatpush1.msra.mxu0 %v677
    %1714 = vmatprep.subr.mxu0 %v682
    %1715 = vmatpush1.msra.mxu0 %v681
    %1716 = vmatprep.subr.mxu0 %v686
    %1717 = vmatpush1.msra.mxu0 %v685
    %1718 = vmatprep.subr.mxu0 %v690
    %1719 = vmatpush1.msra.mxu0 %v689
    %1720 = vmatprep.subr.mxu0 %v694
    %1721 = vmatpush1.msra.mxu0 %v693
    %1722 = vmatprep.subr.mxu0 %v698
    %1723 = vmatpush1.msra.mxu0 %v697
    %1724 = vmatprep.subr.mxu0 %v702
    %1725 = vmatpush1.msra.mxu0 %v701
    %1726 = vmatprep.subr.mxu0 %v706
    %1727 = vmatpush1.msra.mxu0 %v705
    %1728 = vmatprep.subr.mxu0 %v710
    %1729 = vmatpush1.msra.mxu0 %v709
    %1730 = vmatprep.subr.mxu0 %v714
    %1731 = vmatpush1.msra.mxu0 %v713
    %1732 = vmatprep.subr.mxu0 %v718
    %1733 = vmatpush1.msra.mxu0 %v717
    %1734 = vmatprep.subr.mxu0 %v722
    %1735 = vmatpush1.msra.mxu0 %v721
    %1736 = vmatprep.subr.mxu0 %v726
    %1737 = vmatpush1.msra.mxu0 %v725
    %1738 = vmatprep.subr.mxu0 %v730
    %1739 = vmatpush1.msra.mxu0 %v729
    %1740 = vmatprep.subr.mxu0 %v734
    %1741 = vmatpush1.msra.mxu0 %v733
    %1742 = vmatprep.subr.mxu0 %v738
    %1743 = vmatpush1.msra.mxu0 %v737
    %1744 = vmatprep.subr.mxu0 %v742
    %1745 = vmatpush1.msra.mxu0 %v741
    %1746 = vmatprep.subr.mxu0 %v746
    %1747 = vmatpush1.msra.mxu0 %v745
    %1748 = vmatprep.subr.mxu0 %v750
    %1749 = vmatpush1.msra.mxu0 %v749
    %1750 = vmatprep.subr.mxu0 %v754
    %1751 = vmatpush1.msra.mxu0 %v753
    %1752 = vmatprep.subr.mxu0 %v758
    %1753 = vmatpush1.msra.mxu0 %v757
    %1754 = vmatprep.subr.mxu0 %v762
    %1755 = vmatpush1.msra.mxu0 %v761
    %1756 = vmatprep.subr.mxu0 %v766
    %1757 = vmatpush1.msra.mxu0 %v765
    %1758 = vmatprep.subr.mxu0 %v770
    %1759 = vmatpush1.msra.mxu0 %v769
    %1760 = vmatprep.subr.mxu0 %v774
    %1761 = vmatpush1.msra.mxu0 %v773
    %1762 = vmatprep.mubr.f32.mxu0 0.0
    %1763 = vmatmul.mubr.f32.gmra.mrb[0].mxu0 %v1686
    %v1764 = vpop.f32.mrb[0].mxu0
    %v1765 = vadd.f32 %v1689, %v1764
    %v1766 = vpop.f32.mrb[0].mxu0
    %v1767 = vadd.f32 %v1690, %v1766
    %1768 = vmatprep.mubr.f32.mxu0 %v1687
    %1769 = vmatmul.mubr.f32.gmra.mrb[0].mxu0 0.0
    %v1770 = vpop.f32.mrb[0].mxu0
    %v1771 = vadd.f32 %v1694, %v1770
    %v1772 = vpop.f32.mrb[0].mxu0
    %v1773 = vadd.f32 %v1695, %v1772
    %1774 = vdwg.mxu0
    %1775 = vmatprep.subr.mxu0 %v652
    %1776 = vmatpush1.msra.mxu0 %v651
    %1777 = vmatprep.subr.mxu0 %v656
    %1778 = vmatpush1.msra.mxu0 %v655
    %1779 = vmatprep.subr.mxu0 %v660
    %1780 = vmatpush1.msra.mxu0 %v659
    %1781 = vmatprep.subr.mxu0 %v664
    %1782 = vmatpush1.msra.mxu0 %v663
    %1783 = vmatprep.subr.mxu0 %v668
    %1784 = vmatpush1.msra.mxu0 %v667
    %1785 = vmatprep.subr.mxu0 %v672
    %1786 = vmatpush1.msra.mxu0 %v671
    %1787 = vmatprep.subr.mxu0 %v676
    %1788 = vmatpush1.msra.mxu0 %v675
    %1789 = vmatprep.subr.mxu0 %v680
    %1790 = vmatpush1.msra.mxu0 %v679
    %1791 = vmatprep.subr.mxu0 %v684
    %1792 = vmatpush1.msra.mxu0 %v683
    %1793 = vmatprep.subr.mxu0 %v688
    %1794 = vmatpush1.msra.mxu0 %v687
    %1795 = vmatprep.subr.mxu0 %v692
    %1796 = vmatpush1.msra.mxu0 %v691
    %1797 = vmatprep.subr.mxu0 %v696
    %1798 = vmatpush1.msra.mxu0 %v695
    %1799 = vmatprep.subr.mxu0 %v700
    %1800 = vmatpush1.msra.mxu0 %v699
    %1801 = vmatprep.subr.mxu0 %v704
    %1802 = vmatpush1.msra.mxu0 %v703
    %1803 = vmatprep.subr.mxu0 %v708
    %1804 = vmatpush1.msra.mxu0 %v707
    %1805 = vmatprep.subr.mxu0 %v712
    %1806 = vmatpush1.msra.mxu0 %v711
    %1807 = vmatprep.subr.mxu0 %v716
    %1808 = vmatpush1.msra.mxu0 %v715
    %1809 = vmatprep.subr.mxu0 %v720
    %1810 = vmatpush1.msra.mxu0 %v719
    %1811 = vmatprep.subr.mxu0 %v724
    %1812 = vmatpush1.msra.mxu0 %v723
    %1813 = vmatprep.subr.mxu0 %v728
    %1814 = vmatpush1.msra.mxu0 %v727
    %1815 = vmatprep.subr.mxu0 %v732
    %1816 = vmatpush1.msra.mxu0 %v731
    %1817 = vmatprep.subr.mxu0 %v736
    %1818 = vmatpush1.msra.mxu0 %v735
    %1819 = vmatprep.subr.mxu0 %v740
    %1820 = vmatpush1.msra.mxu0 %v739
    %1821 = vmatprep.subr.mxu0 %v744
    %1822 = vmatpush1.msra.mxu0 %v743
    %1823 = vmatprep.subr.mxu0 %v748
    %1824 = vmatpush1.msra.mxu0 %v747
    %1825 = vmatprep.subr.mxu0 %v752
    %1826 = vmatpush1.msra.mxu0 %v751
    %1827 = vmatprep.subr.mxu0 %v756
    %1828 = vmatpush1.msra.mxu0 %v755
    %1829 = vmatprep.subr.mxu0 %v760
    %1830 = vmatpush1.msra.mxu0 %v759
    %1831 = vmatprep.subr.mxu0 %v764
    %1832 = vmatpush1.msra.mxu0 %v763
    %1833 = vmatprep.subr.mxu0 %v768
    %1834 = vmatpush1.msra.mxu0 %v767
    %1835 = vmatprep.subr.mxu0 %v772
    %1836 = vmatpush1.msra.mxu0 %v771
    %1837 = vmatprep.subr.mxu0 %v776
    %1838 = vmatpush1.msra.mxu0 %v775
    %1839 = vmatprep.mubr.f32.mxu0 0.0
    %1840 = vmatmul.mubr.f32.gmra.mrb[0].mxu0 %v1686
    %v1841 = vpop.f32.mrb[0].mxu0
    %v1842 = vadd.f32 %v1691, %v1841
    %v1843 = vpop.f32.mrb[0].mxu0
    %v1844 = vadd.f32 %v1692, %v1843
    %1845 = vmatprep.mubr.f32.mxu0 %v1687
    %1846 = vmatmul.mubr.f32.gmra.mrb[0].mxu0 0.0
    %v1847 = vpop.f32.mrb[0].mxu0
    %v1848 = vadd.f32 %v1696, %v1847
    %v1849 = vpop.f32.mrb[0].mxu0
    %v1850 = vadd.f32 %v1697, %v1849
    %1851 = vdwg.mxu0
    %v1852 = vxor.u32 %v1765, 2147483648
    %v1853 = vxor.u32 %v1771, 2147483648
    %v1854 = vmul.f32 %v1852, 1.442695
    %v1855 = vpow.pop %v1854
    %v1856 = vmul.f32 %v1853, 1.442695
    %v1857 = vpow.pop %v1856
    %v1858 = vadd.f32 %v1855, 1.0
    %v1859 = vadd.f32 %v1857, 1.0
    %v1860 = vrcp.pop %v1858
    %v1861 = vmul.f32 1.0, %v1860
    %v1862 = vrcp.pop %v1859
    %v1863 = vmul.f32 1.0, %v1862
    %v1864 = vxor.u32 %v1767, 2147483648
    %v1865 = vxor.u32 %v1773, 2147483648
    %v1866 = vmul.f32 %v1864, 1.442695
    %v1867 = vpow.pop %v1866
    %v1868 = vmul.f32 %v1865, 1.442695
    %v1869 = vpow.pop %v1868
    %v1870 = vadd.f32 %v1867, 1.0
    %v1871 = vadd.f32 %v1869, 1.0
    %v1872 = vrcp.pop %v1870
    %v1873 = vmul.f32 1.0, %v1872
    %v1874 = vrcp.pop %v1871
    %v1875 = vmul.f32 1.0, %v1874
    %v1876 = vtanh.pop %v1842
    %v1877 = vtanh.pop %v1848
    %v1878 = vxor.u32 %v1844, 2147483648
    %v1879 = vxor.u32 %v1850, 2147483648
    %v1880 = vmul.f32 %v1878, 1.442695
    %v1881 = vpow.pop %v1880
    %v1882 = vmul.f32 %v1879, 1.442695
    %v1883 = vpow.pop %v1882
    %v1884 = vadd.f32 %v1881, 1.0
    %v1885 = vadd.f32 %v1883, 1.0
    %v1886 = vrcp.pop %v1884
    %v1887 = vmul.f32 1.0, %v1886
    %v1888 = vrcp.pop %v1885
    %v1889 = vmul.f32 1.0, %v1888
    %v1890 = vmul.f32 %v1873, %v1684
    %v1891 = vmul.f32 %v1875, %v1685
    %v1892 = vmul.f32 %v1861, %v1876
    %v1893 = vmul.f32 %v1863, %v1877
    %v1894 = vadd.f32 %v1890, %v1892
    %v1895 = vadd.f32 %v1891, %v1893
    %v1896 = vtanh.pop %v1894
    %v1897 = vtanh.pop %v1895
    %v1898 = vmul.f32 %v1887, %v1896
    %v1899 = vmul.f32 %v1889, %v1897
    %v1900 = vsel %vm1683, %v1894, %v1684
    %v1901 = vsel %vm1682, %v1895, %v1685
    %v1902 = vsel %vm1683, %v1898, %v1686
    %v1903 = vsel %vm1682, %v1899, %v1687
    %s1904 = scalar_lea.vmem [#allocation2], 160
    %v1905 = vld [vmem:[%s1904] sm:$0xff]
    %v1906 = vld [vmem:[%s1904 + $0x8] sm:$0xff]
    %v1907 = vld [vmem:[%s1904 + $0x10] sm:$0xff]
    %v1908 = vld [vmem:[%s1904 + $0x18] sm:$0xff]
    %s1909 = scalar_lea.vmem [#allocation3], 64
    %v1910 = vld [vmem:[%s1909] sm:$0xff]
    %v1911 = vld [vmem:[%s1909 + $0x8] sm:$0xff]
    %v1912 = vld [vmem:[%s1909 + $0x10] sm:$0xff]
    %v1913 = vld [vmem:[%s1909 + $0x18] sm:$0xff]
    %1914 = vmatprep.subr.mxu0 %v650
    %1915 = vmatpush1.msra.mxu0 %v649
    %1916 = vmatprep.subr.mxu0 %v654
    %1917 = vmatpush1.msra.mxu0 %v653
    %1918 = vmatprep.subr.mxu0 %v658
    %1919 = vmatpush1.msra.mxu0 %v657
    %1920 = vmatprep.subr.mxu0 %v662
    %1921 = vmatpush1.msra.mxu0 %v661
    %1922 = vmatprep.subr.mxu0 %v666
    %1923 = vmatpush1.msra.mxu0 %v665
    %1924 = vmatprep.subr.mxu0 %v670
    %1925 = vmatpush1.msra.mxu0 %v669
    %1926 = vmatprep.subr.mxu0 %v674
    %1927 = vmatpush1.msra.mxu0 %v673
    %1928 = vmatprep.subr.mxu0 %v678
    %1929 = vmatpush1.msra.mxu0 %v677
    %1930 = vmatprep.subr.mxu0 %v682
    %1931 = vmatpush1.msra.mxu0 %v681
    %1932 = vmatprep.subr.mxu0 %v686
    %1933 = vmatpush1.msra.mxu0 %v685
    %1934 = vmatprep.subr.mxu0 %v690
    %1935 = vmatpush1.msra.mxu0 %v689
    %1936 = vmatprep.subr.mxu0 %v694
    %1937 = vmatpush1.msra.mxu0 %v693
    %1938 = vmatprep.subr.mxu0 %v698
    %1939 = vmatpush1.msra.mxu0 %v697
    %1940 = vmatprep.subr.mxu0 %v702
    %1941 = vmatpush1.msra.mxu0 %v701
    %1942 = vmatprep.subr.mxu0 %v706
    %1943 = vmatpush1.msra.mxu0 %v705
    %1944 = vmatprep.subr.mxu0 %v710
    %1945 = vmatpush1.msra.mxu0 %v709
    %1946 = vmatprep.subr.mxu0 %v714
    %1947 = vmatpush1.msra.mxu0 %v713
    %1948 = vmatprep.subr.mxu0 %v718
    %1949 = vmatpush1.msra.mxu0 %v717
    %1950 = vmatprep.subr.mxu0 %v722
    %1951 = vmatpush1.msra.mxu0 %v721
    %1952 = vmatprep.subr.mxu0 %v726
    %1953 = vmatpush1.msra.mxu0 %v725
    %1954 = vmatprep.subr.mxu0 %v730
    %1955 = vmatpush1.msra.mxu0 %v729
    %1956 = vmatprep.subr.mxu0 %v734
    %1957 = vmatpush1.msra.mxu0 %v733
    %1958 = vmatprep.subr.mxu0 %v738
    %1959 = vmatpush1.msra.mxu0 %v737
    %1960 = vmatprep.subr.mxu0 %v742
    %1961 = vmatpush1.msra.mxu0 %v741
    %1962 = vmatprep.subr.mxu0 %v746
    %1963 = vmatpush1.msra.mxu0 %v745
    %1964 = vmatprep.subr.mxu0 %v750
    %1965 = vmatpush1.msra.mxu0 %v749
    %1966 = vmatprep.subr.mxu0 %v754
    %1967 = vmatpush1.msra.mxu0 %v753
    %1968 = vmatprep.subr.mxu0 %v758
    %1969 = vmatpush1.msra.mxu0 %v757
    %1970 = vmatprep.subr.mxu0 %v762
    %1971 = vmatpush1.msra.mxu0 %v761
    %1972 = vmatprep.subr.mxu0 %v766
    %1973 = vmatpush1.msra.mxu0 %v765
    %1974 = vmatprep.subr.mxu0 %v770
    %1975 = vmatpush1.msra.mxu0 %v769
    %1976 = vmatprep.subr.mxu0 %v774
    %1977 = vmatpush1.msra.mxu0 %v773
    %1978 = vmatprep.mubr.f32.mxu0 0.0
    %1979 = vmatmul.mubr.f32.gmra.mrb[0].mxu0 %v1902
    %v1980 = vpop.f32.mrb[0].mxu0
    %v1981 = vadd.f32 %v1905, %v1980
    %v1982 = vpop.f32.mrb[0].mxu0
    %v1983 = vadd.f32 %v1906, %v1982
    %1984 = vmatprep.mubr.f32.mxu0 %v1903
    %1985 = vmatmul.mubr.f32.gmra.mrb[0].mxu0 0.0
    %v1986 = vpop.f32.mrb[0].mxu0
    %v1987 = vadd.f32 %v1910, %v1986
    %v1988 = vpop.f32.mrb[0].mxu0
    %v1989 = vadd.f32 %v1911, %v1988
    %1990 = vdwg.mxu0
    %1991 = vmatprep.subr.mxu0 %v652
    %1992 = vmatpush1.msra.mxu0 %v651
    %1993 = vmatprep.subr.mxu0 %v656
    %1994 = vmatpush1.msra.mxu0 %v655
    %1995 = vmatprep.subr.mxu0 %v660
    %1996 = vmatpush1.msra.mxu0 %v659
    %1997 = vmatprep.subr.mxu0 %v664
    %1998 = vmatpush1.msra.mxu0 %v663
    %1999 = vmatprep.subr.mxu0 %v668
    %2000 = vmatpush1.msra.mxu0 %v667
    %2001 = vmatprep.subr.mxu0 %v672
    %2002 = vmatpush1.msra.mxu0 %v671
    %2003 = vmatprep.subr.mxu0 %v676
    %2004 = vmatpush1.msra.mxu0 %v675
    %2005 = vmatprep.subr.mxu0 %v680
    %2006 = vmatpush1.msra.mxu0 %v679
    %2007 = vmatprep.subr.mxu0 %v684
    %2008 = vmatpush1.msra.mxu0 %v683
    %2009 = vmatprep.subr.mxu0 %v688
    %2010 = vmatpush1.msra.mxu0 %v687
    %2011 = vmatprep.subr.mxu0 %v692
    %2012 = vmatpush1.msra.mxu0 %v691
    %2013 = vmatprep.subr.mxu0 %v696
    %2014 = vmatpush1.msra.mxu0 %v695
    %2015 = vmatprep.subr.mxu0 %v700
    %2016 = vmatpush1.msra.mxu0 %v699
    %2017 = vmatprep.subr.mxu0 %v704
    %2018 = vmatpush1.msra.mxu0 %v703
    %2019 = vmatprep.subr.mxu0 %v708
    %2020 = vmatpush1.msra.mxu0 %v707
    %2021 = vmatprep.subr.mxu0 %v712
    %2022 = vmatpush1.msra.mxu0 %v711
    %2023 = vmatprep.subr.mxu0 %v716
    %2024 = vmatpush1.msra.mxu0 %v715
    %2025 = vmatprep.subr.mxu0 %v720
    %2026 = vmatpush1.msra.mxu0 %v719
    %2027 = vmatprep.subr.mxu0 %v724
    %2028 = vmatpush1.msra.mxu0 %v723
    %2029 = vmatprep.subr.mxu0 %v728
    %2030 = vmatpush1.msra.mxu0 %v727
    %2031 = vmatprep.subr.mxu0 %v732
    %2032 = vmatpush1.msra.mxu0 %v731
    %2033 = vmatprep.subr.mxu0 %v736
    %2034 = vmatpush1.msra.mxu0 %v735
    %2035 = vmatprep.subr.mxu0 %v740
    %2036 = vmatpush1.msra.mxu0 %v739
    %2037 = vmatprep.subr.mxu0 %v744
    %2038 = vmatpush1.msra.mxu0 %v743
    %2039 = vmatprep.subr.mxu0 %v748
    %2040 = vmatpush1.msra.mxu0 %v747
    %2041 = vmatprep.subr.mxu0 %v752
    %2042 = vmatpush1.msra.mxu0 %v751
    %2043 = vmatprep.subr.mxu0 %v756
    %2044 = vmatpush1.msra.mxu0 %v755
    %2045 = vmatprep.subr.mxu0 %v760
    %2046 = vmatpush1.msra.mxu0 %v759
    %2047 = vmatprep.subr.mxu0 %v764
    %2048 = vmatpush1.msra.mxu0 %v763
    %2049 = vmatprep.subr.mxu0 %v768
    %2050 = vmatpush1.msra.mxu0 %v767
    %2051 = vmatprep.subr.mxu0 %v772
    %2052 = vmatpush1.msra.mxu0 %v771
    %2053 = vmatprep.subr.mxu0 %v776
    %2054 = vmatpush1.msra.mxu0 %v775
    %2055 = vmatprep.mubr.f32.mxu0 0.0
    %2056 = vmatmul.mubr.f32.gmra.mrb[0].mxu0 %v1902
    %v2057 = vpop.f32.mrb[0].mxu0
    %v2058 = vadd.f32 %v1907, %v2057
    %v2059 = vpop.f32.mrb[0].mxu0
    %v2060 = vadd.f32 %v1908, %v2059
    %2061 = vmatprep.mubr.f32.mxu0 %v1903
    %2062 = vmatmul.mubr.f32.gmra.mrb[0].mxu0 0.0
    %v2063 = vpop.f32.mrb[0].mxu0
    %v2064 = vadd.f32 %v1912, %v2063
    %v2065 = vpop.f32.mrb[0].mxu0
    %v2066 = vadd.f32 %v1913, %v2065
    %2067 = vdwg.mxu0
    %v2068 = vxor.u32 %v1981, 2147483648
    %v2069 = vxor.u32 %v1987, 2147483648
    %v2070 = vmul.f32 %v2068, 1.442695
    %v2071 = vpow.pop %v2070
    %v2072 = vmul.f32 %v2069, 1.442695
    %v2073 = vpow.pop %v2072
    %v2074 = vadd.f32 %v2071, 1.0
    %v2075 = vadd.f32 %v2073, 1.0
    %v2076 = vrcp.pop %v2074
    %v2077 = vmul.f32 1.0, %v2076
    %v2078 = vrcp.pop %v2075
    %v2079 = vmul.f32 1.0, %v2078
    %v2080 = vxor.u32 %v1983, 2147483648
    %v2081 = vxor.u32 %v1989, 2147483648
    %v2082 = vmul.f32 %v2080, 1.442695
    %v2083 = vpow.pop %v2082
    %v2084 = vmul.f32 %v2081, 1.442695
    %v2085 = vpow.pop %v2084
    %v2086 = vadd.f32 %v2083, 1.0
    %v2087 = vadd.f32 %v2085, 1.0
    %v2088 = vrcp.pop %v2086
    %v2089 = vmul.f32 1.0, %v2088
    %v2090 = vrcp.pop %v2087
    %v2091 = vmul.f32 1.0, %v2090
    %v2092 = vtanh.pop %v2058
    %v2093 = vtanh.pop %v2064
    %v2094 = vxor.u32 %v2060, 2147483648
    %v2095 = vxor.u32 %v2066, 2147483648
    %v2096 = vmul.f32 %v2094, 1.442695
    %v2097 = vpow.pop %v2096
    %v2098 = vmul.f32 %v2095, 1.442695
    %v2099 = vpow.pop %v2098
    %v2100 = vadd.f32 %v2097, 1.0
    %v2101 = vadd.f32 %v2099, 1.0
    %v2102 = vrcp.pop %v2100
    %v2103 = vmul.f32 1.0, %v2102
    %v2104 = vrcp.pop %v2101
    %v2105 = vmul.f32 1.0, %v2104
    %v2106 = vmul.f32 %v2089, %v1900
    %v2107 = vmul.f32 %v2091, %v1901
    %v2108 = vmul.f32 %v2077, %v2092
    %v2109 = vmul.f32 %v2079, %v2093
    %v2110 = vadd.f32 %v2106, %v2108
    %v2111 = vadd.f32 %v2107, %v2109
    %v2112 = vtanh.pop %v2110
    %v2113 = vtanh.pop %v2111
    %v2114 = vmul.f32 %v2103, %v2112
    %v2115 = vmul.f32 %v2105, %v2113
    %v2116 = vsel %vm1455, %v2110, %v1900
    %v2117 = vsel %vm1454, %v2111, %v1901
    %v2118 = vsel %vm1455, %v2114, %v1902
    %v2119 = vsel %vm1454, %v2115, %v1903
    %s2120 = scalar_lea.vmem [#allocation2], 192
    %v2121 = vld [vmem:[%s2120] sm:$0xff]
    %v2122 = vld [vmem:[%s2120 + $0x8] sm:$0xff]
    %v2123 = vld [vmem:[%s2120 + $0x10] sm:$0xff]
    %v2124 = vld [vmem:[%s2120 + $0x18] sm:$0xff]
    %s2125 = scalar_lea.vmem [#allocation3], 32
    %v2126 = vld [vmem:[%s2125] sm:$0xff]
    %v2127 = vld [vmem:[%s2125 + $0x8] sm:$0xff]
    %v2128 = vld [vmem:[%s2125 + $0x10] sm:$0xff]
    %v2129 = vld [vmem:[%s2125 + $0x18] sm:$0xff]
    %2130 = vmatprep.subr.mxu0 %v650
    %2131 = vmatpush1.msra.mxu0 %v649
    %2132 = vmatprep.subr.mxu0 %v654
    %2133 = vmatpush1.msra.mxu0 %v653
    %2134 = vmatprep.subr.mxu0 %v658
    %2135 = vmatpush1.msra.mxu0 %v657
    %2136 = vmatprep.subr.mxu0 %v662
    %2137 = vmatpush1.msra.mxu0 %v661
    %2138 = vmatprep.subr.mxu0 %v666
    %2139 = vmatpush1.msra.mxu0 %v665
    %2140 = vmatprep.subr.mxu0 %v670
    %2141 = vmatpush1.msra.mxu0 %v669
    %2142 = vmatprep.subr.mxu0 %v674
    %2143 = vmatpush1.msra.mxu0 %v673
    %2144 = vmatprep.subr.mxu0 %v678
    %2145 = vmatpush1.msra.mxu0 %v677
    %2146 = vmatprep.subr.mxu0 %v682
    %2147 = vmatpush1.msra.mxu0 %v681
    %2148 = vmatprep.subr.mxu0 %v686
    %2149 = vmatpush1.msra.mxu0 %v685
    %2150 = vmatprep.subr.mxu0 %v690
    %2151 = vmatpush1.msra.mxu0 %v689
    %2152 = vmatprep.subr.mxu0 %v694
    %2153 = vmatpush1.msra.mxu0 %v693
    %2154 = vmatprep.subr.mxu0 %v698
    %2155 = vmatpush1.msra.mxu0 %v697
    %2156 = vmatprep.subr.mxu0 %v702
    %2157 = vmatpush1.msra.mxu0 %v701
    %2158 = vmatprep.subr.mxu0 %v706
    %2159 = vmatpush1.msra.mxu0 %v705
    %2160 = vmatprep.subr.mxu0 %v710
    %2161 = vmatpush1.msra.mxu0 %v709
    %2162 = vmatprep.subr.mxu0 %v714
    %2163 = vmatpush1.msra.mxu0 %v713
    %2164 = vmatprep.subr.mxu0 %v718
    %2165 = vmatpush1.msra.mxu0 %v717
    %2166 = vmatprep.subr.mxu0 %v722
    %2167 = vmatpush1.msra.mxu0 %v721
    %2168 = vmatprep.subr.mxu0 %v726
    %2169 = vmatpush1.msra.mxu0 %v725
    %2170 = vmatprep.subr.mxu0 %v730
    %2171 = vmatpush1.msra.mxu0 %v729
    %2172 = vmatprep.subr.mxu0 %v734
    %2173 = vmatpush1.msra.mxu0 %v733
    %2174 = vmatprep.subr.mxu0 %v738
    %2175 = vmatpush1.msra.mxu0 %v737
    %2176 = vmatprep.subr.mxu0 %v742
    %2177 = vmatpush1.msra.mxu0 %v741
    %2178 = vmatprep.subr.mxu0 %v746
    %2179 = vmatpush1.msra.mxu0 %v745
    %2180 = vmatprep.subr.mxu0 %v750
    %2181 = vmatpush1.msra.mxu0 %v749
    %2182 = vmatprep.subr.mxu0 %v754
    %2183 = vmatpush1.msra.mxu0 %v753
    %2184 = vmatprep.subr.mxu0 %v758
    %2185 = vmatpush1.msra.mxu0 %v757
    %2186 = vmatprep.subr.mxu0 %v762
    %2187 = vmatpush1.msra.mxu0 %v761
    %2188 = vmatprep.subr.mxu0 %v766
    %2189 = vmatpush1.msra.mxu0 %v765
    %2190 = vmatprep.subr.mxu0 %v770
    %2191 = vmatpush1.msra.mxu0 %v769
    %2192 = vmatprep.subr.mxu0 %v774
    %2193 = vmatpush1.msra.mxu0 %v773
    %2194 = vmatprep.mubr.f32.mxu0 0.0
    %2195 = vmatmul.mubr.f32.gmra.mrb[0].mxu0 %v2118
    %v2196 = vpop.f32.mrb[0].mxu0
    %v2197 = vadd.f32 %v2121, %v2196
    %v2198 = vpop.f32.mrb[0].mxu0
    %v2199 = vadd.f32 %v2122, %v2198
    %2200 = vmatprep.mubr.f32.mxu0 %v2119
    %2201 = vmatmul.mubr.f32.gmra.mrb[0].mxu0 0.0
    %v2202 = vpop.f32.mrb[0].mxu0
    %v2203 = vadd.f32 %v2126, %v2202
    %v2204 = vpop.f32.mrb[0].mxu0
    %v2205 = vadd.f32 %v2127, %v2204
    %2206 = vdwg.mxu0
    %2207 = vmatprep.subr.mxu0 %v652
    %2208 = vmatpush1.msra.mxu0 %v651
    %2209 = vmatprep.subr.mxu0 %v656
    %2210 = vmatpush1.msra.mxu0 %v655
    %2211 = vmatprep.subr.mxu0 %v660
    %2212 = vmatpush1.msra.mxu0 %v659
    %2213 = vmatprep.subr.mxu0 %v664
    %2214 = vmatpush1.msra.mxu0 %v663
    %2215 = vmatprep.subr.mxu0 %v668
    %2216 = vmatpush1.msra.mxu0 %v667
    %2217 = vmatprep.subr.mxu0 %v672
    %2218 = vmatpush1.msra.mxu0 %v671
    %2219 = vmatprep.subr.mxu0 %v676
    %2220 = vmatpush1.msra.mxu0 %v675
    %2221 = vmatprep.subr.mxu0 %v680
    %2222 = vmatpush1.msra.mxu0 %v679
    %2223 = vmatprep.subr.mxu0 %v684
    %2224 = vmatpush1.msra.mxu0 %v683
    %2225 = vmatprep.subr.mxu0 %v688
    %2226 = vmatpush1.msra.mxu0 %v687
    %2227 = vmatprep.subr.mxu0 %v692
    %2228 = vmatpush1.msra.mxu0 %v691
    %2229 = vmatprep.subr.mxu0 %v696
    %2230 = vmatpush1.msra.mxu0 %v695
    %2231 = vmatprep.subr.mxu0 %v700
    %2232 = vmatpush1.msra.mxu0 %v699
    %2233 = vmatprep.subr.mxu0 %v704
    %2234 = vmatpush1.msra.mxu0 %v703
    %2235 = vmatprep.subr.mxu0 %v708
    %2236 = vmatpush1.msra.mxu0 %v707
    %2237 = vmatprep.subr.mxu0 %v712
    %2238 = vmatpush1.msra.mxu0 %v711
    %2239 = vmatprep.subr.mxu0 %v716
    %2240 = vmatpush1.msra.mxu0 %v715
    %2241 = vmatprep.subr.mxu0 %v720
    %2242 = vmatpush1.msra.mxu0 %v719
    %2243 = vmatprep.subr.mxu0 %v724
    %2244 = vmatpush1.msra.mxu0 %v723
    %2245 = vmatprep.subr.mxu0 %v728
    %2246 = vmatpush1.msra.mxu0 %v727
    %2247 = vmatprep.subr.mxu0 %v732
    %2248 = vmatpush1.msra.mxu0 %v731
    %2249 = vmatprep.subr.mxu0 %v736
    %2250 = vmatpush1.msra.mxu0 %v735
    %2251 = vmatprep.subr.mxu0 %v740
    %2252 = vmatpush1.msra.mxu0 %v739
    %2253 = vmatprep.subr.mxu0 %v744
    %2254 = vmatpush1.msra.mxu0 %v743
    %2255 = vmatprep.subr.mxu0 %v748
    %2256 = vmatpush1.msra.mxu0 %v747
    %2257 = vmatprep.subr.mxu0 %v752
    %2258 = vmatpush1.msra.mxu0 %v751
    %2259 = vmatprep.subr.mxu0 %v756
    %2260 = vmatpush1.msra.mxu0 %v755
    %2261 = vmatprep.subr.mxu0 %v760
    %2262 = vmatpush1.msra.mxu0 %v759
    %2263 = vmatprep.subr.mxu0 %v764
    %2264 = vmatpush1.msra.mxu0 %v763
    %2265 = vmatprep.subr.mxu0 %v768
    %2266 = vmatpush1.msra.mxu0 %v767
    %2267 = vmatprep.subr.mxu0 %v772
    %2268 = vmatpush1.msra.mxu0 %v771
    %2269 = vmatprep.subr.mxu0 %v776
    %2270 = vmatpush1.msra.mxu0 %v775
    %2271 = vmatprep.mubr.f32.mxu0 0.0
    %2272 = vmatmul.mubr.f32.gmra.mrb[0].mxu0 %v2118
    %v2273 = vpop.f32.mrb[0].mxu0
    %v2274 = vadd.f32 %v2123, %v2273
    %v2275 = vpop.f32.mrb[0].mxu0
    %v2276 = vadd.f32 %v2124, %v2275
    %2277 = vmatprep.mubr.f32.mxu0 %v2119
    %2278 = vmatmul.mubr.f32.gmra.mrb[0].mxu0 0.0
    %v2279 = vpop.f32.mrb[0].mxu0
    %v2280 = vadd.f32 %v2128, %v2279
    %v2281 = vpop.f32.mrb[0].mxu0
    %v2282 = vadd.f32 %v2129, %v2281
    %2283 = vdwg.mxu0
    %v2284 = vxor.u32 %v2197, 2147483648
    %v2285 = vxor.u32 %v2203, 2147483648
    %v2286 = vmul.f32 %v2284, 1.442695
    %v2287 = vpow.pop %v2286
    %v2288 = vmul.f32 %v2285, 1.442695
    %v2289 = vpow.pop %v2288
    %v2290 = vadd.f32 %v2287, 1.0
    %v2291 = vadd.f32 %v2289, 1.0
    %v2292 = vrcp.pop %v2290
    %v2293 = vmul.f32 1.0, %v2292
    %v2294 = vrcp.pop %v2291
    %v2295 = vmul.f32 1.0, %v2294
    %v2296 = vxor.u32 %v2199, 2147483648
    %v2297 = vxor.u32 %v2205, 2147483648
    %v2298 = vmul.f32 %v2296, 1.442695
    %v2299 = vpow.pop %v2298
    %v2300 = vmul.f32 %v2297, 1.442695
    %v2301 = vpow.pop %v2300
    %v2302 = vadd.f32 %v2299, 1.0
    %v2303 = vadd.f32 %v2301, 1.0
    %v2304 = vrcp.pop %v2302
    %v2305 = vmul.f32 1.0, %v2304
    %v2306 = vrcp.pop %v2303
    %v2307 = vmul.f32 1.0, %v2306
    %v2308 = vtanh.pop %v2274
    %v2309 = vtanh.pop %v2280
    %v2310 = vxor.u32 %v2276, 2147483648
    %v2311 = vxor.u32 %v2282, 2147483648
    %v2312 = vmul.f32 %v2310, 1.442695
    %v2313 = vpow.pop %v2312
    %v2314 = vmul.f32 %v2311, 1.442695
    %v2315 = vpow.pop %v2314
    %v2316 = vadd.f32 %v2313, 1.0
    %v2317 = vadd.f32 %v2315, 1.0
    %v2318 = vrcp.pop %v2316
    %v2319 = vmul.f32 1.0, %v2318
    %v2320 = vrcp.pop %v2317
    %v2321 = vmul.f32 1.0, %v2320
    %v2322 = vmul.f32 %v2305, %v2116
    %v2323 = vmul.f32 %v2307, %v2117
    %v2324 = vmul.f32 %v2293, %v2308
    %v2325 = vmul.f32 %v2295, %v2309
    %v2326 = vadd.f32 %v2322, %v2324
    %v2327 = vadd.f32 %v2323, %v2325
    %v2328 = vtanh.pop %v2326
    %v2329 = vtanh.pop %v2327
    %v2330 = vmul.f32 %v2319, %v2328
    %v2331 = vmul.f32 %v2321, %v2329
    %v2332 = vsel %vm1227, %v2326, %v2116
    %v2333 = vsel %vm1226, %v2327, %v2117
    %v2334 = vsel %vm1227, %v2330, %v2118
    %v2335 = vsel %vm1226, %v2331, %v2119
    %s2336 = scalar_lea.vmem [#allocation2], 224
    %v2337 = vld [vmem:[%s2336] sm:$0xff]
    %v2338 = vld [vmem:[%s2336 + $0x8] sm:$0xff]
    %v2339 = vld [vmem:[%s2336 + $0x10] sm:$0xff]
    %v2340 = vld [vmem:[%s2336 + $0x18] sm:$0xff]
    %v2341 = vld [vmem:[#allocation3] sm:$0xff]
    %v2342 = vld [vmem:[#allocation3 + $0x8] sm:$0xff]
    %v2343 = vld [vmem:[#allocation3 + $0x10] sm:$0xff]
    %v2344 = vld [vmem:[#allocation3 + $0x18] sm:$0xff]
    %2345 = vmatprep.subr.mxu0 %v650
    %2346 = vmatpush1.msra.mxu0 %v649
    %2347 = vmatprep.subr.mxu0 %v654
    %2348 = vmatpush1.msra.mxu0 %v653
    %2349 = vmatprep.subr.mxu0 %v658
    %2350 = vmatpush1.msra.mxu0 %v657
    %2351 = vmatprep.subr.mxu0 %v662
    %2352 = vmatpush1.msra.mxu0 %v661
    %2353 = vmatprep.subr.mxu0 %v666
    %2354 = vmatpush1.msra.mxu0 %v665
    %2355 = vmatprep.subr.mxu0 %v670
    %2356 = vmatpush1.msra.mxu0 %v669
    %2357 = vmatprep.subr.mxu0 %v674
    %2358 = vmatpush1.msra.mxu0 %v673
    %2359 = vmatprep.subr.mxu0 %v678
    %2360 = vmatpush1.msra.mxu0 %v677
    %2361 = vmatprep.subr.mxu0 %v682
    %2362 = vmatpush1.msra.mxu0 %v681
    %2363 = vmatprep.subr.mxu0 %v686
    %2364 = vmatpush1.msra.mxu0 %v685
    %2365 = vmatprep.subr.mxu0 %v690
    %2366 = vmatpush1.msra.mxu0 %v689
    %2367 = vmatprep.subr.mxu0 %v694
    %2368 = vmatpush1.msra.mxu0 %v693
    %2369 = vmatprep.subr.mxu0 %v698
    %2370 = vmatpush1.msra.mxu0 %v697
    %2371 = vmatprep.subr.mxu0 %v702
    %2372 = vmatpush1.msra.mxu0 %v701
    %2373 = vmatprep.subr.mxu0 %v706
    %2374 = vmatpush1.msra.mxu0 %v705
    %2375 = vmatprep.subr.mxu0 %v710
    %2376 = vmatpush1.msra.mxu0 %v709
    %2377 = vmatprep.subr.mxu0 %v714
    %2378 = vmatpush1.msra.mxu0 %v713
    %2379 = vmatprep.subr.mxu0 %v718
    %2380 = vmatpush1.msra.mxu0 %v717
    %2381 = vmatprep.subr.mxu0 %v722
    %2382 = vmatpush1.msra.mxu0 %v721
    %2383 = vmatprep.subr.mxu0 %v726
    %2384 = vmatpush1.msra.mxu0 %v725
    %2385 = vmatprep.subr.mxu0 %v730
    %2386 = vmatpush1.msra.mxu0 %v729
    %2387 = vmatprep.subr.mxu0 %v734
    %2388 = vmatpush1.msra.mxu0 %v733
    %2389 = vmatprep.subr.mxu0 %v738
    %2390 = vmatpush1.msra.mxu0 %v737
    %2391 = vmatprep.subr.mxu0 %v742
    %2392 = vmatpush1.msra.mxu0 %v741
    %2393 = vmatprep.subr.mxu0 %v746
    %2394 = vmatpush1.msra.mxu0 %v745
    %2395 = vmatprep.subr.mxu0 %v750
    %2396 = vmatpush1.msra.mxu0 %v749
    %2397 = vmatprep.subr.mxu0 %v754
    %2398 = vmatpush1.msra.mxu0 %v753
    %2399 = vmatprep.subr.mxu0 %v758
    %2400 = vmatpush1.msra.mxu0 %v757
    %2401 = vmatprep.subr.mxu0 %v762
    %2402 = vmatpush1.msra.mxu0 %v761
    %2403 = vmatprep.subr.mxu0 %v766
    %2404 = vmatpush1.msra.mxu0 %v765
    %2405 = vmatprep.subr.mxu0 %v770
    %2406 = vmatpush1.msra.mxu0 %v769
    %2407 = vmatprep.subr.mxu0 %v774
    %2408 = vmatpush1.msra.mxu0 %v773
    %2409 = vmatprep.mubr.f32.mxu0 0.0
    %2410 = vmatmul.mubr.f32.gmra.mrb[0].mxu0 %v2334
    %v2411 = vpop.f32.mrb[0].mxu0
    %v2412 = vadd.f32 %v2337, %v2411
    %v2413 = vpop.f32.mrb[0].mxu0
    %v2414 = vadd.f32 %v2338, %v2413
    %2415 = vmatprep.mubr.f32.mxu0 %v2335
    %2416 = vmatmul.mubr.f32.gmra.mrb[0].mxu0 0.0
    %v2417 = vpop.f32.mrb[0].mxu0
    %v2418 = vadd.f32 %v2341, %v2417
    %v2419 = vpop.f32.mrb[0].mxu0
    %v2420 = vadd.f32 %v2342, %v2419
    %2421 = vdwg.mxu0
    %2422 = vmatprep.subr.mxu0 %v652
    %2423 = vmatpush1.msra.mxu0 %v651
    %2424 = vmatprep.subr.mxu0 %v656
    %2425 = vmatpush1.msra.mxu0 %v655
    %2426 = vmatprep.subr.mxu0 %v660
    %2427 = vmatpush1.msra.mxu0 %v659
    %2428 = vmatprep.subr.mxu0 %v664
    %2429 = vmatpush1.msra.mxu0 %v663
    %2430 = vmatprep.subr.mxu0 %v668
    %2431 = vmatpush1.msra.mxu0 %v667
    %2432 = vmatprep.subr.mxu0 %v672
    %2433 = vmatpush1.msra.mxu0 %v671
    %2434 = vmatprep.subr.mxu0 %v676
    %2435 = vmatpush1.msra.mxu0 %v675
    %2436 = vmatprep.subr.mxu0 %v680
    %2437 = vmatpush1.msra.mxu0 %v679
    %2438 = vmatprep.subr.mxu0 %v684
    %2439 = vmatpush1.msra.mxu0 %v683
    %2440 = vmatprep.subr.mxu0 %v688
    %2441 = vmatpush1.msra.mxu0 %v687
    %2442 = vmatprep.subr.mxu0 %v692
    %2443 = vmatpush1.msra.mxu0 %v691
    %2444 = vmatprep.subr.mxu0 %v696
    %2445 = vmatpush1.msra.mxu0 %v695
    %2446 = vmatprep.subr.mxu0 %v700
    %2447 = vmatpush1.msra.mxu0 %v699
    %2448 = vmatprep.subr.mxu0 %v704
    %2449 = vmatpush1.msra.mxu0 %v703
    %2450 = vmatprep.subr.mxu0 %v708
    %2451 = vmatpush1.msra.mxu0 %v707
    %2452 = vmatprep.subr.mxu0 %v712
    %2453 = vmatpush1.msra.mxu0 %v711
    %2454 = vmatprep.subr.mxu0 %v716
    %2455 = vmatpush1.msra.mxu0 %v715
    %2456 = vmatprep.subr.mxu0 %v720
    %2457 = vmatpush1.msra.mxu0 %v719
    %2458 = vmatprep.subr.mxu0 %v724
    %2459 = vmatpush1.msra.mxu0 %v723
    %2460 = vmatprep.subr.mxu0 %v728
    %2461 = vmatpush1.msra.mxu0 %v727
    %2462 = vmatprep.subr.mxu0 %v732
    %2463 = vmatpush1.msra.mxu0 %v731
    %2464 = vmatprep.subr.mxu0 %v736
    %2465 = vmatpush1.msra.mxu0 %v735
    %2466 = vmatprep.subr.mxu0 %v740
    %2467 = vmatpush1.msra.mxu0 %v739
    %2468 = vmatprep.subr.mxu0 %v744
    %2469 = vmatpush1.msra.mxu0 %v743
    %2470 = vmatprep.subr.mxu0 %v748
    %2471 = vmatpush1.msra.mxu0 %v747
    %2472 = vmatprep.subr.mxu0 %v752
    %2473 = vmatpush1.msra.mxu0 %v751
    %2474 = vmatprep.subr.mxu0 %v756
    %2475 = vmatpush1.msra.mxu0 %v755
    %2476 = vmatprep.subr.mxu0 %v760
    %2477 = vmatpush1.msra.mxu0 %v759
    %2478 = vmatprep.subr.mxu0 %v764
    %2479 = vmatpush1.msra.mxu0 %v763
    %2480 = vmatprep.subr.mxu0 %v768
    %2481 = vmatpush1.msra.mxu0 %v767
    %2482 = vmatprep.subr.mxu0 %v772
    %2483 = vmatpush1.msra.mxu0 %v771
    %2484 = vmatprep.subr.mxu0 %v776
    %2485 = vmatpush1.msra.mxu0 %v775
    %2486 = vmatprep.mubr.f32.mxu0 0.0
    %2487 = vmatmul.mubr.f32.gmra.mrb[0].mxu0 %v2334
    %v2488 = vpop.f32.mrb[0].mxu0
    %v2489 = vadd.f32 %v2339, %v2488
    %v2490 = vpop.f32.mrb[0].mxu0
    %v2491 = vadd.f32 %v2340, %v2490
    %2492 = vmatprep.mubr.f32.mxu0 %v2335
    %2493 = vmatmul.mubr.f32.gmra.mrb[0].mxu0 0.0
    %v2494 = vpop.f32.mrb[0].mxu0
    %v2495 = vadd.f32 %v2343, %v2494
    %v2496 = vpop.f32.mrb[0].mxu0
    %v2497 = vadd.f32 %v2344, %v2496
    %2498 = vdwg.mxu0
    %v2499 = vxor.u32 %v2412, 2147483648
    %v2500 = vxor.u32 %v2418, 2147483648
    %v2501 = vmul.f32 %v2499, 1.442695
    %v2502 = vpow.pop %v2501
    %v2503 = vmul.f32 %v2500, 1.442695
    %v2504 = vpow.pop %v2503
    %v2505 = vadd.f32 %v2502, 1.0
    %v2506 = vadd.f32 %v2504, 1.0
    %v2507 = vrcp.pop %v2505
    %v2508 = vmul.f32 1.0, %v2507
    %v2509 = vrcp.pop %v2506
    %v2510 = vmul.f32 1.0, %v2509
    %v2511 = vxor.u32 %v2414, 2147483648
    %v2512 = vxor.u32 %v2420, 2147483648
    %v2513 = vmul.f32 %v2511, 1.442695
    %v2514 = vpow.pop %v2513
    %v2515 = vmul.f32 %v2512, 1.442695
    %v2516 = vpow.pop %v2515
    %v2517 = vadd.f32 %v2514, 1.0
    %v2518 = vadd.f32 %v2516, 1.0
    %v2519 = vrcp.pop %v2517
    %v2520 = vmul.f32 1.0, %v2519
    %v2521 = vrcp.pop %v2518
    %v2522 = vmul.f32 1.0, %v2521
    %v2523 = vtanh.pop %v2489
    %v2524 = vtanh.pop %v2495
    %v2525 = vxor.u32 %v2491, 2147483648
    %v2526 = vxor.u32 %v2497, 2147483648
    %v2527 = vmul.f32 %v2525, 1.442695
    %v2528 = vpow.pop %v2527
    %v2529 = vmul.f32 %v2526, 1.442695
    %v2530 = vpow.pop %v2529
    %v2531 = vadd.f32 %v2528, 1.0
    %v2532 = vadd.f32 %v2530, 1.0
    %v2533 = vrcp.pop %v2531
    %v2534 = vmul.f32 1.0, %v2533
    %v2535 = vrcp.pop %v2532
    %v2536 = vmul.f32 1.0, %v2535
    %v2537 = vmul.f32 %v2520, %v2332
    %v2538 = vmul.f32 %v2522, %v2333
    %v2539 = vmul.f32 %v2508, %v2523
    %v2540 = vmul.f32 %v2510, %v2524
    %v2541 = vadd.f32 %v2537, %v2539
    %v2542 = vadd.f32 %v2538, %v2540
    %v2543 = vtanh.pop %v2541
    %v2544 = vtanh.pop %v2542
    %v2545 = vmul.f32 %v2534, %v2543
    %v2546 = vmul.f32 %v2536, %v2544
    %v2547 = vsel %vm999, %v2545, %v2334
    %v2548 = vsel %vm998, %v2546, %v2335
    %v2549 = vld [vmem:[%s5] sm:$0xff]
    %v2550 = vld [vmem:[%s5 + $0x8] sm:$0xff]
    %v2551 = vld [vmem:[%s5 + $0x10] sm:$0xff]
    %v2552 = vld [vmem:[%s5 + $0x18] sm:$0xff]
    %v2553 = vld [vmem:[%s5 + $0x20] sm:$0xff]
    %v2554 = vld [vmem:[%s5 + $0x28] sm:$0xff]
    %v2555 = vld [vmem:[%s5 + $0x30] sm:$0xff]
    %v2556 = vld [vmem:[%s5 + $0x38] sm:$0xff]
    %v2557 = vld [vmem:[%s5 + $0x40] sm:$0xff]
    %v2558 = vld [vmem:[%s5 + $0x48] sm:$0xff]
    %v2559 = vld [vmem:[%s5 + $0x50] sm:$0xff]
    %v2560 = vld [vmem:[%s5 + $0x58] sm:$0xff]
    %v2561 = vld [vmem:[%s5 + $0x60] sm:$0xff]
    %v2562 = vld [vmem:[%s5 + $0x68] sm:$0xff]
    %v2563 = vld [vmem:[%s5 + $0x70] sm:$0xff]
    %v2564 = vld [vmem:[%s5 + $0x78] sm:$0xff]
    %v2565 = vld [vmem:[%s5 + $0x80] sm:$0xff]
    %v2566 = vld [vmem:[%s5 + $0x88] sm:$0xff]
    %v2567 = vld [vmem:[%s5 + $0x90] sm:$0xff]
    %v2568 = vld [vmem:[%s5 + $0x98] sm:$0xff]
    %v2569 = vld [vmem:[%s5 + $0xa0] sm:$0xff]
    %v2570 = vld [vmem:[%s5 + $0xa8] sm:$0xff]
    %v2571 = vld [vmem:[%s5 + $0xb0] sm:$0xff]
    %v2572 = vld [vmem:[%s5 + $0xb8] sm:$0xff]
    %v2573 = vld [vmem:[%s5 + $0xc0] sm:$0xff]
    %v2574 = vld [vmem:[%s5 + $0xc8] sm:$0xff]
    %v2575 = vld [vmem:[%s5 + $0xd0] sm:$0xff]
    %v2576 = vld [vmem:[%s5 + $0xd8] sm:$0xff]
    %v2577 = vld [vmem:[%s5 + $0xe0] sm:$0xff]
    %v2578 = vld [vmem:[%s5 + $0xe8] sm:$0xff]
    %v2579 = vld [vmem:[%s5 + $0xf0] sm:$0xff]
    %v2580 = vld [vmem:[%s5 + $0xf8] sm:$0xff]
    %v2581 = vld [vmem:[%s6] sm:$0x1]
    %v2583 = vlaneseq
    %v2584 = vshrl.u32 %v2583, 7
    %v2585 = vsub.s32 0, %v2584
    %v2586 = vrot.slane %v2581, %v2585
    %2588 = vmatprep.subr.mxu0 0.0
    %2589 = vmatpush1.msra.mxu0 %v2549
    %2590 = vmatprep.subr.mxu0 0.0
    %2591 = vmatpush1.msra.mxu0 %v2550
    %2592 = vmatprep.subr.mxu0 0.0
    %2593 = vmatpush1.msra.mxu0 %v2551
    %2594 = vmatprep.subr.mxu0 0.0
    %2595 = vmatpush1.msra.mxu0 %v2552
    %2596 = vmatprep.subr.mxu0 0.0
    %2597 = vmatpush1.msra.mxu0 %v2553
    %2598 = vmatprep.subr.mxu0 0.0
    %2599 = vmatpush1.msra.mxu0 %v2554
    %2600 = vmatprep.subr.mxu0 0.0
    %2601 = vmatpush1.msra.mxu0 %v2555
    %2602 = vmatprep.subr.mxu0 0.0
    %2603 = vmatpush1.msra.mxu0 %v2556
    %2604 = vmatprep.subr.mxu0 0.0
    %2605 = vmatpush1.msra.mxu0 %v2557
    %2606 = vmatprep.subr.mxu0 0.0
    %2607 = vmatpush1.msra.mxu0 %v2558
    %2608 = vmatprep.subr.mxu0 0.0
    %2609 = vmatpush1.msra.mxu0 %v2559
    %2610 = vmatprep.subr.mxu0 0.0
    %2611 = vmatpush1.msra.mxu0 %v2560
    %2612 = vmatprep.subr.mxu0 0.0
    %2613 = vmatpush1.msra.mxu0 %v2561
    %2614 = vmatprep.subr.mxu0 0.0
    %2615 = vmatpush1.msra.mxu0 %v2562
    %2616 = vmatprep.subr.mxu0 0.0
    %2617 = vmatpush1.msra.mxu0 %v2563
    %2618 = vmatprep.subr.mxu0 0.0
    %2619 = vmatpush1.msra.mxu0 %v2564
    %2620 = vmatprep.subr.mxu0 0.0
    %2621 = vmatpush1.msra.mxu0 %v2565
    %2622 = vmatprep.subr.mxu0 0.0
    %2623 = vmatpush1.msra.mxu0 %v2566
    %2624 = vmatprep.subr.mxu0 0.0
    %2625 = vmatpush1.msra.mxu0 %v2567
    %2626 = vmatprep.subr.mxu0 0.0
    %2627 = vmatpush1.msra.mxu0 %v2568
    %2628 = vmatprep.subr.mxu0 0.0
    %2629 = vmatpush1.msra.mxu0 %v2569
    %2630 = vmatprep.subr.mxu0 0.0
    %2631 = vmatpush1.msra.mxu0 %v2570
    %2632 = vmatprep.subr.mxu0 0.0
    %2633 = vmatpush1.msra.mxu0 %v2571
    %2634 = vmatprep.subr.mxu0 0.0
    %2635 = vmatpush1.msra.mxu0 %v2572
    %2636 = vmatprep.subr.mxu0 0.0
    %2637 = vmatpush1.msra.mxu0 %v2573
    %2638 = vmatprep.subr.mxu0 0.0
    %2639 = vmatpush1.msra.mxu0 %v2574
    %2640 = vmatprep.subr.mxu0 0.0
    %2641 = vmatpush1.msra.mxu0 %v2575
    %2642 = vmatprep.subr.mxu0 0.0
    %2643 = vmatpush1.msra.mxu0 %v2576
    %2644 = vmatprep.subr.mxu0 0.0
    %2645 = vmatpush1.msra.mxu0 %v2577
    %2646 = vmatprep.subr.mxu0 0.0
    %2647 = vmatpush1.msra.mxu0 %v2578
    %2648 = vmatprep.subr.mxu0 0.0
    %2649 = vmatpush1.msra.mxu0 %v2579
    %2650 = vmatprep.subr.mxu0 0.0
    %2651 = vmatpush1.msra.mxu0 %v2580
    %2652 = vmatprep.mubr.f32.mxu0 %v2548
    %2653 = vmatmul.mubr.f32.gmra.mrb[0].mxu0 %v2547
    %v2654 = vpop.f32.mrb[0].mxu0
    %v2655 = vadd.f32 %v2586, %v2654
    %v2656 = vpop.f32.mrb[0].mxu0
    %2657 = vdwg.mxu0
    %v2658 = vmax.f32 %v2655, 0.0
    %2659 = vst.msk [vmem:[#allocation7] sm:$0xff] %vm107, %v2658
    // Predicated region
    $region34: #{tpu_custom_call.1} parent=1 // pred_check
      _
    $region35: #{tpu_custom_call.1} parent=1 // pred_check_branch
      %2661 = sbr.rel (0) target = $region37
    $region36: #{tpu_custom_call.1} parent=1 // pred_region
      %s2663 = ssub.s32 128, 128
      %2664 = vsyncadd [#allocation6], %s2663
      %s2666 = sshll.u32 [#allocation7], 4
      %s2667 = int_to_ptr.vmem [resolvable:$true] %s2666
      %2669 = dma.vmem_to_hbm [thread:$0]  %s2667, 128, %s7, [#allocation6]
    $region37: #{tpu_custom_call.1} parent=1 // pred_fallthru
      _
    // Predicated region
    $region38: #{tpu_custom_call.1} parent=1 // pred_check
      _
    $region39: #{tpu_custom_call.1} parent=1 // pred_check_branch
      %2671 = sbr.rel (0) target = $region41
    $region40: #{tpu_custom_call.1} parent=1 // pred_region
      %2672 = dma.done [#allocation6], 128
    $region41: #{tpu_custom_call.1} parent=1 // pred_fallthru
      _
    %2673 = vsyncpa [#allocation5], 1
    %2674 = vsyncpa [#allocation6], 1

</llo_original>
